<compile_context>
chip_gen: v5e
topology: v5e:2x2
jax: 0.10.0
libtpu: 0.0.40
codegen_flags: <defaults>
</compile_context>

<pallas_src>
import math
import functools

import jax
import jax.numpy as jnp
from jax import lax
from jax.experimental import pallas as pl
from jax.experimental.pallas import tpu as pltpu

# ----------------------------- config (small, deterministic) -----------------
B = 2            # batch (documents)
S = 4            # sentences per document
L = 8            # tokens per sentence
SL = S * L       # tokens per document
H = 32           # hidden size (config.hidden_size)
NH = 2           # attention heads
DH = H // NH     # head dim
FF = 64          # FFN intermediate
NL = 2           # transformer layers
AW = 16          # word-attention projection dim
SH = 16          # args.sentence_hidden_size
NC = 3           # num_classes
VOCAB = 50

assert AW == SH, "pooling packs require AW == SH"

_F32 = jnp.float32
_LN_EPS = 1e-12


# ----------------------------- small in-kernel helpers -----------------------
def _layer_norm(x, g, b):
    mu = jnp.mean(x, axis=-1, keepdims=True)
    var = jnp.mean((x - mu) ** 2, axis=-1, keepdims=True)
    return (x - mu) * lax.rsqrt(var + _LN_EPS) * g + b


def _gelu(x):
    # tanh approximation (PyTorch nn.GELU default is erf; difference is tiny)
    return 0.5 * x * (1.0 + jnp.tanh(0.7978845608028654 * (x + 0.044715 * x * x * x)))


# ----------------------- fused per-document kernel ---------------------------
def han_kernel(x_ref, amask_ref, tmask_ref, sel_ref, selT_ref,
               qkvw_ref, qkvb_ref, ow_ref, vec_ref,
               w1_ref, b1_ref, w2_ref,
               poolw_ref, poolb_ref, poolc_ref, wc_ref, bc_ref,
               logits_ref, wattn_ref, sattn_ref):
    x = x_ref[0]               # (SL, H)  all tokens of this document
    amask = amask_ref[0]       # (SL, SL) additive block-diag / key-padding mask
    tmask = tmask_ref[0]       # (SL, 1)  additive padded-token mask
    sel = sel_ref[...]         # (S, SL)  constant sentence selector (0/1)
    selT = selT_ref[...]       # (SL, S)
    scale = 1.0 / math.sqrt(DH)

    # ---------------- TinyBERT-style encoder over all tokens -----------------
    for layer in range(NL):
        bo = vec_ref[layer, 0]       # (1, H)
        ln1g = vec_ref[layer, 1]
        ln1b = vec_ref[layer, 2]
        b2 = vec_ref[layer, 3]
        ln2g = vec_ref[layer, 4]
        ln2b = vec_ref[layer, 5]

        attn_out = None
        for h in range(NH):          # NH=2; no lane slicing (head-major weights)
            wq = qkvw_ref[layer, 0, h]     # (H, DH)
            wk = qkvw_ref[layer, 1, h]
            wv = qkvw_ref[layer, 2, h]
            bq = qkvb_ref[layer, 0, h]     # (1, DH)
            bk = qkvb_ref[layer, 1, h]
            bv = qkvb_ref[layer, 2, h]
            woh = ow_ref[layer, h]         # (DH, H)

            qh = jnp.dot(x, wq, preferred_element_type=_F32) + bq   # (SL, DH)
            kh = jnp.dot(x, wk, preferred_element_type=_F32) + bk
            vh = jnp.dot(x, wv, preferred_element_type=_F32) + bv

            # scores over all SL keys; cross-sentence / padded keys masked out
            sc = lax.dot_general(qh, kh, (((1,), (1,)), ((), ())),
                                 preferred_element_type=_F32) * scale + amask
            m = jnp.max(sc, axis=-1, keepdims=True)
            e = jnp.exp(sc - m)
            inv = pl.reciprocal(jnp.sum(e, axis=-1, keepdims=True), approx=True)
            p = e * inv
            ctx = jnp.dot(p, vh, preferred_element_type=_F32)       # (SL, DH)
            head_out = jnp.dot(ctx, woh, preferred_element_type=_F32)
            attn_out = head_out if attn_out is None else attn_out + head_out
        attn_out = attn_out + bo

        x = _layer_norm(x + attn_out, ln1g, ln1b)

        hidden = _gelu(jnp.dot(x, w1_ref[layer], preferred_element_type=_F32)
                       + b1_ref[layer])
        ffn = jnp.dot(hidden, w2_ref[layer], preferred_element_type=_F32) + b2
        x = _layer_norm(x + ffn, ln2g, ln2b)

    # ------------- word-level attention pooling (per sentence) ---------------
    ww = poolw_ref[0]          # (H, AW)
    bw = poolb_ref[0]          # (1, AW)
    cw = poolc_ref[0]          # (AW, 1)
    u = jnp.tanh(jnp.dot(x, ww, preferred_element_type=_F32) + bw)       # (SL, AW)
    wsc = jnp.dot(u, cw, preferred_element_type=_F32) + tmask            # (SL, 1)
    gmax = jnp.max(wsc, axis=0, keepdims=True)                           # (1, 1)
    e_tok = jnp.exp(wsc - gmax)                                          # (SL, 1)
    seg_sum = jnp.dot(sel, e_tok, preferred_element_type=_F32)           # (S, 1)
    sent_un = jnp.dot(sel, e_tok * x, preferred_element_type=_F32)       # (S, H)
    sent = sent_un * pl.reciprocal(seg_sum, approx=True)                 # (S, H)
    denom_tok = jnp.dot(selT, seg_sum, preferred_element_type=_F32)      # (SL, 1)
    wattn = e_tok * pl.reciprocal(denom_tok, approx=True)                # (SL, 1)

    # ------------- sentence-level attention + 3-way classifier ---------------
    ws = poolw_ref[1]          # (H, SH)
    bs = poolb_ref[1]          # (1, SH)
    cs = poolc_ref[1]          # (SH, 1)
    us = jnp.tanh(jnp.dot(sent, ws, preferred_element_type=_F32) + bs)   # (S, SH)
    ssc = jnp.dot(us, cs, preferred_element_type=_F32)                   # (S, 1)
    sm = jnp.max(ssc, axis=0, keepdims=True)
    se = jnp.exp(ssc - sm)
    sattn = se * pl.reciprocal(jnp.sum(se, axis=0, keepdims=True), approx=True)
    doc = jnp.sum(sattn * sent, axis=0, keepdims=True)                   # (1, H)
    logits = jnp.dot(doc, wc_ref[...], preferred_element_type=_F32) + bc_ref[...]

    logits_ref[0] = logits
    wattn_ref[0] = wattn
    sattn_ref[0] = sattn


# ----------------------------- parameter init --------------------------------
def init_params(key):
    ks = jax.random.split(key, 16)
    std = 0.02
    p = {}
    p["word_emb"] = (jax.random.normal(ks[0], (VOCAB, H)) * std).astype(_F32)
    p["pos_emb"] = (jax.random.normal(ks[1], (L, H)) * std).astype(_F32)
    p["wq"] = (jax.random.normal(ks[2], (NL, H, H)) * std).astype(_F32)
    p["wk"] = (jax.random.normal(ks[3], (NL, H, H)) * std).astype(_F32)
    p["wv"] = (jax.random.normal(ks[4], (NL, H, H)) * std).astype(_F32)
    p["wo"] = (jax.random.normal(ks[5], (NL, H, H)) * std).astype(_F32)
    p["bq"] = jnp.zeros((NL, 1, H), _F32)
    p["bk"] = jnp.zeros((NL, 1, H), _F32)
    p["bv"] = jnp.zeros((NL, 1, H), _F32)
    p["bo"] = jnp.zeros((NL, 1, H), _F32)
    p["ln1g"] = jnp.ones((NL, 1, H), _F32)
    p["ln1b"] = jnp.zeros((NL, 1, H), _F32)
    p["ln2g"] = jnp.ones((NL, 1, H), _F32)
    p["ln2b"] = jnp.zeros((NL, 1, H), _F32)
    p["w1"] = (jax.random.normal(ks[6], (NL, H, FF)) * std).astype(_F32)
    p["b1"] = jnp.zeros((NL, 1, FF), _F32)
    p["w2"] = (jax.random.normal(ks[7], (NL, FF, H)) * std).astype(_F32)
    p["b2"] = jnp.zeros((NL, 1, H), _F32)
    # word-level attention (encoder pooling)
    p["ww"] = (jax.random.normal(ks[8], (H, AW)) * std).astype(_F32)
    p["bw"] = jnp.zeros((1, AW), _F32)
    p["cw"] = (jax.random.normal(ks[9], (AW, 1)) * std).astype(_F32)
    # CLSHierarchicalAttentionNetworks (sentence attention + classifier)
    p["ws"] = (jax.random.normal(ks[10], (H, SH)) * std).astype(_F32)
    p["bs"] = jnp.zeros((1, SH), _F32)
    p["cs"] = (jax.random.normal(ks[11], (SH, 1)) * std).astype(_F32)
    p["wc"] = (jax.random.normal(ks[12], (H, NC)) * std).astype(_F32)
    p["bc"] = jnp.zeros((1, NC), _F32)
    return p


# ----------------------------- wrapper-side weight packing -------------------
def _pack_weights(p):
    def head_w(w):   # (NL,H,H) -> (NL,NH,H,DH)  head-major columns
        return w.reshape(NL, H, NH, DH).transpose(0, 2, 1, 3)

    def head_b(b):   # (NL,1,H) -> (NL,NH,1,DH)
        return b.reshape(NL, 1, NH, DH).transpose(0, 2, 1, 3)

    qkvw = jnp.stack([head_w(p["wq"]), head_w(p["wk"]), head_w(p["wv"])], axis=1)
    qkvb = jnp.stack([head_b(p["bq"]), head_b(p["bk"]), head_b(p["bv"])], axis=1)
    ow = p["wo"].reshape(NL, NH, DH, H)
    vec = jnp.stack([p["bo"], p["ln1g"], p["ln1b"],
                     p["b2"], p["ln2g"], p["ln2b"]], axis=1)      # (NL,6,1,H)
    poolw = jnp.stack([p["ww"], p["ws"]], axis=0)                 # (2,H,16)
    poolb = jnp.stack([p["bw"], p["bs"]], axis=0)                 # (2,1,16)
    poolc = jnp.stack([p["cw"], p["cs"]], axis=0)                 # (2,16,1)
    return (qkvw, qkvb, ow, vec, p["w1"], p["b1"], p["w2"],
            poolw, poolb, poolc, p["wc"], p["bc"])


def _zero_map(ndim, *_grid_idx):
    return (0,) * ndim


# ----------------------------- forward wrapper -------------------------------
def hierarchical_net(params, input_ids, attention_masks):
    Bx, Sx, Lx = input_ids.shape
    SLx = Sx * Lx

    # glue: embedding gather + positional add (plain JAX; tiny table lookup)
    ids = input_ids.reshape(Bx, SLx)
    pos = jnp.tile(params["pos_emb"], (Sx, 1))                    # (SL, H)
    emb = (params["word_emb"][ids] + pos[None, :, :]).astype(_F32)

    # block-diagonal (per-sentence) key mask + padded-token mask
    am = attention_masks.reshape(Bx, SLx).astype(_F32)            # (B, SL)
    sent_id = jnp.arange(SLx) // Lx
    same = (sent_id[:, None] == sent_id[None, :]).astype(_F32)    # (SL, SL)
    amask = ((1.0 - am[:, None, :] * same[None, :, :]) * -1e9).astype(_F32)
    tmask = ((1.0 - am) * -1e9).reshape(Bx, SLx, 1).astype(_F32)

    # constant sentence selector matrices (for segment sums via MXU)
    sel = (jnp.arange(Sx)[:, None] == sent_id[None, :]).astype(_F32)   # (S, SL)
    selT = sel.T                                                        # (SL, S)

    weights = (sel, selT) + _pack_weights(params)

    data_specs = [
        pl.BlockSpec((1, SLx, H), lambda b: (b, 0, 0)),
        pl.BlockSpec((1, SLx, SLx), lambda b: (b, 0, 0)),
        pl.BlockSpec((1, SLx, 1), lambda b: (b, 0, 0)),
    ]
    weight_specs = [pl.BlockSpec(w.shape, functools.partial(_zero_map, w.ndim))
                    for w in weights]
    out_specs = [
        pl.BlockSpec((1, 1, NC), lambda b: (b, 0, 0)),
        pl.BlockSpec((1, SLx, 1), lambda b: (b, 0, 0)),
        pl.BlockSpec((1, Sx, 1), lambda b: (b, 0, 0)),
    ]
    out_shape = (
        jax.ShapeDtypeStruct((Bx, 1, NC), _F32),
        jax.ShapeDtypeStruct((Bx, SLx, 1), _F32),
        jax.ShapeDtypeStruct((Bx, Sx, 1), _F32),
    )

    logits, wattn, sattn = pl.pallas_call(
        han_kernel,
        out_shape=out_shape,
        grid_spec=pltpu.PrefetchScalarGridSpec(
            num_scalar_prefetch=0, grid=(Bx,),
            in_specs=data_specs + weight_specs, out_specs=out_specs),
        compiler_params=pltpu.CompilerParams(
            dimension_semantics=("parallel",)),     # lets v7x split the 2 docs over 2 TCs
    )(emb, amask, tmask, *weights)

    outputs = logits.reshape(Bx, NC)
    word_attns = wattn.reshape(Bx, Sx, Lx)
    sentence_attns = sattn.reshape(Bx, Sx)
    return outputs, word_attns, sentence_attns


# ----------------------------- main -------------------------------------------
if __name__ == "__main__":
    key = jax.random.PRNGKey(0)
    pkey, ikey = jax.random.split(key)
    params = init_params(pkey)

    input_ids = jax.random.randint(ikey, (B, S, L), 0, VOCAB, dtype=jnp.int32)
    lengths = jnp.array([[8, 6, 5, 8], [7, 8, 4, 8]], dtype=jnp.int32)
    attention_masks = (jnp.arange(L)[None, None, :] < lengths[:, :, None]).astype(jnp.int32)

    outputs, word_attns, sentence_attns = hierarchical_net(params, input_ids, attention_masks)
    jax.block_until_ready((outputs, word_attns, sentence_attns))

    assert outputs.shape == (B, NC)
    assert word_attns.shape == (B, S, L)
    assert sentence_attns.shape == (B, S)
    print("KERNEL_OK")
</pallas_src>

<mosaic_0001>
module attributes {stable_mosaic.version = 11 : i64} {
  func.func @han_kernel(%arg0: i32, %arg1: memref<1x32x32xf32, #tpu.memory_space<vmem>>, %arg2: memref<1x32x32xf32, #tpu.memory_space<vmem>>, %arg3: memref<1x32x1xf32, #tpu.memory_space<vmem>>, %arg4: memref<4x32xf32, #tpu.memory_space<vmem>>, %arg5: memref<32x4xf32, #tpu.memory_space<vmem>>, %arg6: memref<2x3x2x32x16xf32, #tpu.memory_space<vmem>>, %arg7: memref<2x3x2x1x16xf32, #tpu.memory_space<vmem>>, %arg8: memref<2x2x16x32xf32, #tpu.memory_space<vmem>>, %arg9: memref<2x6x1x32xf32, #tpu.memory_space<vmem>>, %arg10: memref<2x32x64xf32, #tpu.memory_space<vmem>>, %arg11: memref<2x1x64xf32, #tpu.memory_space<vmem>>, %arg12: memref<2x64x32xf32, #tpu.memory_space<vmem>>, %arg13: memref<2x32x16xf32, #tpu.memory_space<vmem>>, %arg14: memref<2x1x16xf32, #tpu.memory_space<vmem>>, %arg15: memref<2x16x1xf32, #tpu.memory_space<vmem>>, %arg16: memref<32x3xf32, #tpu.memory_space<vmem>>, %arg17: memref<1x3xf32, #tpu.memory_space<vmem>>, %arg18: memref<1x1x3xf32, #tpu.memory_space<vmem>>, %arg19: memref<1x32x1xf32, #tpu.memory_space<vmem>>, %arg20: memref<1x4x1xf32, #tpu.memory_space<vmem>>) attributes {dimension_semantics = [#tpu.dimension_semantics<parallel>], iteration_bounds = array<i64: 2>, scalar_prefetch = 0 : i64, scratch_operands = 0 : i64, tpu.core_type = #tpu.core_type<tc>, window_params = [{transform_indices = @transform_0, window_bounds = array<i64: 1, 32, 32>}, {transform_indices = @transform_1, window_bounds = array<i64: 1, 32, 32>}, {transform_indices = @transform_2, window_bounds = array<i64: 1, 32, 1>}, {pipeline_mode = #tpu.pipeline_mode<synchronous>, transform_indices = @transform_3, window_bounds = array<i64: 4, 32>}, {pipeline_mode = #tpu.pipeline_mode<synchronous>, transform_indices = @transform_4, window_bounds = array<i64: 32, 4>}, {pipeline_mode = #tpu.pipeline_mode<synchronous>, transform_indices = @transform_5, window_bounds = array<i64: 2, 3, 2, 32, 16>}, {pipeline_mode = #tpu.pipeline_mode<synchronous>, transform_indices = @transform_6, window_bounds = array<i64: 2, 3, 2, 1, 16>}, {pipeline_mode = #tpu.pipeline_mode<synchronous>, transform_indices = @transform_7, window_bounds = array<i64: 2, 2, 16, 32>}, {pipeline_mode = #tpu.pipeline_mode<synchronous>, transform_indices = @transform_8, window_bounds = array<i64: 2, 6, 1, 32>}, {pipeline_mode = #tpu.pipeline_mode<synchronous>, transform_indices = @transform_9, window_bounds = array<i64: 2, 32, 64>}, {pipeline_mode = #tpu.pipeline_mode<synchronous>, transform_indices = @transform_10, window_bounds = array<i64: 2, 1, 64>}, {pipeline_mode = #tpu.pipeline_mode<synchronous>, transform_indices = @transform_11, window_bounds = array<i64: 2, 64, 32>}, {pipeline_mode = #tpu.pipeline_mode<synchronous>, transform_indices = @transform_12, window_bounds = array<i64: 2, 32, 16>}, {pipeline_mode = #tpu.pipeline_mode<synchronous>, transform_indices = @transform_13, window_bounds = array<i64: 2, 1, 16>}, {pipeline_mode = #tpu.pipeline_mode<synchronous>, transform_indices = @transform_14, window_bounds = array<i64: 2, 16, 1>}, {pipeline_mode = #tpu.pipeline_mode<synchronous>, transform_indices = @transform_15, window_bounds = array<i64: 32, 3>}, {pipeline_mode = #tpu.pipeline_mode<synchronous>, transform_indices = @transform_16, window_bounds = array<i64: 1, 3>}, {transform_indices = @transform_17, window_bounds = array<i64: 1, 1, 3>}, {transform_indices = @transform_18, window_bounds = array<i64: 1, 32, 1>}, {transform_indices = @transform_19, window_bounds = array<i64: 1, 4, 1>}]} {
    %c0 = arith.constant 0 : index
    %c0_0 = arith.constant 0 : index
    %c0_1 = arith.constant 0 : index
    %0 = vector.load %arg1[%c0, %c0_0, %c0_1] : memref<1x32x32xf32, #tpu.memory_space<vmem>>, vector<1x32x32xf32>
    %1 = vector.shape_cast %0 : vector<1x32x32xf32> to vector<32x32xf32>
    %c0_2 = arith.constant 0 : index
    %c0_3 = arith.constant 0 : index
    %c0_4 = arith.constant 0 : index
    %2 = vector.load %arg2[%c0_2, %c0_3, %c0_4] : memref<1x32x32xf32, #tpu.memory_space<vmem>>, vector<1x32x32xf32>
    %3 = vector.shape_cast %2 : vector<1x32x32xf32> to vector<32x32xf32>
    %c0_5 = arith.constant 0 : index
    %c0_6 = arith.constant 0 : index
    %c0_7 = arith.constant 0 : index
    %4 = vector.load %arg3[%c0_5, %c0_6, %c0_7] : memref<1x32x1xf32, #tpu.memory_space<vmem>>, vector<1x32x1xf32>
    %5 = vector.shape_cast %4 : vector<1x32x1xf32> to vector<32x1xf32>
    %c0_8 = arith.constant 0 : index
    %c0_9 = arith.constant 0 : index
    %6 = vector.load %arg4[%c0_8, %c0_9] : memref<4x32xf32, #tpu.memory_space<vmem>>, vector<4x32xf32>
    %c0_10 = arith.constant 0 : index
    %c0_11 = arith.constant 0 : index
    %7 = vector.load %arg5[%c0_10, %c0_11] : memref<32x4xf32, #tpu.memory_space<vmem>>, vector<32x4xf32>
    %c0_12 = arith.constant 0 : index
    %c0_13 = arith.constant 0 : index
    %c0_14 = arith.constant 0 : index
    %c0_15 = arith.constant 0 : index
    %8 = vector.load %arg9[%c0_12, %c0_13, %c0_14, %c0_15] : memref<2x6x1x32xf32, #tpu.memory_space<vmem>>, vector<1x1x1x32xf32>
    %9 = vector.shape_cast %8 : vector<1x1x1x32xf32> to vector<1x32xf32>
    %c0_16 = arith.constant 0 : index
    %c1 = arith.constant 1 : index
    %c0_17 = arith.constant 0 : index
    %c0_18 = arith.constant 0 : index
    %10 = vector.load %arg9[%c0_16, %c1, %c0_17, %c0_18] : memref<2x6x1x32xf32, #tpu.memory_space<vmem>>, vector<1x1x1x32xf32>
    %11 = vector.shape_cast %10 : vector<1x1x1x32xf32> to vector<1x32xf32>
    %c0_19 = arith.constant 0 : index
    %c2 = arith.constant 2 : index
    %c0_20 = arith.constant 0 : index
    %c0_21 = arith.constant 0 : index
    %12 = vector.load %arg9[%c0_19, %c2, %c0_20, %c0_21] : memref<2x6x1x32xf32, #tpu.memory_space<vmem>>, vector<1x1x1x32xf32>
    %13 = vector.shape_cast %12 : vector<1x1x1x32xf32> to vector<1x32xf32>
    %c0_22 = arith.constant 0 : index
    %c3 = arith.constant 3 : index
    %c0_23 = arith.constant 0 : index
    %c0_24 = arith.constant 0 : index
    %14 = vector.load %arg9[%c0_22, %c3, %c0_23, %c0_24] : memref<2x6x1x32xf32, #tpu.memory_space<vmem>>, vector<1x1x1x32xf32>
    %15 = vector.shape_cast %14 : vector<1x1x1x32xf32> to vector<1x32xf32>
    %c0_25 = arith.constant 0 : index
    %c4 = arith.constant 4 : index
    %c0_26 = arith.constant 0 : index
    %c0_27 = arith.constant 0 : index
    %16 = vector.load %arg9[%c0_25, %c4, %c0_26, %c0_27] : memref<2x6x1x32xf32, #tpu.memory_space<vmem>>, vector<1x1x1x32xf32>
    %17 = vector.shape_cast %16 : vector<1x1x1x32xf32> to vector<1x32xf32>
    %c0_28 = arith.constant 0 : index
    %c5 = arith.constant 5 : index
    %c0_29 = arith.constant 0 : index
    %c0_30 = arith.constant 0 : index
    %18 = vector.load %arg9[%c0_28, %c5, %c0_29, %c0_30] : memref<2x6x1x32xf32, #tpu.memory_space<vmem>>, vector<1x1x1x32xf32>
    %19 = vector.shape_cast %18 : vector<1x1x1x32xf32> to vector<1x32xf32>
    %c0_31 = arith.constant 0 : index
    %c0_32 = arith.constant 0 : index
    %c0_33 = arith.constant 0 : index
    %c0_34 = arith.constant 0 : index
    %c0_35 = arith.constant 0 : index
    %20 = vector.load %arg6[%c0_31, %c0_32, %c0_33, %c0_34, %c0_35] : memref<2x3x2x32x16xf32, #tpu.memory_space<vmem>>, vector<1x1x1x32x16xf32>
    %21 = vector.shape_cast %20 : vector<1x1x1x32x16xf32> to vector<32x16xf32>
    %c0_36 = arith.constant 0 : index
    %c1_37 = arith.constant 1 : index
    %c0_38 = arith.constant 0 : index
    %c0_39 = arith.constant 0 : index
    %c0_40 = arith.constant 0 : index
    %22 = vector.load %arg6[%c0_36, %c1_37, %c0_38, %c0_39, %c0_40] : memref<2x3x2x32x16xf32, #tpu.memory_space<vmem>>, vector<1x1x1x32x16xf32>
    %23 = vector.shape_cast %22 : vector<1x1x1x32x16xf32> to vector<32x16xf32>
    %c0_41 = arith.constant 0 : index
    %c2_42 = arith.constant 2 : index
    %c0_43 = arith.constant 0 : index
    %c0_44 = arith.constant 0 : index
    %c0_45 = arith.constant 0 : index
    %24 = vector.load %arg6[%c0_41, %c2_42, %c0_43, %c0_44, %c0_45] : memref<2x3x2x32x16xf32, #tpu.memory_space<vmem>>, vector<1x1x1x32x16xf32>
    %25 = vector.shape_cast %24 : vector<1x1x1x32x16xf32> to vector<32x16xf32>
    %c0_46 = arith.constant 0 : index
    %c0_47 = arith.constant 0 : index
    %c0_48 = arith.constant 0 : index
    %c0_49 = arith.constant 0 : index
    %c0_50 = arith.constant 0 : index
    %26 = vector.load %arg7[%c0_46, %c0_47, %c0_48, %c0_49, %c0_50] : memref<2x3x2x1x16xf32, #tpu.memory_space<vmem>>, vector<1x1x1x1x16xf32>
    %27 = vector.shape_cast %26 : vector<1x1x1x1x16xf32> to vector<1x16xf32>
    %c0_51 = arith.constant 0 : index
    %c1_52 = arith.constant 1 : index
    %c0_53 = arith.constant 0 : index
    %c0_54 = arith.constant 0 : index
    %c0_55 = arith.constant 0 : index
    %28 = vector.load %arg7[%c0_51, %c1_52, %c0_53, %c0_54, %c0_55] : memref<2x3x2x1x16xf32, #tpu.memory_space<vmem>>, vector<1x1x1x1x16xf32>
    %29 = vector.shape_cast %28 : vector<1x1x1x1x16xf32> to vector<1x16xf32>
    %c0_56 = arith.constant 0 : index
    %c2_57 = arith.constant 2 : index
    %c0_58 = arith.constant 0 : index
    %c0_59 = arith.constant 0 : index
    %c0_60 = arith.constant 0 : index
    %30 = vector.load %arg7[%c0_56, %c2_57, %c0_58, %c0_59, %c0_60] : memref<2x3x2x1x16xf32, #tpu.memory_space<vmem>>, vector<1x1x1x1x16xf32>
    %31 = vector.shape_cast %30 : vector<1x1x1x1x16xf32> to vector<1x16xf32>
    %c0_61 = arith.constant 0 : index
    %c0_62 = arith.constant 0 : index
    %c0_63 = arith.constant 0 : index
    %c0_64 = arith.constant 0 : index
    %32 = vector.load %arg8[%c0_61, %c0_62, %c0_63, %c0_64] : memref<2x2x16x32xf32, #tpu.memory_space<vmem>>, vector<1x1x16x32xf32>
    %33 = vector.shape_cast %32 : vector<1x1x16x32xf32> to vector<16x32xf32>
    %cst = arith.constant dense<0.000000e+00> : vector<32x16xf32>
    %34 = tpu.matmul %1, %21, %cst {dimension_numbers = #tpu.dot_dimension_numbers<[1], [0], [0], [1], [0, 0, 1, 1], [], []>} : vector<32x32xf32>, vector<32x16xf32>, vector<32x16xf32> -> vector<32x16xf32>
    %35 = vector.broadcast %27 : vector<1x16xf32> to vector<32x16xf32>
    %36 = arith.addf %34, %35 : vector<32x16xf32>
    %cst_65 = arith.constant dense<0.000000e+00> : vector<32x16xf32>
    %37 = tpu.matmul %1, %23, %cst_65 {dimension_numbers = #tpu.dot_dimension_numbers<[1], [0], [0], [1], [0, 0, 1, 1], [], []>} : vector<32x32xf32>, vector<32x16xf32>, vector<32x16xf32> -> vector<32x16xf32>
    %38 = vector.broadcast %29 : vector<1x16xf32> to vector<32x16xf32>
    %39 = arith.addf %37, %38 : vector<32x16xf32>
    %cst_66 = arith.constant dense<0.000000e+00> : vector<32x16xf32>
    %40 = tpu.matmul %1, %25, %cst_66 {dimension_numbers = #tpu.dot_dimension_numbers<[1], [0], [0], [1], [0, 0, 1, 1], [], []>} : vector<32x32xf32>, vector<32x16xf32>, vector<32x16xf32> -> vector<32x16xf32>
    %41 = vector.broadcast %31 : vector<1x16xf32> to vector<32x16xf32>
    %42 = arith.addf %40, %41 : vector<32x16xf32>
    %cst_67 = arith.constant dense<0.000000e+00> : vector<32x32xf32>
    %43 = tpu.matmul %36, %39, %cst_67 {dimension_numbers = #tpu.dot_dimension_numbers<[1], [1], [0], [0], [0, 0, 1, 0], [], []>} : vector<32x16xf32>, vector<32x16xf32>, vector<32x32xf32> -> vector<32x32xf32>
    %cst_68 = arith.constant 2.500000e-01 : f32
    %44 = vector.broadcast %cst_68 : f32 to vector<32x32xf32>
    %45 = arith.mulf %43, %44 : vector<32x32xf32>
    %46 = arith.addf %45, %3 : vector<32x32xf32>
    %cst_69 = arith.constant dense<0xFF800000> : vector<32xf32>
    %47 = vector.multi_reduction <maximumf>, %46, %cst_69 [1] : vector<32x32xf32> to vector<32xf32>
    %48 = vector.shape_cast %47 : vector<32xf32> to vector<32x1xf32>
    %49 = vector.broadcast %48 : vector<32x1xf32> to vector<32x32xf32>
    %50 = arith.subf %46, %49 : vector<32x32xf32>
    %51 = math.exp %50 : vector<32x32xf32>
    %cst_70 = arith.constant dense<0.000000e+00> : vector<32xf32>
    %52 = vector.multi_reduction <add>, %51, %cst_70 [1] : vector<32x32xf32> to vector<32xf32>
    %53 = vector.shape_cast %52 : vector<32xf32> to vector<32x1xf32>
    %54 = tpu.reciprocal %53 {approx = true} : vector<32x1xf32> -> vector<32x1xf32>
    %55 = vector.broadcast %54 : vector<32x1xf32> to vector<32x32xf32>
    %56 = arith.mulf %51, %55 : vector<32x32xf32>
    %cst_71 = arith.constant dense<0.000000e+00> : vector<32x16xf32>
    %57 = tpu.matmul %56, %42, %cst_71 {dimension_numbers = #tpu.dot_dimension_numbers<[1], [0], [0], [1], [0, 0, 1, 1], [], []>} : vector<32x32xf32>, vector<32x16xf32>, vector<32x16xf32> -> vector<32x16xf32>
    %cst_72 = arith.constant dense<0.000000e+00> : vector<32x32xf32>
    %58 = tpu.matmul %57, %33, %cst_72 {dimension_numbers = #tpu.dot_dimension_numbers<[1], [0], [0], [1], [0, 0, 1, 1], [], []>} : vector<32x16xf32>, vector<16x32xf32>, vector<32x32xf32> -> vector<32x32xf32>
    %c0_73 = arith.constant 0 : index
    %c0_74 = arith.constant 0 : index
    %c1_75 = arith.constant 1 : index
    %c0_76 = arith.constant 0 : index
    %c0_77 = arith.constant 0 : index
    %59 = vector.load %arg6[%c0_73, %c0_74, %c1_75, %c0_76, %c0_77] : memref<2x3x2x32x16xf32, #tpu.memory_space<vmem>>, vector<1x1x1x32x16xf32>
    %60 = vector.shape_cast %59 : vector<1x1x1x32x16xf32> to vector<32x16xf32>
    %c0_78 = arith.constant 0 : index
    %c1_79 = arith.constant 1 : index
    %c1_80 = arith.constant 1 : index
    %c0_81 = arith.constant 0 : index
    %c0_82 = arith.constant 0 : index
    %61 = vector.load %arg6[%c0_78, %c1_79, %c1_80, %c0_81, %c0_82] : memref<2x3x2x32x16xf32, #tpu.memory_space<vmem>>, vector<1x1x1x32x16xf32>
    %62 = vector.shape_cast %61 : vector<1x1x1x32x16xf32> to vector<32x16xf32>
    %c0_83 = arith.constant 0 : index
    %c2_84 = arith.constant 2 : index
    %c1_85 = arith.constant 1 : index
    %c0_86 = arith.constant 0 : index
    %c0_87 = arith.constant 0 : index
    %63 = vector.load %arg6[%c0_83, %c2_84, %c1_85, %c0_86, %c0_87] : memref<2x3x2x32x16xf32, #tpu.memory_space<vmem>>, vector<1x1x1x32x16xf32>
    %64 = vector.shape_cast %63 : vector<1x1x1x32x16xf32> to vector<32x16xf32>
    %c0_88 = arith.constant 0 : index
    %c0_89 = arith.constant 0 : index
    %c1_90 = arith.constant 1 : index
    %c0_91 = arith.constant 0 : index
    %c0_92 = arith.constant 0 : index
    %65 = vector.load %arg7[%c0_88, %c0_89, %c1_90, %c0_91, %c0_92] : memref<2x3x2x1x16xf32, #tpu.memory_space<vmem>>, vector<1x1x1x1x16xf32>
    %66 = vector.shape_cast %65 : vector<1x1x1x1x16xf32> to vector<1x16xf32>
    %c0_93 = arith.constant 0 : index
    %c1_94 = arith.constant 1 : index
    %c1_95 = arith.constant 1 : index
    %c0_96 = arith.constant 0 : index
    %c0_97 = arith.constant 0 : index
    %67 = vector.load %arg7[%c0_93, %c1_94, %c1_95, %c0_96, %c0_97] : memref<2x3x2x1x16xf32, #tpu.memory_space<vmem>>, vector<1x1x1x1x16xf32>
    %68 = vector.shape_cast %67 : vector<1x1x1x1x16xf32> to vector<1x16xf32>
    %c0_98 = arith.constant 0 : index
    %c2_99 = arith.constant 2 : index
    %c1_100 = arith.constant 1 : index
    %c0_101 = arith.constant 0 : index
    %c0_102 = arith.constant 0 : index
    %69 = vector.load %arg7[%c0_98, %c2_99, %c1_100, %c0_101, %c0_102] : memref<2x3x2x1x16xf32, #tpu.memory_space<vmem>>, vector<1x1x1x1x16xf32>
    %70 = vector.shape_cast %69 : vector<1x1x1x1x16xf32> to vector<1x16xf32>
    %c0_103 = arith.constant 0 : index
    %c1_104 = arith.constant 1 : index
    %c0_105 = arith.constant 0 : index
    %c0_106 = arith.constant 0 : index
    %71 = vector.load %arg8[%c0_103, %c1_104, %c0_105, %c0_106] : memref<2x2x16x32xf32, #tpu.memory_space<vmem>>, vector<1x1x16x32xf32>
    %72 = vector.shape_cast %71 : vector<1x1x16x32xf32> to vector<16x32xf32>
    %cst_107 = arith.constant dense<0.000000e+00> : vector<32x16xf32>
    %73 = tpu.matmul %1, %60, %cst_107 {dimension_numbers = #tpu.dot_dimension_numbers<[1], [0], [0], [1], [0, 0, 1, 1], [], []>} : vector<32x32xf32>, vector<32x16xf32>, vector<32x16xf32> -> vector<32x16xf32>
    %74 = vector.broadcast %66 : vector<1x16xf32> to vector<32x16xf32>
    %75 = arith.addf %73, %74 : vector<32x16xf32>
    %cst_108 = arith.constant dense<0.000000e+00> : vector<32x16xf32>
    %76 = tpu.matmul %1, %62, %cst_108 {dimension_numbers = #tpu.dot_dimension_numbers<[1], [0], [0], [1], [0, 0, 1, 1], [], []>} : vector<32x32xf32>, vector<32x16xf32>, vector<32x16xf32> -> vector<32x16xf32>
    %77 = vector.broadcast %68 : vector<1x16xf32> to vector<32x16xf32>
    %78 = arith.addf %76, %77 : vector<32x16xf32>
    %cst_109 = arith.constant dense<0.000000e+00> : vector<32x16xf32>
    %79 = tpu.matmul %1, %64, %cst_109 {dimension_numbers = #tpu.dot_dimension_numbers<[1], [0], [0], [1], [0, 0, 1, 1], [], []>} : vector<32x32xf32>, vector<32x16xf32>, vector<32x16xf32> -> vector<32x16xf32>
    %80 = vector.broadcast %70 : vector<1x16xf32> to vector<32x16xf32>
    %81 = arith.addf %79, %80 : vector<32x16xf32>
    %cst_110 = arith.constant dense<0.000000e+00> : vector<32x32xf32>
    %82 = tpu.matmul %75, %78, %cst_110 {dimension_numbers = #tpu.dot_dimension_numbers<[1], [1], [0], [0], [0, 0, 1, 0], [], []>} : vector<32x16xf32>, vector<32x16xf32>, vector<32x32xf32> -> vector<32x32xf32>
    %cst_111 = arith.constant 2.500000e-01 : f32
    %83 = vector.broadcast %cst_111 : f32 to vector<32x32xf32>
    %84 = arith.mulf %82, %83 : vector<32x32xf32>
    %85 = arith.addf %84, %3 : vector<32x32xf32>
    %cst_112 = arith.constant dense<0xFF800000> : vector<32xf32>
    %86 = vector.multi_reduction <maximumf>, %85, %cst_112 [1] : vector<32x32xf32> to vector<32xf32>
    %87 = vector.shape_cast %86 : vector<32xf32> to vector<32x1xf32>
    %88 = vector.broadcast %87 : vector<32x1xf32> to vector<32x32xf32>
    %89 = arith.subf %85, %88 : vector<32x32xf32>
    %90 = math.exp %89 : vector<32x32xf32>
    %cst_113 = arith.constant dense<0.000000e+00> : vector<32xf32>
    %91 = vector.multi_reduction <add>, %90, %cst_113 [1] : vector<32x32xf32> to vector<32xf32>
    %92 = vector.shape_cast %91 : vector<32xf32> to vector<32x1xf32>
    %93 = tpu.reciprocal %92 {approx = true} : vector<32x1xf32> -> vector<32x1xf32>
    %94 = vector.broadcast %93 : vector<32x1xf32> to vector<32x32xf32>
    %95 = arith.mulf %90, %94 : vector<32x32xf32>
    %cst_114 = arith.constant dense<0.000000e+00> : vector<32x16xf32>
    %96 = tpu.matmul %95, %81, %cst_114 {dimension_numbers = #tpu.dot_dimension_numbers<[1], [0], [0], [1], [0, 0, 1, 1], [], []>} : vector<32x32xf32>, vector<32x16xf32>, vector<32x16xf32> -> vector<32x16xf32>
    %cst_115 = arith.constant dense<0.000000e+00> : vector<32x32xf32>
    %97 = tpu.matmul %96, %72, %cst_115 {dimension_numbers = #tpu.dot_dimension_numbers<[1], [0], [0], [1], [0, 0, 1, 1], [], []>} : vector<32x16xf32>, vector<16x32xf32>, vector<32x32xf32> -> vector<32x32xf32>
    %98 = arith.addf %58, %97 : vector<32x32xf32>
    %99 = vector.broadcast %9 : vector<1x32xf32> to vector<32x32xf32>
    %100 = arith.addf %98, %99 : vector<32x32xf32>
    %101 = arith.addf %1, %100 : vector<32x32xf32>
    %cst_116 = arith.constant dense<0.000000e+00> : vector<32xf32>
    %102 = vector.multi_reduction <add>, %101, %cst_116 [1] : vector<32x32xf32> to vector<32xf32>
    %103 = vector.shape_cast %102 : vector<32xf32> to vector<32x1xf32>
    %cst_117 = arith.constant 3.200000e+01 : f32
    %104 = vector.broadcast %cst_117 : f32 to vector<32x1xf32>
    %105 = arith.divf %103, %104 : vector<32x1xf32>
    %106 = vector.broadcast %105 : vector<32x1xf32> to vector<32x32xf32>
    %107 = arith.subf %101, %106 : vector<32x32xf32>
    %108 = arith.mulf %107, %107 : vector<32x32xf32>
    %cst_118 = arith.constant dense<0.000000e+00> : vector<32xf32>
    %109 = vector.multi_reduction <add>, %108, %cst_118 [1] : vector<32x32xf32> to vector<32xf32>
    %110 = vector.shape_cast %109 : vector<32xf32> to vector<32x1xf32>
    %cst_119 = arith.constant 3.200000e+01 : f32
    %111 = vector.broadcast %cst_119 : f32 to vector<32x1xf32>
    %112 = arith.divf %110, %111 : vector<32x1xf32>
    %113 = vector.broadcast %105 : vector<32x1xf32> to vector<32x32xf32>
    %114 = arith.subf %101, %113 : vector<32x32xf32>
    %cst_120 = arith.constant 9.99999996E-13 : f32
    %115 = vector.broadcast %cst_120 : f32 to vector<32x1xf32>
    %116 = arith.addf %112, %115 : vector<32x1xf32>
    %117 = math.rsqrt %116 : vector<32x1xf32>
    %118 = vector.broadcast %117 : vector<32x1xf32> to vector<32x32xf32>
    %119 = arith.mulf %114, %118 : vector<32x32xf32>
    %120 = vector.broadcast %11 : vector<1x32xf32> to vector<32x32xf32>
    %121 = arith.mulf %119, %120 : vector<32x32xf32>
    %122 = vector.broadcast %13 : vector<1x32xf32> to vector<32x32xf32>
    %123 = arith.addf %121, %122 : vector<32x32xf32>
    %c0_121 = arith.constant 0 : index
    %c0_122 = arith.constant 0 : index
    %c0_123 = arith.constant 0 : index
    %124 = vector.load %arg10[%c0_121, %c0_122, %c0_123] : memref<2x32x64xf32, #tpu.memory_space<vmem>>, vector<1x32x64xf32>
    %125 = vector.shape_cast %124 : vector<1x32x64xf32> to vector<32x64xf32>
    %cst_124 = arith.constant dense<0.000000e+00> : vector<32x64xf32>
    %126 = tpu.matmul %123, %125, %cst_124 {dimension_numbers = #tpu.dot_dimension_numbers<[1], [0], [0], [1], [0, 0, 1, 1], [], []>} : vector<32x32xf32>, vector<32x64xf32>, vector<32x64xf32> -> vector<32x64xf32>
    %c0_125 = arith.constant 0 : index
    %c0_126 = arith.constant 0 : index
    %c0_127 = arith.constant 0 : index
    %127 = vector.load %arg11[%c0_125, %c0_126, %c0_127] : memref<2x1x64xf32, #tpu.memory_space<vmem>>, vector<1x1x64xf32>
    %128 = vector.shape_cast %127 : vector<1x1x64xf32> to vector<1x64xf32>
    %129 = vector.broadcast %128 : vector<1x64xf32> to vector<32x64xf32>
    %130 = arith.addf %126, %129 : vector<32x64xf32>
    %cst_128 = arith.constant 5.000000e-01 : f32
    %131 = vector.broadcast %cst_128 : f32 to vector<32x64xf32>
    %132 = arith.mulf %131, %130 : vector<32x64xf32>
    %cst_129 = arith.constant 4.471500e-02 : f32
    %133 = vector.broadcast %cst_129 : f32 to vector<32x64xf32>
    %134 = arith.mulf %133, %130 : vector<32x64xf32>
    %135 = arith.mulf %134, %130 : vector<32x64xf32>
    %136 = arith.mulf %135, %130 : vector<32x64xf32>
    %137 = arith.addf %130, %136 : vector<32x64xf32>
    %cst_130 = arith.constant 0.797884583 : f32
    %138 = vector.broadcast %cst_130 : f32 to vector<32x64xf32>
    %139 = arith.mulf %138, %137 : vector<32x64xf32>
    %140 = math.tanh %139 : vector<32x64xf32>
    %cst_131 = arith.constant 1.000000e+00 : f32
    %141 = vector.broadcast %cst_131 : f32 to vector<32x64xf32>
    %142 = arith.addf %141, %140 : vector<32x64xf32>
    %143 = arith.mulf %132, %142 : vector<32x64xf32>
    %c0_132 = arith.constant 0 : index
    %c0_133 = arith.constant 0 : index
    %c0_134 = arith.constant 0 : index
    %144 = vector.load %arg12[%c0_132, %c0_133, %c0_134] : memref<2x64x32xf32, #tpu.memory_space<vmem>>, vector<1x64x32xf32>
    %145 = vector.shape_cast %144 : vector<1x64x32xf32> to vector<64x32xf32>
    %cst_135 = arith.constant dense<0.000000e+00> : vector<32x32xf32>
    %146 = tpu.matmul %143, %145, %cst_135 {dimension_numbers = #tpu.dot_dimension_numbers<[1], [0], [0], [1], [0, 0, 1, 1], [], []>} : vector<32x64xf32>, vector<64x32xf32>, vector<32x32xf32> -> vector<32x32xf32>
    %147 = vector.broadcast %15 : vector<1x32xf32> to vector<32x32xf32>
    %148 = arith.addf %146, %147 : vector<32x32xf32>
    %149 = arith.addf %123, %148 : vector<32x32xf32>
    %cst_136 = arith.constant dense<0.000000e+00> : vector<32xf32>
    %150 = vector.multi_reduction <add>, %149, %cst_136 [1] : vector<32x32xf32> to vector<32xf32>
    %151 = vector.shape_cast %150 : vector<32xf32> to vector<32x1xf32>
    %cst_137 = arith.constant 3.200000e+01 : f32
    %152 = vector.broadcast %cst_137 : f32 to vector<32x1xf32>
    %153 = arith.divf %151, %152 : vector<32x1xf32>
    %154 = vector.broadcast %153 : vector<32x1xf32> to vector<32x32xf32>
    %155 = arith.subf %149, %154 : vector<32x32xf32>
    %156 = arith.mulf %155, %155 : vector<32x32xf32>
    %cst_138 = arith.constant dense<0.000000e+00> : vector<32xf32>
    %157 = vector.multi_reduction <add>, %156, %cst_138 [1] : vector<32x32xf32> to vector<32xf32>
    %158 = vector.shape_cast %157 : vector<32xf32> to vector<32x1xf32>
    %cst_139 = arith.constant 3.200000e+01 : f32
    %159 = vector.broadcast %cst_139 : f32 to vector<32x1xf32>
    %160 = arith.divf %158, %159 : vector<32x1xf32>
    %161 = vector.broadcast %153 : vector<32x1xf32> to vector<32x32xf32>
    %162 = arith.subf %149, %161 : vector<32x32xf32>
    %cst_140 = arith.constant 9.99999996E-13 : f32
    %163 = vector.broadcast %cst_140 : f32 to vector<32x1xf32>
    %164 = arith.addf %160, %163 : vector<32x1xf32>
    %165 = math.rsqrt %164 : vector<32x1xf32>
    %166 = vector.broadcast %165 : vector<32x1xf32> to vector<32x32xf32>
    %167 = arith.mulf %162, %166 : vector<32x32xf32>
    %168 = vector.broadcast %17 : vector<1x32xf32> to vector<32x32xf32>
    %169 = arith.mulf %167, %168 : vector<32x32xf32>
    %170 = vector.broadcast %19 : vector<1x32xf32> to vector<32x32xf32>
    %171 = arith.addf %169, %170 : vector<32x32xf32>
    %c1_141 = arith.constant 1 : index
    %c0_142 = arith.constant 0 : index
    %c0_143 = arith.constant 0 : index
    %c0_144 = arith.constant 0 : index
    %172 = vector.load %arg9[%c1_141, %c0_142, %c0_143, %c0_144] : memref<2x6x1x32xf32, #tpu.memory_space<vmem>>, vector<1x1x1x32xf32>
    %173 = vector.shape_cast %172 : vector<1x1x1x32xf32> to vector<1x32xf32>
    %c1_145 = arith.constant 1 : index
    %c1_146 = arith.constant 1 : index
    %c0_147 = arith.constant 0 : index
    %c0_148 = arith.constant 0 : index
    %174 = vector.load %arg9[%c1_145, %c1_146, %c0_147, %c0_148] : memref<2x6x1x32xf32, #tpu.memory_space<vmem>>, vector<1x1x1x32xf32>
    %175 = vector.shape_cast %174 : vector<1x1x1x32xf32> to vector<1x32xf32>
    %c1_149 = arith.constant 1 : index
    %c2_150 = arith.constant 2 : index
    %c0_151 = arith.constant 0 : index
    %c0_152 = arith.constant 0 : index
    %176 = vector.load %arg9[%c1_149, %c2_150, %c0_151, %c0_152] : memref<2x6x1x32xf32, #tpu.memory_space<vmem>>, vector<1x1x1x32xf32>
    %177 = vector.shape_cast %176 : vector<1x1x1x32xf32> to vector<1x32xf32>
    %c1_153 = arith.constant 1 : index
    %c3_154 = arith.constant 3 : index
    %c0_155 = arith.constant 0 : index
    %c0_156 = arith.constant 0 : index
    %178 = vector.load %arg9[%c1_153, %c3_154, %c0_155, %c0_156] : memref<2x6x1x32xf32, #tpu.memory_space<vmem>>, vector<1x1x1x32xf32>
    %179 = vector.shape_cast %178 : vector<1x1x1x32xf32> to vector<1x32xf32>
    %c1_157 = arith.constant 1 : index
    %c4_158 = arith.constant 4 : index
    %c0_159 = arith.constant 0 : index
    %c0_160 = arith.constant 0 : index
    %180 = vector.load %arg9[%c1_157, %c4_158, %c0_159, %c0_160] : memref<2x6x1x32xf32, #tpu.memory_space<vmem>>, vector<1x1x1x32xf32>
    %181 = vector.shape_cast %180 : vector<1x1x1x32xf32> to vector<1x32xf32>
    %c1_161 = arith.constant 1 : index
    %c5_162 = arith.constant 5 : index
    %c0_163 = arith.constant 0 : index
    %c0_164 = arith.constant 0 : index
    %182 = vector.load %arg9[%c1_161, %c5_162, %c0_163, %c0_164] : memref<2x6x1x32xf32, #tpu.memory_space<vmem>>, vector<1x1x1x32xf32>
    %183 = vector.shape_cast %182 : vector<1x1x1x32xf32> to vector<1x32xf32>
    %c1_165 = arith.constant 1 : index
    %c0_166 = arith.constant 0 : index
    %c0_167 = arith.constant 0 : index
    %c0_168 = arith.constant 0 : index
    %c0_169 = arith.constant 0 : index
    %184 = vector.load %arg6[%c1_165, %c0_166, %c0_167, %c0_168, %c0_169] : memref<2x3x2x32x16xf32, #tpu.memory_space<vmem>>, vector<1x1x1x32x16xf32>
    %185 = vector.shape_cast %184 : vector<1x1x1x32x16xf32> to vector<32x16xf32>
    %c1_170 = arith.constant 1 : index
    %c1_171 = arith.constant 1 : index
    %c0_172 = arith.constant 0 : index
    %c0_173 = arith.constant 0 : index
    %c0_174 = arith.constant 0 : index
    %186 = vector.load %arg6[%c1_170, %c1_171, %c0_172, %c0_173, %c0_174] : memref<2x3x2x32x16xf32, #tpu.memory_space<vmem>>, vector<1x1x1x32x16xf32>
    %187 = vector.shape_cast %186 : vector<1x1x1x32x16xf32> to vector<32x16xf32>
    %c1_175 = arith.constant 1 : index
    %c2_176 = arith.constant 2 : index
    %c0_177 = arith.constant 0 : index
    %c0_178 = arith.constant 0 : index
    %c0_179 = arith.constant 0 : index
    %188 = vector.load %arg6[%c1_175, %c2_176, %c0_177, %c0_178, %c0_179] : memref<2x3x2x32x16xf32, #tpu.memory_space<vmem>>, vector<1x1x1x32x16xf32>
    %189 = vector.shape_cast %188 : vector<1x1x1x32x16xf32> to vector<32x16xf32>
    %c1_180 = arith.constant 1 : index
    %c0_181 = arith.constant 0 : index
    %c0_182 = arith.constant 0 : index
    %c0_183 = arith.constant 0 : index
    %c0_184 = arith.constant 0 : index
    %190 = vector.load %arg7[%c1_180, %c0_181, %c0_182, %c0_183, %c0_184] : memref<2x3x2x1x16xf32, #tpu.memory_space<vmem>>, vector<1x1x1x1x16xf32>
    %191 = vector.shape_cast %190 : vector<1x1x1x1x16xf32> to vector<1x16xf32>
    %c1_185 = arith.constant 1 : index
    %c1_186 = arith.constant 1 : index
    %c0_187 = arith.constant 0 : index
    %c0_188 = arith.constant 0 : index
    %c0_189 = arith.constant 0 : index
    %192 = vector.load %arg7[%c1_185, %c1_186, %c0_187, %c0_188, %c0_189] : memref<2x3x2x1x16xf32, #tpu.memory_space<vmem>>, vector<1x1x1x1x16xf32>
    %193 = vector.shape_cast %192 : vector<1x1x1x1x16xf32> to vector<1x16xf32>
    %c1_190 = arith.constant 1 : index
    %c2_191 = arith.constant 2 : index
    %c0_192 = arith.constant 0 : index
    %c0_193 = arith.constant 0 : index
    %c0_194 = arith.constant 0 : index
    %194 = vector.load %arg7[%c1_190, %c2_191, %c0_192, %c0_193, %c0_194] : memref<2x3x2x1x16xf32, #tpu.memory_space<vmem>>, vector<1x1x1x1x16xf32>
    %195 = vector.shape_cast %194 : vector<1x1x1x1x16xf32> to vector<1x16xf32>
    %c1_195 = arith.constant 1 : index
    %c0_196 = arith.constant 0 : index
    %c0_197 = arith.constant 0 : index
    %c0_198 = arith.constant 0 : index
    %196 = vector.load %arg8[%c1_195, %c0_196, %c0_197, %c0_198] : memref<2x2x16x32xf32, #tpu.memory_space<vmem>>, vector<1x1x16x32xf32>
    %197 = vector.shape_cast %196 : vector<1x1x16x32xf32> to vector<16x32xf32>
    %cst_199 = arith.constant dense<0.000000e+00> : vector<32x16xf32>
    %198 = tpu.matmul %171, %185, %cst_199 {dimension_numbers = #tpu.dot_dimension_numbers<[1], [0], [0], [1], [0, 0, 1, 1], [], []>} : vector<32x32xf32>, vector<32x16xf32>, vector<32x16xf32> -> vector<32x16xf32>
    %199 = vector.broadcast %191 : vector<1x16xf32> to vector<32x16xf32>
    %200 = arith.addf %198, %199 : vector<32x16xf32>
    %cst_200 = arith.constant dense<0.000000e+00> : vector<32x16xf32>
    %201 = tpu.matmul %171, %187, %cst_200 {dimension_numbers = #tpu.dot_dimension_numbers<[1], [0], [0], [1], [0, 0, 1, 1], [], []>} : vector<32x32xf32>, vector<32x16xf32>, vector<32x16xf32> -> vector<32x16xf32>
    %202 = vector.broadcast %193 : vector<1x16xf32> to vector<32x16xf32>
    %203 = arith.addf %201, %202 : vector<32x16xf32>
    %cst_201 = arith.constant dense<0.000000e+00> : vector<32x16xf32>
    %204 = tpu.matmul %171, %189, %cst_201 {dimension_numbers = #tpu.dot_dimension_numbers<[1], [0], [0], [1], [0, 0, 1, 1], [], []>} : vector<32x32xf32>, vector<32x16xf32>, vector<32x16xf32> -> vector<32x16xf32>
    %205 = vector.broadcast %195 : vector<1x16xf32> to vector<32x16xf32>
    %206 = arith.addf %204, %205 : vector<32x16xf32>
    %cst_202 = arith.constant dense<0.000000e+00> : vector<32x32xf32>
    %207 = tpu.matmul %200, %203, %cst_202 {dimension_numbers = #tpu.dot_dimension_numbers<[1], [1], [0], [0], [0, 0, 1, 0], [], []>} : vector<32x16xf32>, vector<32x16xf32>, vector<32x32xf32> -> vector<32x32xf32>
    %cst_203 = arith.constant 2.500000e-01 : f32
    %208 = vector.broadcast %cst_203 : f32 to vector<32x32xf32>
    %209 = arith.mulf %207, %208 : vector<32x32xf32>
    %210 = arith.addf %209, %3 : vector<32x32xf32>
    %cst_204 = arith.constant dense<0xFF800000> : vector<32xf32>
    %211 = vector.multi_reduction <maximumf>, %210, %cst_204 [1] : vector<32x32xf32> to vector<32xf32>
    %212 = vector.shape_cast %211 : vector<32xf32> to vector<32x1xf32>
    %213 = vector.broadcast %212 : vector<32x1xf32> to vector<32x32xf32>
    %214 = arith.subf %210, %213 : vector<32x32xf32>
    %215 = math.exp %214 : vector<32x32xf32>
    %cst_205 = arith.constant dense<0.000000e+00> : vector<32xf32>
    %216 = vector.multi_reduction <add>, %215, %cst_205 [1] : vector<32x32xf32> to vector<32xf32>
    %217 = vector.shape_cast %216 : vector<32xf32> to vector<32x1xf32>
    %218 = tpu.reciprocal %217 {approx = true} : vector<32x1xf32> -> vector<32x1xf32>
    %219 = vector.broadcast %218 : vector<32x1xf32> to vector<32x32xf32>
    %220 = arith.mulf %215, %219 : vector<32x32xf32>
    %cst_206 = arith.constant dense<0.000000e+00> : vector<32x16xf32>
    %221 = tpu.matmul %220, %206, %cst_206 {dimension_numbers = #tpu.dot_dimension_numbers<[1], [0], [0], [1], [0, 0, 1, 1], [], []>} : vector<32x32xf32>, vector<32x16xf32>, vector<32x16xf32> -> vector<32x16xf32>
    %cst_207 = arith.constant dense<0.000000e+00> : vector<32x32xf32>
    %222 = tpu.matmul %221, %197, %cst_207 {dimension_numbers = #tpu.dot_dimension_numbers<[1], [0], [0], [1], [0, 0, 1, 1], [], []>} : vector<32x16xf32>, vector<16x32xf32>, vector<32x32xf32> -> vector<32x32xf32>
    %c1_208 = arith.constant 1 : index
    %c0_209 = arith.constant 0 : index
    %c1_210 = arith.constant 1 : index
    %c0_211 = arith.constant 0 : index
    %c0_212 = arith.constant 0 : index
    %223 = vector.load %arg6[%c1_208, %c0_209, %c1_210, %c0_211, %c0_212] : memref<2x3x2x32x16xf32, #tpu.memory_space<vmem>>, vector<1x1x1x32x16xf32>
    %224 = vector.shape_cast %223 : vector<1x1x1x32x16xf32> to vector<32x16xf32>
    %c1_213 = arith.constant 1 : index
    %c1_214 = arith.constant 1 : index
    %c1_215 = arith.constant 1 : index
    %c0_216 = arith.constant 0 : index
    %c0_217 = arith.constant 0 : index
    %225 = vector.load %arg6[%c1_213, %c1_214, %c1_215, %c0_216, %c0_217] : memref<2x3x2x32x16xf32, #tpu.memory_space<vmem>>, vector<1x1x1x32x16xf32>
    %226 = vector.shape_cast %225 : vector<1x1x1x32x16xf32> to vector<32x16xf32>
    %c1_218 = arith.constant 1 : index
    %c2_219 = arith.constant 2 : index
    %c1_220 = arith.constant 1 : index
    %c0_221 = arith.constant 0 : index
    %c0_222 = arith.constant 0 : index
    %227 = vector.load %arg6[%c1_218, %c2_219, %c1_220, %c0_221, %c0_222] : memref<2x3x2x32x16xf32, #tpu.memory_space<vmem>>, vector<1x1x1x32x16xf32>
    %228 = vector.shape_cast %227 : vector<1x1x1x32x16xf32> to vector<32x16xf32>
    %c1_223 = arith.constant 1 : index
    %c0_224 = arith.constant 0 : index
    %c1_225 = arith.constant 1 : index
    %c0_226 = arith.constant 0 : index
    %c0_227 = arith.constant 0 : index
    %229 = vector.load %arg7[%c1_223, %c0_224, %c1_225, %c0_226, %c0_227] : memref<2x3x2x1x16xf32, #tpu.memory_space<vmem>>, vector<1x1x1x1x16xf32>
    %230 = vector.shape_cast %229 : vector<1x1x1x1x16xf32> to vector<1x16xf32>
    %c1_228 = arith.constant 1 : index
    %c1_229 = arith.constant 1 : index
    %c1_230 = arith.constant 1 : index
    %c0_231 = arith.constant 0 : index
    %c0_232 = arith.constant 0 : index
    %231 = vector.load %arg7[%c1_228, %c1_229, %c1_230, %c0_231, %c0_232] : memref<2x3x2x1x16xf32, #tpu.memory_space<vmem>>, vector<1x1x1x1x16xf32>
    %232 = vector.shape_cast %231 : vector<1x1x1x1x16xf32> to vector<1x16xf32>
    %c1_233 = arith.constant 1 : index
    %c2_234 = arith.constant 2 : index
    %c1_235 = arith.constant 1 : index
    %c0_236 = arith.constant 0 : index
    %c0_237 = arith.constant 0 : index
    %233 = vector.load %arg7[%c1_233, %c2_234, %c1_235, %c0_236, %c0_237] : memref<2x3x2x1x16xf32, #tpu.memory_space<vmem>>, vector<1x1x1x1x16xf32>
    %234 = vector.shape_cast %233 : vector<1x1x1x1x16xf32> to vector<1x16xf32>
    %c1_238 = arith.constant 1 : index
    %c1_239 = arith.constant 1 : index
    %c0_240 = arith.constant 0 : index
    %c0_241 = arith.constant 0 : index
    %235 = vector.load %arg8[%c1_238, %c1_239, %c0_240, %c0_241] : memref<2x2x16x32xf32, #tpu.memory_space<vmem>>, vector<1x1x16x32xf32>
    %236 = vector.shape_cast %235 : vector<1x1x16x32xf32> to vector<16x32xf32>
    %cst_242 = arith.constant dense<0.000000e+00> : vector<32x16xf32>
    %237 = tpu.matmul %171, %224, %cst_242 {dimension_numbers = #tpu.dot_dimension_numbers<[1], [0], [0], [1], [0, 0, 1, 1], [], []>} : vector<32x32xf32>, vector<32x16xf32>, vector<32x16xf32> -> vector<32x16xf32>
    %238 = vector.broadcast %230 : vector<1x16xf32> to vector<32x16xf32>
    %239 = arith.addf %237, %238 : vector<32x16xf32>
    %cst_243 = arith.constant dense<0.000000e+00> : vector<32x16xf32>
    %240 = tpu.matmul %171, %226, %cst_243 {dimension_numbers = #tpu.dot_dimension_numbers<[1], [0], [0], [1], [0, 0, 1, 1], [], []>} : vector<32x32xf32>, vector<32x16xf32>, vector<32x16xf32> -> vector<32x16xf32>
    %241 = vector.broadcast %232 : vector<1x16xf32> to vector<32x16xf32>
    %242 = arith.addf %240, %241 : vector<32x16xf32>
    %cst_244 = arith.constant dense<0.000000e+00> : vector<32x16xf32>
    %243 = tpu.matmul %171, %228, %cst_244 {dimension_numbers = #tpu.dot_dimension_numbers<[1], [0], [0], [1], [0, 0, 1, 1], [], []>} : vector<32x32xf32>, vector<32x16xf32>, vector<32x16xf32> -> vector<32x16xf32>
    %244 = vector.broadcast %234 : vector<1x16xf32> to vector<32x16xf32>
    %245 = arith.addf %243, %244 : vector<32x16xf32>
    %cst_245 = arith.constant dense<0.000000e+00> : vector<32x32xf32>
    %246 = tpu.matmul %239, %242, %cst_245 {dimension_numbers = #tpu.dot_dimension_numbers<[1], [1], [0], [0], [0, 0, 1, 0], [], []>} : vector<32x16xf32>, vector<32x16xf32>, vector<32x32xf32> -> vector<32x32xf32>
    %cst_246 = arith.constant 2.500000e-01 : f32
    %247 = vector.broadcast %cst_246 : f32 to vector<32x32xf32>
    %248 = arith.mulf %246, %247 : vector<32x32xf32>
    %249 = arith.addf %248, %3 : vector<32x32xf32>
    %cst_247 = arith.constant dense<0xFF800000> : vector<32xf32>
    %250 = vector.multi_reduction <maximumf>, %249, %cst_247 [1] : vector<32x32xf32> to vector<32xf32>
    %251 = vector.shape_cast %250 : vector<32xf32> to vector<32x1xf32>
    %252 = vector.broadcast %251 : vector<32x1xf32> to vector<32x32xf32>
    %253 = arith.subf %249, %252 : vector<32x32xf32>
    %254 = math.exp %253 : vector<32x32xf32>
    %cst_248 = arith.constant dense<0.000000e+00> : vector<32xf32>
    %255 = vector.multi_reduction <add>, %254, %cst_248 [1] : vector<32x32xf32> to vector<32xf32>
    %256 = vector.shape_cast %255 : vector<32xf32> to vector<32x1xf32>
    %257 = tpu.reciprocal %256 {approx = true} : vector<32x1xf32> -> vector<32x1xf32>
    %258 = vector.broadcast %257 : vector<32x1xf32> to vector<32x32xf32>
    %259 = arith.mulf %254, %258 : vector<32x32xf32>
    %cst_249 = arith.constant dense<0.000000e+00> : vector<32x16xf32>
    %260 = tpu.matmul %259, %245, %cst_249 {dimension_numbers = #tpu.dot_dimension_numbers<[1], [0], [0], [1], [0, 0, 1, 1], [], []>} : vector<32x32xf32>, vector<32x16xf32>, vector<32x16xf32> -> vector<32x16xf32>
    %cst_250 = arith.constant dense<0.000000e+00> : vector<32x32xf32>
    %261 = tpu.matmul %260, %236, %cst_250 {dimension_numbers = #tpu.dot_dimension_numbers<[1], [0], [0], [1], [0, 0, 1, 1], [], []>} : vector<32x16xf32>, vector<16x32xf32>, vector<32x32xf32> -> vector<32x32xf32>
    %262 = arith.addf %222, %261 : vector<32x32xf32>
    %263 = vector.broadcast %173 : vector<1x32xf32> to vector<32x32xf32>
    %264 = arith.addf %262, %263 : vector<32x32xf32>
    %265 = arith.addf %171, %264 : vector<32x32xf32>
    %cst_251 = arith.constant dense<0.000000e+00> : vector<32xf32>
    %266 = vector.multi_reduction <add>, %265, %cst_251 [1] : vector<32x32xf32> to vector<32xf32>
    %267 = vector.shape_cast %266 : vector<32xf32> to vector<32x1xf32>
    %cst_252 = arith.constant 3.200000e+01 : f32
    %268 = vector.broadcast %cst_252 : f32 to vector<32x1xf32>
    %269 = arith.divf %267, %268 : vector<32x1xf32>
    %270 = vector.broadcast %269 : vector<32x1xf32> to vector<32x32xf32>
    %271 = arith.subf %265, %270 : vector<32x32xf32>
    %272 = arith.mulf %271, %271 : vector<32x32xf32>
    %cst_253 = arith.constant dense<0.000000e+00> : vector<32xf32>
    %273 = vector.multi_reduction <add>, %272, %cst_253 [1] : vector<32x32xf32> to vector<32xf32>
    %274 = vector.shape_cast %273 : vector<32xf32> to vector<32x1xf32>
    %cst_254 = arith.constant 3.200000e+01 : f32
    %275 = vector.broadcast %cst_254 : f32 to vector<32x1xf32>
    %276 = arith.divf %274, %275 : vector<32x1xf32>
    %277 = vector.broadcast %269 : vector<32x1xf32> to vector<32x32xf32>
    %278 = arith.subf %265, %277 : vector<32x32xf32>
    %cst_255 = arith.constant 9.99999996E-13 : f32
    %279 = vector.broadcast %cst_255 : f32 to vector<32x1xf32>
    %280 = arith.addf %276, %279 : vector<32x1xf32>
    %281 = math.rsqrt %280 : vector<32x1xf32>
    %282 = vector.broadcast %281 : vector<32x1xf32> to vector<32x32xf32>
    %283 = arith.mulf %278, %282 : vector<32x32xf32>
    %284 = vector.broadcast %175 : vector<1x32xf32> to vector<32x32xf32>
    %285 = arith.mulf %283, %284 : vector<32x32xf32>
    %286 = vector.broadcast %177 : vector<1x32xf32> to vector<32x32xf32>
    %287 = arith.addf %285, %286 : vector<32x32xf32>
    %c1_256 = arith.constant 1 : index
    %c0_257 = arith.constant 0 : index
    %c0_258 = arith.constant 0 : index
    %288 = vector.load %arg10[%c1_256, %c0_257, %c0_258] : memref<2x32x64xf32, #tpu.memory_space<vmem>>, vector<1x32x64xf32>
    %289 = vector.shape_cast %288 : vector<1x32x64xf32> to vector<32x64xf32>
    %cst_259 = arith.constant dense<0.000000e+00> : vector<32x64xf32>
    %290 = tpu.matmul %287, %289, %cst_259 {dimension_numbers = #tpu.dot_dimension_numbers<[1], [0], [0], [1], [0, 0, 1, 1], [], []>} : vector<32x32xf32>, vector<32x64xf32>, vector<32x64xf32> -> vector<32x64xf32>
    %c1_260 = arith.constant 1 : index
    %c0_261 = arith.constant 0 : index
    %c0_262 = arith.constant 0 : index
    %291 = vector.load %arg11[%c1_260, %c0_261, %c0_262] : memref<2x1x64xf32, #tpu.memory_space<vmem>>, vector<1x1x64xf32>
    %292 = vector.shape_cast %291 : vector<1x1x64xf32> to vector<1x64xf32>
    %293 = vector.broadcast %292 : vector<1x64xf32> to vector<32x64xf32>
    %294 = arith.addf %290, %293 : vector<32x64xf32>
    %cst_263 = arith.constant 5.000000e-01 : f32
    %295 = vector.broadcast %cst_263 : f32 to vector<32x64xf32>
    %296 = arith.mulf %295, %294 : vector<32x64xf32>
    %cst_264 = arith.constant 4.471500e-02 : f32
    %297 = vector.broadcast %cst_264 : f32 to vector<32x64xf32>
    %298 = arith.mulf %297, %294 : vector<32x64xf32>
    %299 = arith.mulf %298, %294 : vector<32x64xf32>
    %300 = arith.mulf %299, %294 : vector<32x64xf32>
    %301 = arith.addf %294, %300 : vector<32x64xf32>
    %cst_265 = arith.constant 0.797884583 : f32
    %302 = vector.broadcast %cst_265 : f32 to vector<32x64xf32>
    %303 = arith.mulf %302, %301 : vector<32x64xf32>
    %304 = math.tanh %303 : vector<32x64xf32>
    %cst_266 = arith.constant 1.000000e+00 : f32
    %305 = vector.broadcast %cst_266 : f32 to vector<32x64xf32>
    %306 = arith.addf %305, %304 : vector<32x64xf32>
    %307 = arith.mulf %296, %306 : vector<32x64xf32>
    %c1_267 = arith.constant 1 : index
    %c0_268 = arith.constant 0 : index
    %c0_269 = arith.constant 0 : index
    %308 = vector.load %arg12[%c1_267, %c0_268, %c0_269] : memref<2x64x32xf32, #tpu.memory_space<vmem>>, vector<1x64x32xf32>
    %309 = vector.shape_cast %308 : vector<1x64x32xf32> to vector<64x32xf32>
    %cst_270 = arith.constant dense<0.000000e+00> : vector<32x32xf32>
    %310 = tpu.matmul %307, %309, %cst_270 {dimension_numbers = #tpu.dot_dimension_numbers<[1], [0], [0], [1], [0, 0, 1, 1], [], []>} : vector<32x64xf32>, vector<64x32xf32>, vector<32x32xf32> -> vector<32x32xf32>
    %311 = vector.broadcast %179 : vector<1x32xf32> to vector<32x32xf32>
    %312 = arith.addf %310, %311 : vector<32x32xf32>
    %313 = arith.addf %287, %312 : vector<32x32xf32>
    %cst_271 = arith.constant dense<0.000000e+00> : vector<32xf32>
    %314 = vector.multi_reduction <add>, %313, %cst_271 [1] : vector<32x32xf32> to vector<32xf32>
    %315 = vector.shape_cast %314 : vector<32xf32> to vector<32x1xf32>
    %cst_272 = arith.constant 3.200000e+01 : f32
    %316 = vector.broadcast %cst_272 : f32 to vector<32x1xf32>
    %317 = arith.divf %315, %316 : vector<32x1xf32>
    %318 = vector.broadcast %317 : vector<32x1xf32> to vector<32x32xf32>
    %319 = arith.subf %313, %318 : vector<32x32xf32>
    %320 = arith.mulf %319, %319 : vector<32x32xf32>
    %cst_273 = arith.constant dense<0.000000e+00> : vector<32xf32>
    %321 = vector.multi_reduction <add>, %320, %cst_273 [1] : vector<32x32xf32> to vector<32xf32>
    %322 = vector.shape_cast %321 : vector<32xf32> to vector<32x1xf32>
    %cst_274 = arith.constant 3.200000e+01 : f32
    %323 = vector.broadcast %cst_274 : f32 to vector<32x1xf32>
    %324 = arith.divf %322, %323 : vector<32x1xf32>
    %325 = vector.broadcast %317 : vector<32x1xf32> to vector<32x32xf32>
    %326 = arith.subf %313, %325 : vector<32x32xf32>
    %cst_275 = arith.constant 9.99999996E-13 : f32
    %327 = vector.broadcast %cst_275 : f32 to vector<32x1xf32>
    %328 = arith.addf %324, %327 : vector<32x1xf32>
    %329 = math.rsqrt %328 : vector<32x1xf32>
    %330 = vector.broadcast %329 : vector<32x1xf32> to vector<32x32xf32>
    %331 = arith.mulf %326, %330 : vector<32x32xf32>
    %332 = vector.broadcast %181 : vector<1x32xf32> to vector<32x32xf32>
    %333 = arith.mulf %331, %332 : vector<32x32xf32>
    %334 = vector.broadcast %183 : vector<1x32xf32> to vector<32x32xf32>
    %335 = arith.addf %333, %334 : vector<32x32xf32>
    %c0_276 = arith.constant 0 : index
    %c0_277 = arith.constant 0 : index
    %c0_278 = arith.constant 0 : index
    %336 = vector.load %arg13[%c0_276, %c0_277, %c0_278] : memref<2x32x16xf32, #tpu.memory_space<vmem>>, vector<1x32x16xf32>
    %337 = vector.shape_cast %336 : vector<1x32x16xf32> to vector<32x16xf32>
    %c0_279 = arith.constant 0 : index
    %c0_280 = arith.constant 0 : index
    %c0_281 = arith.constant 0 : index
    %338 = vector.load %arg14[%c0_279, %c0_280, %c0_281] : memref<2x1x16xf32, #tpu.memory_space<vmem>>, vector<1x1x16xf32>
    %339 = vector.shape_cast %338 : vector<1x1x16xf32> to vector<1x16xf32>
    %c0_282 = arith.constant 0 : index
    %c0_283 = arith.constant 0 : index
    %c0_284 = arith.constant 0 : index
    %340 = vector.load %arg15[%c0_282, %c0_283, %c0_284] : memref<2x16x1xf32, #tpu.memory_space<vmem>>, vector<1x16x1xf32>
    %341 = vector.shape_cast %340 : vector<1x16x1xf32> to vector<16x1xf32>
    %cst_285 = arith.constant dense<0.000000e+00> : vector<32x16xf32>
    %342 = tpu.matmul %335, %337, %cst_285 {dimension_numbers = #tpu.dot_dimension_numbers<[1], [0], [0], [1], [0, 0, 1, 1], [], []>} : vector<32x32xf32>, vector<32x16xf32>, vector<32x16xf32> -> vector<32x16xf32>
    %343 = vector.broadcast %339 : vector<1x16xf32> to vector<32x16xf32>
    %344 = arith.addf %342, %343 : vector<32x16xf32>
    %345 = math.tanh %344 : vector<32x16xf32>
    %cst_286 = arith.constant dense<0.000000e+00> : vector<32x1xf32>
    %346 = tpu.matmul %345, %341, %cst_286 {dimension_numbers = #tpu.dot_dimension_numbers<[1], [0], [0], [1], [0, 0, 1, 1], [], []>} : vector<32x16xf32>, vector<16x1xf32>, vector<32x1xf32> -> vector<32x1xf32>
    %347 = arith.addf %346, %5 : vector<32x1xf32>
    %cst_287 = arith.constant dense<0xFF800000> : vector<1xf32>
    %348 = vector.multi_reduction <maximumf>, %347, %cst_287 [0] : vector<32x1xf32> to vector<1xf32>
    %349 = vector.shape_cast %348 : vector<1xf32> to vector<1x1xf32>
    %350 = vector.broadcast %349 : vector<1x1xf32> to vector<32x1xf32>
    %351 = arith.subf %347, %350 : vector<32x1xf32>
    %352 = math.exp %351 : vector<32x1xf32>
    %cst_288 = arith.constant dense<0.000000e+00> : vector<4x1xf32>
    %353 = tpu.matmul %6, %352, %cst_288 {dimension_numbers = #tpu.dot_dimension_numbers<[1], [0], [0], [1], [0, 0, 1, 1], [], []>} : vector<4x32xf32>, vector<32x1xf32>, vector<4x1xf32> -> vector<4x1xf32>
    %354 = vector.broadcast %352 : vector<32x1xf32> to vector<32x32xf32>
    %355 = arith.mulf %354, %335 : vector<32x32xf32>
    %cst_289 = arith.constant dense<0.000000e+00> : vector<4x32xf32>
    %356 = tpu.matmul %6, %355, %cst_289 {dimension_numbers = #tpu.dot_dimension_numbers<[1], [0], [0], [1], [0, 0, 1, 1], [], []>} : vector<4x32xf32>, vector<32x32xf32>, vector<4x32xf32> -> vector<4x32xf32>
    %357 = tpu.reciprocal %353 {approx = true} : vector<4x1xf32> -> vector<4x1xf32>
    %358 = vector.broadcast %357 : vector<4x1xf32> to vector<4x32xf32>
    %359 = arith.mulf %356, %358 : vector<4x32xf32>
    %cst_290 = arith.constant dense<0.000000e+00> : vector<32x1xf32>
    %360 = tpu.matmul %7, %353, %cst_290 {dimension_numbers = #tpu.dot_dimension_numbers<[1], [0], [0], [1], [0, 0, 1, 1], [], []>} : vector<32x4xf32>, vector<4x1xf32>, vector<32x1xf32> -> vector<32x1xf32>
    %361 = tpu.reciprocal %360 {approx = true} : vector<32x1xf32> -> vector<32x1xf32>
    %362 = arith.mulf %352, %361 : vector<32x1xf32>
    %c1_291 = arith.constant 1 : index
    %c0_292 = arith.constant 0 : index
    %c0_293 = arith.constant 0 : index
    %363 = vector.load %arg13[%c1_291, %c0_292, %c0_293] : memref<2x32x16xf32, #tpu.memory_space<vmem>>, vector<1x32x16xf32>
    %364 = vector.shape_cast %363 : vector<1x32x16xf32> to vector<32x16xf32>
    %c1_294 = arith.constant 1 : index
    %c0_295 = arith.constant 0 : index
    %c0_296 = arith.constant 0 : index
    %365 = vector.load %arg14[%c1_294, %c0_295, %c0_296] : memref<2x1x16xf32, #tpu.memory_space<vmem>>, vector<1x1x16xf32>
    %366 = vector.shape_cast %365 : vector<1x1x16xf32> to vector<1x16xf32>
    %c1_297 = arith.constant 1 : index
    %c0_298 = arith.constant 0 : index
    %c0_299 = arith.constant 0 : index
    %367 = vector.load %arg15[%c1_297, %c0_298, %c0_299] : memref<2x16x1xf32, #tpu.memory_space<vmem>>, vector<1x16x1xf32>
    %368 = vector.shape_cast %367 : vector<1x16x1xf32> to vector<16x1xf32>
    %cst_300 = arith.constant dense<0.000000e+00> : vector<4x16xf32>
    %369 = tpu.matmul %359, %364, %cst_300 {dimension_numbers = #tpu.dot_dimension_numbers<[1], [0], [0], [1], [0, 0, 1, 1], [], []>} : vector<4x32xf32>, vector<32x16xf32>, vector<4x16xf32> -> vector<4x16xf32>
    %370 = vector.broadcast %366 : vector<1x16xf32> to vector<4x16xf32>
    %371 = arith.addf %369, %370 : vector<4x16xf32>
    %372 = math.tanh %371 : vector<4x16xf32>
    %cst_301 = arith.constant dense<0.000000e+00> : vector<4x1xf32>
    %373 = tpu.matmul %372, %368, %cst_301 {dimension_numbers = #tpu.dot_dimension_numbers<[1], [0], [0], [1], [0, 0, 1, 1], [], []>} : vector<4x16xf32>, vector<16x1xf32>, vector<4x1xf32> -> vector<4x1xf32>
    %cst_302 = arith.constant dense<0xFF800000> : vector<1xf32>
    %374 = vector.multi_reduction <maximumf>, %373, %cst_302 [0] : vector<4x1xf32> to vector<1xf32>
    %375 = vector.shape_cast %374 : vector<1xf32> to vector<1x1xf32>
    %376 = vector.broadcast %375 : vector<1x1xf32> to vector<4x1xf32>
    %377 = arith.subf %373, %376 : vector<4x1xf32>
    %378 = math.exp %377 : vector<4x1xf32>
    %cst_303 = arith.constant dense<0.000000e+00> : vector<1xf32>
    %379 = vector.multi_reduction <add>, %378, %cst_303 [0] : vector<4x1xf32> to vector<1xf32>
    %380 = vector.shape_cast %379 : vector<1xf32> to vector<1x1xf32>
    %381 = tpu.reciprocal %380 {approx = true} : vector<1x1xf32> -> vector<1x1xf32>
    %382 = vector.broadcast %381 : vector<1x1xf32> to vector<4x1xf32>
    %383 = arith.mulf %378, %382 : vector<4x1xf32>
    %384 = vector.broadcast %383 : vector<4x1xf32> to vector<4x32xf32>
    %385 = arith.mulf %384, %359 : vector<4x32xf32>
    %cst_304 = arith.constant dense<0.000000e+00> : vector<32xf32>
    %386 = vector.multi_reduction <add>, %385, %cst_304 [0] : vector<4x32xf32> to vector<32xf32>
    %387 = vector.shape_cast %386 : vector<32xf32> to vector<1x32xf32>
    %c0_305 = arith.constant 0 : index
    %c0_306 = arith.constant 0 : index
    %388 = vector.load %arg16[%c0_305, %c0_306] : memref<32x3xf32, #tpu.memory_space<vmem>>, vector<32x3xf32>
    %cst_307 = arith.constant dense<0.000000e+00> : vector<1x3xf32>
    %389 = tpu.matmul %387, %388, %cst_307 {dimension_numbers = #tpu.dot_dimension_numbers<[1], [0], [0], [1], [0, 0, 1, 1], [], []>} : vector<1x32xf32>, vector<32x3xf32>, vector<1x3xf32> -> vector<1x3xf32>
    %c0_308 = arith.constant 0 : index
    %c0_309 = arith.constant 0 : index
    %390 = vector.load %arg17[%c0_308, %c0_309] : memref<1x3xf32, #tpu.memory_space<vmem>>, vector<1x3xf32>
    %391 = arith.addf %389, %390 : vector<1x3xf32>
    %c0_310 = arith.constant 0 : index
    %c0_311 = arith.constant 0 : index
    %c0_312 = arith.constant 0 : index
    %392 = vector.load %arg18[%c0_310, %c0_311, %c0_312] : memref<1x1x3xf32, #tpu.memory_space<vmem>>, vector<1x1x3xf32>
    %393 = vector.shape_cast %392 : vector<1x1x3xf32> to vector<1x3xf32>
    %394 = vector.shape_cast %391 : vector<1x3xf32> to vector<1x1x3xf32>
    tpu.vector_store %arg18[%c0_310, %c0_311, %c0_312], %394 {strides = array<i32>} : memref<1x1x3xf32, #tpu.memory_space<vmem>>, vector<1x1x3xf32>,
    %c0_313 = arith.constant 0 : index
    %c0_314 = arith.constant 0 : index
    %c0_315 = arith.constant 0 : index
    %395 = vector.load %arg19[%c0_313, %c0_314, %c0_315] : memref<1x32x1xf32, #tpu.memory_space<vmem>>, vector<1x32x1xf32>
    %396 = vector.shape_cast %395 : vector<1x32x1xf32> to vector<32x1xf32>
    %397 = vector.shape_cast %362 : vector<32x1xf32> to vector<1x32x1xf32>
    tpu.vector_store %arg19[%c0_313, %c0_314, %c0_315], %397 {strides = array<i32>} : memref<1x32x1xf32, #tpu.memory_space<vmem>>, vector<1x32x1xf32>,
    %c0_316 = arith.constant 0 : index
    %c0_317 = arith.constant 0 : index
    %c0_318 = arith.constant 0 : index
    %398 = vector.load %arg20[%c0_316, %c0_317, %c0_318] : memref<1x4x1xf32, #tpu.memory_space<vmem>>, vector<1x4x1xf32>
    %399 = vector.shape_cast %398 : vector<1x4x1xf32> to vector<4x1xf32>
    %400 = vector.shape_cast %383 : vector<4x1xf32> to vector<1x4x1xf32>
    tpu.vector_store %arg20[%c0_316, %c0_317, %c0_318], %400 {strides = array<i32>} : memref<1x4x1xf32, #tpu.memory_space<vmem>>, vector<1x4x1xf32>,
    return
  }
  func.func @transform_0(%arg0: i32) -> (i32, i32, i32) {
    %c0_i32 = arith.constant 0 : i32
    %c0_i32_0 = arith.constant 0 : i32
    %c0_i32_1 = arith.constant 0 : i32
    return %arg0, %c0_i32, %c0_i32_0 : i32, i32, i32
  }
  func.func @transform_1(%arg0: i32) -> (i32, i32, i32) {
    %c0_i32 = arith.constant 0 : i32
    %c0_i32_0 = arith.constant 0 : i32
    %c0_i32_1 = arith.constant 0 : i32
    return %arg0, %c0_i32, %c0_i32_0 : i32, i32, i32
  }
  func.func @transform_2(%arg0: i32) -> (i32, i32, i32) {
    %c0_i32 = arith.constant 0 : i32
    %c0_i32_0 = arith.constant 0 : i32
    %c0_i32_1 = arith.constant 0 : i32
    return %arg0, %c0_i32, %c0_i32_0 : i32, i32, i32
  }
  func.func @transform_3(%arg0: i32) -> (i32, i32) {
    %c0_i32 = arith.constant 0 : i32
    %c0_i32_0 = arith.constant 0 : i32
    %c0_i32_1 = arith.constant 0 : i32
    return %c0_i32, %c0_i32_0 : i32, i32
  }
  func.func @transform_4(%arg0: i32) -> (i32, i32) {
    %c0_i32 = arith.constant 0 : i32
    %c0_i32_0 = arith.constant 0 : i32
    %c0_i32_1 = arith.constant 0 : i32
    return %c0_i32, %c0_i32_0 : i32, i32
  }
  func.func @transform_5(%arg0: i32) -> (i32, i32, i32, i32, i32) {
    %c0_i32 = arith.constant 0 : i32
    %c0_i32_0 = arith.constant 0 : i32
    %c0_i32_1 = arith.constant 0 : i32
    %c0_i32_2 = arith.constant 0 : i32
    %c0_i32_3 = arith.constant 0 : i32
    %c0_i32_4 = arith.constant 0 : i32
    return %c0_i32, %c0_i32_0, %c0_i32_1, %c0_i32_2, %c0_i32_3 : i32, i32, i32, i32, i32
  }
  func.func @transform_6(%arg0: i32) -> (i32, i32, i32, i32, i32) {
    %c0_i32 = arith.constant 0 : i32
    %c0_i32_0 = arith.constant 0 : i32
    %c0_i32_1 = arith.constant 0 : i32
    %c0_i32_2 = arith.constant 0 : i32
    %c0_i32_3 = arith.constant 0 : i32
    %c0_i32_4 = arith.constant 0 : i32
    return %c0_i32, %c0_i32_0, %c0_i32_1, %c0_i32_2, %c0_i32_3 : i32, i32, i32, i32, i32
  }
  func.func @transform_7(%arg0: i32) -> (i32, i32, i32, i32) {
    %c0_i32 = arith.constant 0 : i32
    %c0_i32_0 = arith.constant 0 : i32
    %c0_i32_1 = arith.constant 0 : i32
    %c0_i32_2 = arith.constant 0 : i32
    %c0_i32_3 = arith.constant 0 : i32
    return %c0_i32, %c0_i32_0, %c0_i32_1, %c0_i32_2 : i32, i32, i32, i32
  }
  func.func @transform_8(%arg0: i32) -> (i32, i32, i32, i32) {
    %c0_i32 = arith.constant 0 : i32
    %c0_i32_0 = arith.constant 0 : i32
    %c0_i32_1 = arith.constant 0 : i32
    %c0_i32_2 = arith.constant 0 : i32
    %c0_i32_3 = arith.constant 0 : i32
    return %c0_i32, %c0_i32_0, %c0_i32_1, %c0_i32_2 : i32, i32, i32, i32
  }
  func.func @transform_9(%arg0: i32) -> (i32, i32, i32) {
    %c0_i32 = arith.constant 0 : i32
    %c0_i32_0 = arith.constant 0 : i32
    %c0_i32_1 = arith.constant 0 : i32
    %c0_i32_2 = arith.constant 0 : i32
    return %c0_i32, %c0_i32_0, %c0_i32_1 : i32, i32, i32
  }
  func.func @transform_10(%arg0: i32) -> (i32, i32, i32) {
    %c0_i32 = arith.constant 0 : i32
    %c0_i32_0 = arith.constant 0 : i32
    %c0_i32_1 = arith.constant 0 : i32
    %c0_i32_2 = arith.constant 0 : i32
    return %c0_i32, %c0_i32_0, %c0_i32_1 : i32, i32, i32
  }
  func.func @transform_11(%arg0: i32) -> (i32, i32, i32) {
    %c0_i32 = arith.constant 0 : i32
    %c0_i32_0 = arith.constant 0 : i32
    %c0_i32_1 = arith.constant 0 : i32
    %c0_i32_2 = arith.constant 0 : i32
    return %c0_i32, %c0_i32_0, %c0_i32_1 : i32, i32, i32
  }
  func.func @transform_12(%arg0: i32) -> (i32, i32, i32) {
    %c0_i32 = arith.constant 0 : i32
    %c0_i32_0 = arith.constant 0 : i32
    %c0_i32_1 = arith.constant 0 : i32
    %c0_i32_2 = arith.constant 0 : i32
    return %c0_i32, %c0_i32_0, %c0_i32_1 : i32, i32, i32
  }
  func.func @transform_13(%arg0: i32) -> (i32, i32, i32) {
    %c0_i32 = arith.constant 0 : i32
    %c0_i32_0 = arith.constant 0 : i32
    %c0_i32_1 = arith.constant 0 : i32
    %c0_i32_2 = arith.constant 0 : i32
    return %c0_i32, %c0_i32_0, %c0_i32_1 : i32, i32, i32
  }
  func.func @transform_14(%arg0: i32) -> (i32, i32, i32) {
    %c0_i32 = arith.constant 0 : i32
    %c0_i32_0 = arith.constant 0 : i32
    %c0_i32_1 = arith.constant 0 : i32
    %c0_i32_2 = arith.constant 0 : i32
    return %c0_i32, %c0_i32_0, %c0_i32_1 : i32, i32, i32
  }
  func.func @transform_15(%arg0: i32) -> (i32, i32) {
    %c0_i32 = arith.constant 0 : i32
    %c0_i32_0 = arith.constant 0 : i32
    %c0_i32_1 = arith.constant 0 : i32
    return %c0_i32, %c0_i32_0 : i32, i32
  }
  func.func @transform_16(%arg0: i32) -> (i32, i32) {
    %c0_i32 = arith.constant 0 : i32
    %c0_i32_0 = arith.constant 0 : i32
    %c0_i32_1 = arith.constant 0 : i32
    return %c0_i32, %c0_i32_0 : i32, i32
  }
  func.func @transform_17(%arg0: i32) -> (i32, i32, i32) {
    %c0_i32 = arith.constant 0 : i32
    %c0_i32_0 = arith.constant 0 : i32
    %c0_i32_1 = arith.constant 0 : i32
    return %arg0, %c0_i32, %c0_i32_0 : i32, i32, i32
  }
  func.func @transform_18(%arg0: i32) -> (i32, i32, i32) {
    %c0_i32 = arith.constant 0 : i32
    %c0_i32_0 = arith.constant 0 : i32
    %c0_i32_1 = arith.constant 0 : i32
    return %arg0, %c0_i32, %c0_i32_0 : i32, i32, i32
  }
  func.func @transform_19(%arg0: i32) -> (i32, i32, i32) {
    %c0_i32 = arith.constant 0 : i32
    %c0_i32_0 = arith.constant 0 : i32
    %c0_i32_1 = arith.constant 0 : i32
    return %arg0, %c0_i32, %c0_i32_0 : i32, i32, i32
  }
}

</mosaic_0001>

<llo_original>
// kernel: tpu_custom_call.1
$region0: #{tpu_custom_call.1}
  #allocation0 [shape = 'u32[]', space=smem, size = 0x4, offset = 0x4, fixed_abs, tag = 'smem constant byte address 0x4 - core index']
  #allocation1 [shape = 'u32[72,128]{1,0:T(1,128)}', space=vmem, size = 0x9000, scoped, tag = 'internal scratch']
  %s0 = inlined_call_operand.vmem [shape: f32[2,32,32], index: 0, kind: input, shape index: {}]
  %s1 = inlined_call_operand.vmem [shape: f32[2,32,32], index: 1, kind: input, shape index: {}]
  %s2 = inlined_call_operand.vmem [shape: f32[2,32,1], index: 2, kind: input, shape index: {}]
  %s3 = inlined_call_operand.vmem [shape: f32[4,32], index: 3, kind: input, shape index: {}]
  %s4 = inlined_call_operand.vmem [shape: f32[32,4], index: 4, kind: input, shape index: {}]
  %s5 = inlined_call_operand.vmem [shape: f32[2,3,2,32,16], index: 5, kind: input, shape index: {}]
  %s6 = inlined_call_operand.vmem [shape: f32[2,3,2,1,16], index: 6, kind: input, shape index: {}]
  %s7 = inlined_call_operand.vmem [shape: f32[2,2,16,32], index: 7, kind: input, shape index: {}]
  %s8 = inlined_call_operand.vmem [shape: f32[2,6,1,32], index: 8, kind: input, shape index: {}]
  %s9 = inlined_call_operand.vmem [shape: f32[2,32,64], index: 9, kind: input, shape index: {}]
  %s10 = inlined_call_operand.vmem [shape: f32[2,1,64], index: 10, kind: input, shape index: {}]
  %s11 = inlined_call_operand.vmem [shape: f32[2,64,32], index: 11, kind: input, shape index: {}]
  %s12 = inlined_call_operand.vmem [shape: f32[2,32,16], index: 12, kind: input, shape index: {}]
  %s13 = inlined_call_operand.vmem [shape: f32[2,1,16], index: 13, kind: input, shape index: {}]
  %s14 = inlined_call_operand.vmem [shape: f32[2,16,1], index: 14, kind: input, shape index: {}]
  %s15 = inlined_call_operand.vmem [shape: f32[32,3], index: 15, kind: input, shape index: {}]
  %s16 = inlined_call_operand.vmem [shape: f32[1,3], index: 16, kind: input, shape index: {}]
  %s17 = inlined_call_operand.hbm [shape: f32[2,1,3], index: 17, kind: output, shape index: {0}]
  %s18 = inlined_call_operand.vmem [shape: f32[2,32,1], index: 18, kind: output, shape index: {1}]
  %s19 = inlined_call_operand.vmem [shape: f32[2,4,1], index: 19, kind: output, shape index: {2}]
  %20 = xla_tuple %s17, %s18, %s19
  %s21 = sld [smem:[#allocation0]]
  $region117: #{tpu_custom_call.1} parent=0
    _
  %s23 = ssub.s32 1, %s21
  %s24 = scalar_select 0, %s23, %s21
  $region1: #{tpu_custom_call.1} parent=0
    #allocation2 [shape = 'u8[1024]{0}', space=vmem, size = 0x400, scoped, tag = 'output window, operand 0']
    #allocation3 [shape = 's32[2]{0}', space=sflag, size = 0x8, scoped, tag = 'scoped memory for tpu_custom_call.1']
    %25 = vsyncpa [#allocation3], 0
    %s26 = scalar_lea.sflag [#allocation3], 1
    %27 = vsyncpa %s26, 0
    loop: start=0, step=1, limit=4
    $region2: #{tpu_custom_call.1} parent=1 // loop_pre_header
      _
    $region3: #{tpu_custom_call.1} parent=1 // loop_header
      %s29 = sphi 0, %s33
      %p30 = scmp.ge.s32.totalorder %s29, 4
      %s39 = sphi 0, %s41
      %s42 = sphi 0, %s39
      %s43 = sphi 0, %s42
      %s59 = sphi 0, %s43
      %s65 = sphi 0, %s67
      %s68 = sphi 0, %s65
      %s69 = sphi 0, %s68
      %s85 = sphi 0, %s69
      %s91 = sphi 0, %s93
      %s94 = sphi 0, %s91
      %s95 = sphi 0, %s94
      %s111 = sphi 0, %s95
      %s115 = sphi 0, %s115
      %s117 = sphi 0, %s115
      %s118 = sphi 0, %s117
      %s132 = sphi 0, %s118
      %s136 = sphi 0, %s136
      %s138 = sphi 0, %s136
      %s139 = sphi 0, %s138
      %s153 = sphi 0, %s139
      %s157 = sphi 0, %s157
      %s159 = sphi 0, %s157
      %s160 = sphi 0, %s159
      %s174 = sphi 0, %s160
      %s178 = sphi 0, %s178
      %s180 = sphi 0, %s178
      %s181 = sphi 0, %s180
      %s195 = sphi 0, %s181
      %s199 = sphi 0, %s199
      %s201 = sphi 0, %s199
      %s202 = sphi 0, %s201
      %s216 = sphi 0, %s202
      %s220 = sphi 0, %s220
      %s222 = sphi 0, %s220
      %s223 = sphi 0, %s222
      %s237 = sphi 0, %s223
      %s241 = sphi 0, %s241
      %s243 = sphi 0, %s241
      %s244 = sphi 0, %s243
      %s258 = sphi 0, %s244
      %s262 = sphi 0, %s262
      %s264 = sphi 0, %s262
      %s265 = sphi 0, %s264
      %s279 = sphi 0, %s265
      %s283 = sphi 0, %s283
      %s285 = sphi 0, %s283
      %s286 = sphi 0, %s285
      %s300 = sphi 0, %s286
      %s304 = sphi 0, %s304
      %s306 = sphi 0, %s304
      %s307 = sphi 0, %s306
      %s321 = sphi 0, %s307
      %s325 = sphi 0, %s325
      %s327 = sphi 0, %s325
      %s328 = sphi 0, %s327
      %s342 = sphi 0, %s328
      %s346 = sphi 0, %s346
      %s348 = sphi 0, %s346
      %s349 = sphi 0, %s348
      %s363 = sphi 0, %s349
      %s367 = sphi 0, %s367
      %s369 = sphi 0, %s367
      %s370 = sphi 0, %s369
      %s384 = sphi 0, %s370
      %s388 = sphi 0, %s388
      %s390 = sphi 0, %s388
      %s391 = sphi 0, %s390
      %s405 = sphi 0, %s391
      %s411 = sphi 0, %s413
      %s414 = sphi 0, %s411
      %s415 = sphi 0, %s414
      %s431 = sphi 0, %s415
      %s437 = sphi 0, %s439
      %s440 = sphi 0, %s437
      %s441 = sphi 0, %s440
      %s457 = sphi 0, %s441
      %s463 = sphi 0, %s465
      %s466 = sphi 0, %s463
      %s467 = sphi 0, %s466
      %s483 = sphi 0, %s467
    $region4: #{tpu_custom_call.1} parent=1 // loop_header_branch
      %32 = sbr.rel (%p30) target = $region8
    $region5: #{tpu_custom_call.1} parent=1 // loop_body
      %s34 = ssub.s32 %s29, 1
      %s35 = ssub.s32 %s29, 2
      %s36 = sadd.s32 %s29, 1
      %s37 = ssub.s32 %s29, %s36
      %p38 = scmp.eq.s32.totalorder %s37, 0
      %s40 = sadd.s32 %s39, 1
      %s41 = scalar_select %p38, %s39, %s40
      %p44 = pneg %p38
      %p45 = scmp.eq.s32.totalorder %s29, 1
      %p46 = por %p44, %p45
      %p47 = scmp.ne.s32.totalorder %s39, %s42
      %p48 = scmp.eq.s32.totalorder %s29, 0
      %p49 = por %p47, %p48
      %p50 = scmp.ne.s32.totalorder %s39, %s42
      %p51 = scmp.eq.s32.totalorder %s34, 1
      %p52 = por %p50, %p51
      %p53 = scmp.ne.s32.totalorder %s42, %s43
      %p54 = scmp.eq.s32.totalorder %s34, 0
      %p55 = por %p53, %p54
      %p56 = scmp.ne.s32.totalorder %s42, %s43
      %p57 = scmp.eq.s32.totalorder %s35, 1
      %p58 = por %p56, %p57
      %p60 = scmp.ne.s32.totalorder %s43, %s59
      %p61 = scmp.eq.s32.totalorder %s35, 0
      %p62 = por %p60, %p61
      %s63 = ssub.s32 %s29, %s36
      %p64 = scmp.eq.s32.totalorder %s63, 0
      %s66 = sadd.s32 %s65, 1
      %s67 = scalar_select %p64, %s65, %s66
      %p70 = pneg %p64
      %p71 = scmp.eq.s32.totalorder %s29, 1
      %p72 = por %p70, %p71
      %p73 = scmp.ne.s32.totalorder %s65, %s68
      %p74 = scmp.eq.s32.totalorder %s29, 0
      %p75 = por %p73, %p74
      %p76 = scmp.ne.s32.totalorder %s65, %s68
      %p77 = scmp.eq.s32.totalorder %s34, 1
      %p78 = por %p76, %p77
      %p79 = scmp.ne.s32.totalorder %s68, %s69
      %p80 = scmp.eq.s32.totalorder %s34, 0
      %p81 = por %p79, %p80
      %p82 = scmp.ne.s32.totalorder %s68, %s69
      %p83 = scmp.eq.s32.totalorder %s35, 1
      %p84 = por %p82, %p83
      %p86 = scmp.ne.s32.totalorder %s69, %s85
      %p87 = scmp.eq.s32.totalorder %s35, 0
      %p88 = por %p86, %p87
      %s89 = ssub.s32 %s29, %s36
      %p90 = scmp.eq.s32.totalorder %s89, 0
      %s92 = sadd.s32 %s91, 1
      %s93 = scalar_select %p90, %s91, %s92
      %p96 = pneg %p90
      %p97 = scmp.eq.s32.totalorder %s29, 1
      %p98 = por %p96, %p97
      %p99 = scmp.ne.s32.totalorder %s91, %s94
      %p100 = scmp.eq.s32.totalorder %s29, 0
      %p101 = por %p99, %p100
      %p102 = scmp.ne.s32.totalorder %s91, %s94
      %p103 = scmp.eq.s32.totalorder %s34, 1
      %p104 = por %p102, %p103
      %p105 = scmp.ne.s32.totalorder %s94, %s95
      %p106 = scmp.eq.s32.totalorder %s34, 0
      %p107 = por %p105, %p106
      %p108 = scmp.ne.s32.totalorder %s94, %s95
      %p109 = scmp.eq.s32.totalorder %s35, 1
      %p110 = por %p108, %p109
      %p112 = scmp.ne.s32.totalorder %s95, %s111
      %p113 = scmp.eq.s32.totalorder %s35, 0
      %p114 = por %p112, %p113
      %s116 = sadd.s32 %s115, 1
      %p119 = scmp.eq.s32.totalorder %s29, 1
      %p120 = scmp.ne.s32.totalorder %s115, %s117
      %p121 = scmp.eq.s32.totalorder %s29, 0
      %p122 = por %p120, %p121
      %p123 = scmp.ne.s32.totalorder %s115, %s117
      %p124 = scmp.eq.s32.totalorder %s34, 1
      %p125 = por %p123, %p124
      %p126 = scmp.ne.s32.totalorder %s117, %s118
      %p127 = scmp.eq.s32.totalorder %s34, 0
      %p128 = por %p126, %p127
      %p129 = scmp.ne.s32.totalorder %s117, %s118
      %p130 = scmp.eq.s32.totalorder %s35, 1
      %p131 = por %p129, %p130
      %p133 = scmp.ne.s32.totalorder %s118, %s132
      %p134 = scmp.eq.s32.totalorder %s35, 0
      %p135 = por %p133, %p134
      %s137 = sadd.s32 %s136, 1
      %p140 = scmp.eq.s32.totalorder %s29, 1
      %p141 = scmp.ne.s32.totalorder %s136, %s138
      %p142 = scmp.eq.s32.totalorder %s29, 0
      %p143 = por %p141, %p142
      %p144 = scmp.ne.s32.totalorder %s136, %s138
      %p145 = scmp.eq.s32.totalorder %s34, 1
      %p146 = por %p144, %p145
      %p147 = scmp.ne.s32.totalorder %s138, %s139
      %p148 = scmp.eq.s32.totalorder %s34, 0
      %p149 = por %p147, %p148
      %p150 = scmp.ne.s32.totalorder %s138, %s139
      %p151 = scmp.eq.s32.totalorder %s35, 1
      %p152 = por %p150, %p151
      %p154 = scmp.ne.s32.totalorder %s139, %s153
      %p155 = scmp.eq.s32.totalorder %s35, 0
      %p156 = por %p154, %p155
      %s158 = sadd.s32 %s157, 1
      %p161 = scmp.eq.s32.totalorder %s29, 1
      %p162 = scmp.ne.s32.totalorder %s157, %s159
      %p163 = scmp.eq.s32.totalorder %s29, 0
      %p164 = por %p162, %p163
      %p165 = scmp.ne.s32.totalorder %s157, %s159
      %p166 = scmp.eq.s32.totalorder %s34, 1
      %p167 = por %p165, %p166
      %p168 = scmp.ne.s32.totalorder %s159, %s160
      %p169 = scmp.eq.s32.totalorder %s34, 0
      %p170 = por %p168, %p169
      %p171 = scmp.ne.s32.totalorder %s159, %s160
      %p172 = scmp.eq.s32.totalorder %s35, 1
      %p173 = por %p171, %p172
      %p175 = scmp.ne.s32.totalorder %s160, %s174
      %p176 = scmp.eq.s32.totalorder %s35, 0
      %p177 = por %p175, %p176
      %s179 = sadd.s32 %s178, 1
      %p182 = scmp.eq.s32.totalorder %s29, 1
      %p183 = scmp.ne.s32.totalorder %s178, %s180
      %p184 = scmp.eq.s32.totalorder %s29, 0
      %p185 = por %p183, %p184
      %p186 = scmp.ne.s32.totalorder %s178, %s180
      %p187 = scmp.eq.s32.totalorder %s34, 1
      %p188 = por %p186, %p187
      %p189 = scmp.ne.s32.totalorder %s180, %s181
      %p190 = scmp.eq.s32.totalorder %s34, 0
      %p191 = por %p189, %p190
      %p192 = scmp.ne.s32.totalorder %s180, %s181
      %p193 = scmp.eq.s32.totalorder %s35, 1
      %p194 = por %p192, %p193
      %p196 = scmp.ne.s32.totalorder %s181, %s195
      %p197 = scmp.eq.s32.totalorder %s35, 0
      %p198 = por %p196, %p197
      %s200 = sadd.s32 %s199, 1
      %p203 = scmp.eq.s32.totalorder %s29, 1
      %p204 = scmp.ne.s32.totalorder %s199, %s201
      %p205 = scmp.eq.s32.totalorder %s29, 0
      %p206 = por %p204, %p205
      %p207 = scmp.ne.s32.totalorder %s199, %s201
      %p208 = scmp.eq.s32.totalorder %s34, 1
      %p209 = por %p207, %p208
      %p210 = scmp.ne.s32.totalorder %s201, %s202
      %p211 = scmp.eq.s32.totalorder %s34, 0
      %p212 = por %p210, %p211
      %p213 = scmp.ne.s32.totalorder %s201, %s202
      %p214 = scmp.eq.s32.totalorder %s35, 1
      %p215 = por %p213, %p214
      %p217 = scmp.ne.s32.totalorder %s202, %s216
      %p218 = scmp.eq.s32.totalorder %s35, 0
      %p219 = por %p217, %p218
      %s221 = sadd.s32 %s220, 1
      %p224 = scmp.eq.s32.totalorder %s29, 1
      %p225 = scmp.ne.s32.totalorder %s220, %s222
      %p226 = scmp.eq.s32.totalorder %s29, 0
      %p227 = por %p225, %p226
      %p228 = scmp.ne.s32.totalorder %s220, %s222
      %p229 = scmp.eq.s32.totalorder %s34, 1
      %p230 = por %p228, %p229
      %p231 = scmp.ne.s32.totalorder %s222, %s223
      %p232 = scmp.eq.s32.totalorder %s34, 0
      %p233 = por %p231, %p232
      %p234 = scmp.ne.s32.totalorder %s222, %s223
      %p235 = scmp.eq.s32.totalorder %s35, 1
      %p236 = por %p234, %p235
      %p238 = scmp.ne.s32.totalorder %s223, %s237
      %p239 = scmp.eq.s32.totalorder %s35, 0
      %p240 = por %p238, %p239
      %s242 = sadd.s32 %s241, 1
      %p245 = scmp.eq.s32.totalorder %s29, 1
      %p246 = scmp.ne.s32.totalorder %s241, %s243
      %p247 = scmp.eq.s32.totalorder %s29, 0
      %p248 = por %p246, %p247
      %p249 = scmp.ne.s32.totalorder %s241, %s243
      %p250 = scmp.eq.s32.totalorder %s34, 1
      %p251 = por %p249, %p250
      %p252 = scmp.ne.s32.totalorder %s243, %s244
      %p253 = scmp.eq.s32.totalorder %s34, 0
      %p254 = por %p252, %p253
      %p255 = scmp.ne.s32.totalorder %s243, %s244
      %p256 = scmp.eq.s32.totalorder %s35, 1
      %p257 = por %p255, %p256
      %p259 = scmp.ne.s32.totalorder %s244, %s258
      %p260 = scmp.eq.s32.totalorder %s35, 0
      %p261 = por %p259, %p260
      %s263 = sadd.s32 %s262, 1
      %p266 = scmp.eq.s32.totalorder %s29, 1
      %p267 = scmp.ne.s32.totalorder %s262, %s264
      %p268 = scmp.eq.s32.totalorder %s29, 0
      %p269 = por %p267, %p268
      %p270 = scmp.ne.s32.totalorder %s262, %s264
      %p271 = scmp.eq.s32.totalorder %s34, 1
      %p272 = por %p270, %p271
      %p273 = scmp.ne.s32.totalorder %s264, %s265
      %p274 = scmp.eq.s32.totalorder %s34, 0
      %p275 = por %p273, %p274
      %p276 = scmp.ne.s32.totalorder %s264, %s265
      %p277 = scmp.eq.s32.totalorder %s35, 1
      %p278 = por %p276, %p277
      %p280 = scmp.ne.s32.totalorder %s265, %s279
      %p281 = scmp.eq.s32.totalorder %s35, 0
      %p282 = por %p280, %p281
      %s284 = sadd.s32 %s283, 1
      %p287 = scmp.eq.s32.totalorder %s29, 1
      %p288 = scmp.ne.s32.totalorder %s283, %s285
      %p289 = scmp.eq.s32.totalorder %s29, 0
      %p290 = por %p288, %p289
      %p291 = scmp.ne.s32.totalorder %s283, %s285
      %p292 = scmp.eq.s32.totalorder %s34, 1
      %p293 = por %p291, %p292
      %p294 = scmp.ne.s32.totalorder %s285, %s286
      %p295 = scmp.eq.s32.totalorder %s34, 0
      %p296 = por %p294, %p295
      %p297 = scmp.ne.s32.totalorder %s285, %s286
      %p298 = scmp.eq.s32.totalorder %s35, 1
      %p299 = por %p297, %p298
      %p301 = scmp.ne.s32.totalorder %s286, %s300
      %p302 = scmp.eq.s32.totalorder %s35, 0
      %p303 = por %p301, %p302
      %s305 = sadd.s32 %s304, 1
      %p308 = scmp.eq.s32.totalorder %s29, 1
      %p309 = scmp.ne.s32.totalorder %s304, %s306
      %p310 = scmp.eq.s32.totalorder %s29, 0
      %p311 = por %p309, %p310
      %p312 = scmp.ne.s32.totalorder %s304, %s306
      %p313 = scmp.eq.s32.totalorder %s34, 1
      %p314 = por %p312, %p313
      %p315 = scmp.ne.s32.totalorder %s306, %s307
      %p316 = scmp.eq.s32.totalorder %s34, 0
      %p317 = por %p315, %p316
      %p318 = scmp.ne.s32.totalorder %s306, %s307
      %p319 = scmp.eq.s32.totalorder %s35, 1
      %p320 = por %p318, %p319
      %p322 = scmp.ne.s32.totalorder %s307, %s321
      %p323 = scmp.eq.s32.totalorder %s35, 0
      %p324 = por %p322, %p323
      %s326 = sadd.s32 %s325, 1
      %p329 = scmp.eq.s32.totalorder %s29, 1
      %p330 = scmp.ne.s32.totalorder %s325, %s327
      %p331 = scmp.eq.s32.totalorder %s29, 0
      %p332 = por %p330, %p331
      %p333 = scmp.ne.s32.totalorder %s325, %s327
      %p334 = scmp.eq.s32.totalorder %s34, 1
      %p335 = por %p333, %p334
      %p336 = scmp.ne.s32.totalorder %s327, %s328
      %p337 = scmp.eq.s32.totalorder %s34, 0
      %p338 = por %p336, %p337
      %p339 = scmp.ne.s32.totalorder %s327, %s328
      %p340 = scmp.eq.s32.totalorder %s35, 1
      %p341 = por %p339, %p340
      %p343 = scmp.ne.s32.totalorder %s328, %s342
      %p344 = scmp.eq.s32.totalorder %s35, 0
      %p345 = por %p343, %p344
      %s347 = sadd.s32 %s346, 1
      %p350 = scmp.eq.s32.totalorder %s29, 1
      %p351 = scmp.ne.s32.totalorder %s346, %s348
      %p352 = scmp.eq.s32.totalorder %s29, 0
      %p353 = por %p351, %p352
      %p354 = scmp.ne.s32.totalorder %s346, %s348
      %p355 = scmp.eq.s32.totalorder %s34, 1
      %p356 = por %p354, %p355
      %p357 = scmp.ne.s32.totalorder %s348, %s349
      %p358 = scmp.eq.s32.totalorder %s34, 0
      %p359 = por %p357, %p358
      %p360 = scmp.ne.s32.totalorder %s348, %s349
      %p361 = scmp.eq.s32.totalorder %s35, 1
      %p362 = por %p360, %p361
      %p364 = scmp.ne.s32.totalorder %s349, %s363
      %p365 = scmp.eq.s32.totalorder %s35, 0
      %p366 = por %p364, %p365
      %s368 = sadd.s32 %s367, 1
      %p371 = scmp.eq.s32.totalorder %s29, 1
      %p372 = scmp.ne.s32.totalorder %s367, %s369
      %p373 = scmp.eq.s32.totalorder %s29, 0
      %p374 = por %p372, %p373
      %p375 = scmp.ne.s32.totalorder %s367, %s369
      %p376 = scmp.eq.s32.totalorder %s34, 1
      %p377 = por %p375, %p376
      %p378 = scmp.ne.s32.totalorder %s369, %s370
      %p379 = scmp.eq.s32.totalorder %s34, 0
      %p380 = por %p378, %p379
      %p381 = scmp.ne.s32.totalorder %s369, %s370
      %p382 = scmp.eq.s32.totalorder %s35, 1
      %p383 = por %p381, %p382
      %p385 = scmp.ne.s32.totalorder %s370, %s384
      %p386 = scmp.eq.s32.totalorder %s35, 0
      %p387 = por %p385, %p386
      %s389 = sadd.s32 %s388, 1
      %p392 = scmp.eq.s32.totalorder %s29, 1
      %p393 = scmp.ne.s32.totalorder %s388, %s390
      %p394 = scmp.eq.s32.totalorder %s29, 0
      %p395 = por %p393, %p394
      %p396 = scmp.ne.s32.totalorder %s388, %s390
      %p397 = scmp.eq.s32.totalorder %s34, 1
      %p398 = por %p396, %p397
      %p399 = scmp.ne.s32.totalorder %s390, %s391
      %p400 = scmp.eq.s32.totalorder %s34, 0
      %p401 = por %p399, %p400
      %p402 = scmp.ne.s32.totalorder %s390, %s391
      %p403 = scmp.eq.s32.totalorder %s35, 1
      %p404 = por %p402, %p403
      %p406 = scmp.ne.s32.totalorder %s391, %s405
      %p407 = scmp.eq.s32.totalorder %s35, 0
      %p408 = por %p406, %p407
      %s409 = ssub.s32 %s29, %s36
      %p410 = scmp.eq.s32.totalorder %s409, 0
      %s412 = sadd.s32 %s411, 1
      %s413 = scalar_select %p410, %s411, %s412
      %p416 = pneg %p410
      %p417 = scmp.eq.s32.totalorder %s29, 1
      %p418 = por %p416, %p417
      %p419 = scmp.ne.s32.totalorder %s411, %s414
      %p420 = scmp.eq.s32.totalorder %s29, 0
      %p421 = por %p419, %p420
      %p422 = scmp.ne.s32.totalorder %s411, %s414
      %p423 = scmp.eq.s32.totalorder %s34, 1
      %p424 = por %p422, %p423
      %p425 = scmp.ne.s32.totalorder %s414, %s415
      %p426 = scmp.eq.s32.totalorder %s34, 0
      %p427 = por %p425, %p426
      %p428 = scmp.ne.s32.totalorder %s414, %s415
      %p429 = scmp.eq.s32.totalorder %s35, 1
      %p430 = por %p428, %p429
      %p432 = scmp.ne.s32.totalorder %s415, %s431
      %p433 = scmp.eq.s32.totalorder %s35, 0
      %p434 = por %p432, %p433
      %s435 = ssub.s32 %s29, %s36
      %p436 = scmp.eq.s32.totalorder %s435, 0
      %s438 = sadd.s32 %s437, 1
      %s439 = scalar_select %p436, %s437, %s438
      %p442 = pneg %p436
      %p443 = scmp.eq.s32.totalorder %s29, 1
      %p444 = por %p442, %p443
      %p445 = scmp.ne.s32.totalorder %s437, %s440
      %p446 = scmp.eq.s32.totalorder %s29, 0
      %p447 = por %p445, %p446
      %p448 = scmp.ne.s32.totalorder %s437, %s440
      %p449 = scmp.eq.s32.totalorder %s34, 1
      %p450 = por %p448, %p449
      %p451 = scmp.ne.s32.totalorder %s440, %s441
      %p452 = scmp.eq.s32.totalorder %s34, 0
      %p453 = por %p451, %p452
      %p454 = scmp.ne.s32.totalorder %s440, %s441
      %p455 = scmp.eq.s32.totalorder %s35, 1
      %p456 = por %p454, %p455
      %p458 = scmp.ne.s32.totalorder %s441, %s457
      %p459 = scmp.eq.s32.totalorder %s35, 0
      %p460 = por %p458, %p459
      %s461 = ssub.s32 %s29, %s36
      %p462 = scmp.eq.s32.totalorder %s461, 0
      %s464 = sadd.s32 %s463, 1
      %s465 = scalar_select %p462, %s463, %s464
      %p468 = pneg %p462
      %p469 = scmp.eq.s32.totalorder %s29, 1
      %p470 = por %p468, %p469
      %p471 = scmp.ne.s32.totalorder %s463, %s466
      %p472 = scmp.eq.s32.totalorder %s29, 0
      %p473 = por %p471, %p472
      %p474 = scmp.ne.s32.totalorder %s463, %s466
      %p475 = scmp.eq.s32.totalorder %s34, 1
      %p476 = por %p474, %p475
      %p477 = scmp.ne.s32.totalorder %s466, %s467
      %p478 = scmp.eq.s32.totalorder %s34, 0
      %p479 = por %p477, %p478
      %p480 = scmp.ne.s32.totalorder %s466, %s467
      %p481 = scmp.eq.s32.totalorder %s35, 1
      %p482 = por %p480, %p481
      %p484 = scmp.ne.s32.totalorder %s467, %s483
      %p485 = scmp.eq.s32.totalorder %s35, 0
      %p486 = por %p484, %p485
      %p487 = scmp.le.s32.totalorder 1, %s29
      %p488 = scmp.lt.s32.totalorder %s29, 3
      %p489 = pnand %p487, %p488
      %p490 = pneg %p489
      // Predicated region
      $region9: #{tpu_custom_call.1} parent=5 // pred_check
        _
      $region10: #{tpu_custom_call.1} parent=5 // pred_check_branch
        %492 = sbr.rel (%p489) target = $region12
      $region11: #{tpu_custom_call.1} parent=5 // pred_region
        %s493 = ssub.s32 %s29, 1
        // Predicated region
        $region13: #{tpu_custom_call.1} parent=11 // pred_check
          %p494 = pneg %p128
        $region14: #{tpu_custom_call.1} parent=11 // pred_check_branch
          %496 = sbr.rel (%p494) target = $region16
        $region15: #{tpu_custom_call.1} parent=11 // pred_region
          _
        $region16: #{tpu_custom_call.1} parent=11 // pred_fallthru
          _
        // Predicated region
        $region17: #{tpu_custom_call.1} parent=11 // pred_check
          %p497 = pneg %p149
        $region18: #{tpu_custom_call.1} parent=11 // pred_check_branch
          %499 = sbr.rel (%p497) target = $region20
        $region19: #{tpu_custom_call.1} parent=11 // pred_region
          _
        $region20: #{tpu_custom_call.1} parent=11 // pred_fallthru
          _
        // Predicated region
        $region21: #{tpu_custom_call.1} parent=11 // pred_check
          %p500 = pneg %p170
        $region22: #{tpu_custom_call.1} parent=11 // pred_check_branch
          %502 = sbr.rel (%p500) target = $region24
        $region23: #{tpu_custom_call.1} parent=11 // pred_region
          _
        $region24: #{tpu_custom_call.1} parent=11 // pred_fallthru
          _
        // Predicated region
        $region25: #{tpu_custom_call.1} parent=11 // pred_check
          %p503 = pneg %p191
        $region26: #{tpu_custom_call.1} parent=11 // pred_check_branch
          %505 = sbr.rel (%p503) target = $region28
        $region27: #{tpu_custom_call.1} parent=11 // pred_region
          _
        $region28: #{tpu_custom_call.1} parent=11 // pred_fallthru
          _
        // Predicated region
        $region29: #{tpu_custom_call.1} parent=11 // pred_check
          %p506 = pneg %p212
        $region30: #{tpu_custom_call.1} parent=11 // pred_check_branch
          %508 = sbr.rel (%p506) target = $region32
        $region31: #{tpu_custom_call.1} parent=11 // pred_region
          _
        $region32: #{tpu_custom_call.1} parent=11 // pred_fallthru
          _
        // Predicated region
        $region33: #{tpu_custom_call.1} parent=11 // pred_check
          %p509 = pneg %p233
        $region34: #{tpu_custom_call.1} parent=11 // pred_check_branch
          %511 = sbr.rel (%p509) target = $region36
        $region35: #{tpu_custom_call.1} parent=11 // pred_region
          _
        $region36: #{tpu_custom_call.1} parent=11 // pred_fallthru
          _
        // Predicated region
        $region37: #{tpu_custom_call.1} parent=11 // pred_check
          %p512 = pneg %p254
        $region38: #{tpu_custom_call.1} parent=11 // pred_check_branch
          %514 = sbr.rel (%p512) target = $region40
        $region39: #{tpu_custom_call.1} parent=11 // pred_region
          _
        $region40: #{tpu_custom_call.1} parent=11 // pred_fallthru
          _
        // Predicated region
        $region41: #{tpu_custom_call.1} parent=11 // pred_check
          %p515 = pneg %p275
        $region42: #{tpu_custom_call.1} parent=11 // pred_check_branch
          %517 = sbr.rel (%p515) target = $region44
        $region43: #{tpu_custom_call.1} parent=11 // pred_region
          _
        $region44: #{tpu_custom_call.1} parent=11 // pred_fallthru
          _
        // Predicated region
        $region45: #{tpu_custom_call.1} parent=11 // pred_check
          %p518 = pneg %p296
        $region46: #{tpu_custom_call.1} parent=11 // pred_check_branch
          %520 = sbr.rel (%p518) target = $region48
        $region47: #{tpu_custom_call.1} parent=11 // pred_region
          _
        $region48: #{tpu_custom_call.1} parent=11 // pred_fallthru
          _
        // Predicated region
        $region49: #{tpu_custom_call.1} parent=11 // pred_check
          %p521 = pneg %p317
        $region50: #{tpu_custom_call.1} parent=11 // pred_check_branch
          %523 = sbr.rel (%p521) target = $region52
        $region51: #{tpu_custom_call.1} parent=11 // pred_region
          _
        $region52: #{tpu_custom_call.1} parent=11 // pred_fallthru
          _
        // Predicated region
        $region53: #{tpu_custom_call.1} parent=11 // pred_check
          %p524 = pneg %p338
        $region54: #{tpu_custom_call.1} parent=11 // pred_check_branch
          %526 = sbr.rel (%p524) target = $region56
        $region55: #{tpu_custom_call.1} parent=11 // pred_region
          _
        $region56: #{tpu_custom_call.1} parent=11 // pred_fallthru
          _
        // Predicated region
        $region57: #{tpu_custom_call.1} parent=11 // pred_check
          %p527 = pneg %p359
        $region58: #{tpu_custom_call.1} parent=11 // pred_check_branch
          %529 = sbr.rel (%p527) target = $region60
        $region59: #{tpu_custom_call.1} parent=11 // pred_region
          _
        $region60: #{tpu_custom_call.1} parent=11 // pred_fallthru
          _
        // Predicated region
        $region61: #{tpu_custom_call.1} parent=11 // pred_check
          %p530 = pneg %p380
        $region62: #{tpu_custom_call.1} parent=11 // pred_check_branch
          %532 = sbr.rel (%p530) target = $region64
        $region63: #{tpu_custom_call.1} parent=11 // pred_region
          _
        $region64: #{tpu_custom_call.1} parent=11 // pred_fallthru
          _
        // Predicated region
        $region65: #{tpu_custom_call.1} parent=11 // pred_check
          %p533 = pneg %p401
        $region66: #{tpu_custom_call.1} parent=11 // pred_check_branch
          %535 = sbr.rel (%p533) target = $region68
        $region67: #{tpu_custom_call.1} parent=11 // pred_region
          _
        $region68: #{tpu_custom_call.1} parent=11 // pred_fallthru
          _
      $region12: #{tpu_custom_call.1} parent=5 // pred_fallthru
        _
      %p536 = scmp.lt.s32.totalorder %s29, 2
      // Predicated region
      $region69: #{tpu_custom_call.1} parent=5 // pred_check
        %p537 = pneg %p536
      $region70: #{tpu_custom_call.1} parent=5 // pred_check_branch
        %539 = sbr.rel (%p537) target = $region72
      $region71: #{tpu_custom_call.1} parent=5 // pred_region
        // Predicated region
        $region73: #{tpu_custom_call.1} parent=71 // pred_check
          %p540 = pneg %p49
        $region74: #{tpu_custom_call.1} parent=71 // pred_check_branch
          %542 = sbr.rel (%p540) target = $region76
        $region75: #{tpu_custom_call.1} parent=71 // pred_region
          %p543 = scmp.lt.s32.totalorder %s29, 1
          %s544 = scalar_select %p543, %s29, 1
          %s545 = smul.addr %s544, 4
          %s546 = smul.addr %s545, 8
          %s547 = scalar_lea.vmem %s0, %s546
        $region76: #{tpu_custom_call.1} parent=71 // pred_fallthru
          _
        // Predicated region
        $region77: #{tpu_custom_call.1} parent=71 // pred_check
          %p548 = pneg %p75
        $region78: #{tpu_custom_call.1} parent=71 // pred_check_branch
          %550 = sbr.rel (%p548) target = $region80
        $region79: #{tpu_custom_call.1} parent=71 // pred_region
          %p551 = scmp.lt.s32.totalorder %s29, 1
          %s552 = scalar_select %p551, %s29, 1
          %s553 = smul.addr %s552, 4
          %s554 = smul.addr %s553, 8
          %s555 = scalar_lea.vmem %s1, %s554
        $region80: #{tpu_custom_call.1} parent=71 // pred_fallthru
          _
        // Predicated region
        $region81: #{tpu_custom_call.1} parent=71 // pred_check
          %p556 = pneg %p101
        $region82: #{tpu_custom_call.1} parent=71 // pred_check_branch
          %558 = sbr.rel (%p556) target = $region84
        $region83: #{tpu_custom_call.1} parent=71 // pred_region
          %p559 = scmp.lt.s32.totalorder %s29, 1
          %s560 = scalar_select %p559, %s29, 1
          %s561 = smul.addr %s560, 4
          %s562 = smul.addr %s561, 8
          %s563 = scalar_lea.vmem %s2, %s562
        $region84: #{tpu_custom_call.1} parent=71 // pred_fallthru
          _
      $region72: #{tpu_custom_call.1} parent=5 // pred_fallthru
        _
      %p564 = scmp.le.s32.totalorder 1, %s29
      %p565 = scmp.lt.s32.totalorder %s29, 3
      %p566 = pnand %p564, %p565
      %p567 = pneg %p566
      // Predicated region
      $region85: #{tpu_custom_call.1} parent=5 // pred_check
        _
      $region86: #{tpu_custom_call.1} parent=5 // pred_check_branch
        %569 = sbr.rel (%p566) target = $region88
      $region87: #{tpu_custom_call.1} parent=5 // pred_region
        %s570 = ssub.s32 %s29, 1
        %p571 = scmp.lt.s32.totalorder %s34, 1
        %s572 = scalar_select %p571, %s34, 1
        %s573 = smul.addr %s572, 4
        %s574 = smul.addr %s573, 8
        %s575 = scalar_lea.vmem %s0, %s574
        %p576 = pneg %p55
        %p577 = pneg %p52
        %p578 = scmp.lt.s32.totalorder %s34, 1
        %s579 = scalar_select %p578, %s34, 1
        %s580 = smul.addr %s579, 4
        %s581 = smul.addr %s580, 8
        %s582 = scalar_lea.vmem %s1, %s581
        %p583 = pneg %p81
        %p584 = pneg %p78
        %p585 = scmp.lt.s32.totalorder %s34, 1
        %s586 = scalar_select %p585, %s34, 1
        %s587 = smul.addr %s586, 4
        %s588 = smul.addr %s587, 8
        %s589 = scalar_lea.vmem %s2, %s588
        %p590 = pneg %p107
        %p591 = pneg %p104
        %p592 = pneg %p128
        %p593 = pneg %p125
        %p594 = pneg %p149
        %p595 = pneg %p146
        %p596 = pneg %p170
        %p597 = pneg %p167
        %p598 = pneg %p191
        %p599 = pneg %p188
        %p600 = pneg %p212
        %p601 = pneg %p209
        %p602 = pneg %p233
        %p603 = pneg %p230
        %p604 = pneg %p254
        %p605 = pneg %p251
        %p606 = pneg %p275
        %p607 = pneg %p272
        %p608 = pneg %p296
        %p609 = pneg %p293
        %p610 = pneg %p317
        %p611 = pneg %p314
        %p612 = pneg %p338
        %p613 = pneg %p335
        %p614 = pneg %p359
        %p615 = pneg %p356
        %p616 = pneg %p380
        %p617 = pneg %p377
        %p618 = pneg %p401
        %p619 = pneg %p398
        %p620 = pneg %p427
        %p621 = pneg %p424
        %s622 = sand.u32 %s414, 1
        %s623 = scalar_lea.sflag [#allocation3], %s622
        %s624 = sand.u32 %s414, 1
        %s625 = scalar_lea.vmem [#allocation2], %s624
        %p626 = pneg %p453
        %p627 = pneg %p450
        %p628 = scmp.lt.s32.totalorder %s34, 1
        %s629 = scalar_select %p628, %s34, 1
        %s630 = smul.addr %s629, 4
        %s631 = smul.addr %s630, 8
        %s632 = scalar_lea.vmem %s18, %s631
        %p633 = pneg %p479
        %p634 = pneg %p476
        %p635 = scmp.lt.s32.totalorder %s34, 1
        %s636 = scalar_select %p635, %s34, 1
        %s637 = smul.addr %s636, 4
        %s638 = scalar_lea.vmem %s19, %s637
        %p639 = scmp.lt.s32.totalorder %s34, 1
        %s640 = scalar_select %p639, %s34, 1
        %s641 = smul.addr %s640, 4
        %s642 = smul.addr %s641, 8
        %s643 = scalar_lea.vmem %s0, %s642
        %p644 = scmp.lt.s32.totalorder %s34, 1
        %s645 = scalar_select %p644, %s34, 1
        %s646 = smul.addr %s645, 4
        %s647 = smul.addr %s646, 8
        %s648 = scalar_lea.vmem %s1, %s647
        %p649 = scmp.lt.s32.totalorder %s34, 1
        %s650 = scalar_select %p649, %s34, 1
        %s651 = smul.addr %s650, 4
        %s652 = smul.addr %s651, 8
        %s653 = scalar_lea.vmem %s2, %s652
        %p654 = scmp.lt.s32.totalorder %s34, 1
        %s655 = scalar_select %p654, %s34, 1
        %s656 = smul.addr %s655, 4
        %s657 = smul.addr %s656, 8
        %s658 = scalar_lea.vmem %s18, %s657
        %p659 = scmp.lt.s32.totalorder %s34, 1
        %s660 = scalar_select %p659, %s34, 1
        %s661 = smul.addr %s660, 4
        %s662 = scalar_lea.vmem %s19, %s661
        %v663 = vld [vmem:[%s643] sm:$0xff]
        %v664 = vld [vmem:[%s643 + $0x8] sm:$0xff]
        %v665 = vld [vmem:[%s643 + $0x10] sm:$0xff]
        %v666 = vld [vmem:[%s643 + $0x18] sm:$0xff]
        %v667 = vld [vmem:[%s648] sm:$0xff]
        %v668 = vld [vmem:[%s648 + $0x8] sm:$0xff]
        %v669 = vld [vmem:[%s648 + $0x10] sm:$0xff]
        %v670 = vld [vmem:[%s648 + $0x18] sm:$0xff]
        %v671 = vld [vmem:[%s653] sm:$0xff]
        %v672 = vld [vmem:[%s653 + $0x8] sm:$0xff]
        %v673 = vld [vmem:[%s653 + $0x10] sm:$0xff]
        %v674 = vld [vmem:[%s653 + $0x18] sm:$0xff]
        %v675 = vld [vmem:[%s3] sm:$0xf]
        %v676 = vld [vmem:[%s4] sm:$0xff]
        %v677 = vld [vmem:[%s4 + $0x8] sm:$0xff]
        %v678 = vld [vmem:[%s4 + $0x10] sm:$0xff]
        %v679 = vld [vmem:[%s4 + $0x18] sm:$0xff]
        %v680 = vld [vmem:[%s8] sm:$0x1]
        %s681 = scalar_lea.vmem %s8, 1
        %v682 = vld [vmem:[%s681] sm:$0x1]
        %s683 = scalar_lea.vmem %s8, 2
        %v684 = vld [vmem:[%s683] sm:$0x1]
        %s685 = scalar_lea.vmem %s8, 3
        %v686 = vld [vmem:[%s685] sm:$0x1]
        %s687 = scalar_lea.vmem %s8, 4
        %v688 = vld [vmem:[%s687] sm:$0x1]
        %s689 = scalar_lea.vmem %s8, 5
        %v690 = vld [vmem:[%s689] sm:$0x1]
        %v691 = vld [vmem:[%s5] sm:$0xff]
        %v692 = vld [vmem:[%s5 + $0x8] sm:$0xff]
        %v693 = vld [vmem:[%s5 + $0x10] sm:$0xff]
        %v694 = vld [vmem:[%s5 + $0x18] sm:$0xff]
        %s695 = scalar_lea.vmem %s5, 64
        %v696 = vld [vmem:[%s695] sm:$0xff]
        %v697 = vld [vmem:[%s695 + $0x8] sm:$0xff]
        %v698 = vld [vmem:[%s695 + $0x10] sm:$0xff]
        %v699 = vld [vmem:[%s695 + $0x18] sm:$0xff]
        %s700 = scalar_lea.vmem %s5, 128
        %v701 = vld [vmem:[%s700] sm:$0xff]
        %v702 = vld [vmem:[%s700 + $0x8] sm:$0xff]
        %v703 = vld [vmem:[%s700 + $0x10] sm:$0xff]
        %v704 = vld [vmem:[%s700 + $0x18] sm:$0xff]
        %v705 = vld [vmem:[%s6] sm:$0x1]
        %s706 = scalar_lea.vmem %s6, 2
        %v707 = vld [vmem:[%s706] sm:$0x1]
        %s708 = scalar_lea.vmem %s6, 4
        %v709 = vld [vmem:[%s708] sm:$0x1]
        %v710 = vld [vmem:[%s7] sm:$0xff]
        %v711 = vld [vmem:[%s7 + $0x8] sm:$0xff]
        %v713 = vperm.slane %v705, 0
        %vm715 = vcmask 261120
        %v717 = vsel %vm715, %v663, 0
        %v720 = vsel %vm715, %v664, 0
        %v723 = vsel %vm715, %v665, 0
        %v726 = vsel %vm715, %v666, 0
        %728 = vmatpush.msra.mxu0 0.0
        %729 = vmatpush.msra.mxu0 0.0
        %730 = vmatpush.msra.mxu0 0.0
        %731 = vmatpush.msra.mxu0 0.0
        %732 = vmatpush.msra.mxu0 0.0
        %733 = vmatpush.msra.mxu0 0.0
        %734 = vmatpush.msra.mxu0 0.0
        %735 = vmatpush.msra.mxu0 0.0
        %736 = vmatpush.msra.mxu0 0.0
        %737 = vmatpush.msra.mxu0 0.0
        %738 = vmatpush.msra.mxu0 0.0
        %739 = vmatpush.msra.mxu0 0.0
        %740 = vmatpush.msra.mxu0 %v694
        %741 = vmatpush.msra.mxu0 %v693
        %742 = vmatpush.msra.mxu0 %v692
        %743 = vmatpush.msra.mxu0 %v691
        %744 = vmatmul.f32.gmra.mxu0 %v717
        %v745 = vpop.f32.mrf.mxu0
        %v746 = vadd.f32 %v713, %v745
        %747 = vmatmul.f32.gmra.mxu0 %v720
        %v748 = vpop.f32.mrf.mxu0
        %v749 = vadd.f32 %v713, %v748
        %750 = vmatmul.f32.gmra.mxu0 %v723
        %v751 = vpop.f32.mrf.mxu0
        %v752 = vadd.f32 %v713, %v751
        %753 = vmatmul.f32.gmra.mxu0 %v726
        %v754 = vpop.f32.mrf.mxu0
        %v755 = vadd.f32 %v713, %v754
        %756 = vdwg.mxu0
        %v758 = vperm.slane %v707, 0
        %760 = vmatpush.msra.mxu0 0.0
        %761 = vmatpush.msra.mxu0 0.0
        %762 = vmatpush.msra.mxu0 0.0
        %763 = vmatpush.msra.mxu0 0.0
        %764 = vmatpush.msra.mxu0 0.0
        %765 = vmatpush.msra.mxu0 0.0
        %766 = vmatpush.msra.mxu0 0.0
        %767 = vmatpush.msra.mxu0 0.0
        %768 = vmatpush.msra.mxu0 0.0
        %769 = vmatpush.msra.mxu0 0.0
        %770 = vmatpush.msra.mxu0 0.0
        %771 = vmatpush.msra.mxu0 0.0
        %772 = vmatpush.msra.mxu0 %v699
        %773 = vmatpush.msra.mxu0 %v698
        %774 = vmatpush.msra.mxu0 %v697
        %775 = vmatpush.msra.mxu0 %v696
        %776 = vmatmul.f32.gmra.mxu0 %v717
        %v777 = vpop.f32.mrf.mxu0
        %v778 = vadd.f32 %v758, %v777
        %779 = vmatmul.f32.gmra.mxu0 %v720
        %v780 = vpop.f32.mrf.mxu0
        %v781 = vadd.f32 %v758, %v780
        %782 = vmatmul.f32.gmra.mxu0 %v723
        %v783 = vpop.f32.mrf.mxu0
        %v784 = vadd.f32 %v758, %v783
        %785 = vmatmul.f32.gmra.mxu0 %v726
        %v786 = vpop.f32.mrf.mxu0
        %v787 = vadd.f32 %v758, %v786
        %788 = vdwg.mxu0
        %v790 = vperm.slane %v709, 0
        %792 = vmatpush.msra.mxu0 0.0
        %793 = vmatpush.msra.mxu0 0.0
        %794 = vmatpush.msra.mxu0 0.0
        %795 = vmatpush.msra.mxu0 0.0
        %796 = vmatpush.msra.mxu0 0.0
        %797 = vmatpush.msra.mxu0 0.0
        %798 = vmatpush.msra.mxu0 0.0
        %799 = vmatpush.msra.mxu0 0.0
        %800 = vmatpush.msra.mxu0 0.0
        %801 = vmatpush.msra.mxu0 0.0
        %802 = vmatpush.msra.mxu0 0.0
        %803 = vmatpush.msra.mxu0 0.0
        %804 = vmatpush.msra.mxu0 %v704
        %805 = vmatpush.msra.mxu0 %v703
        %806 = vmatpush.msra.mxu0 %v702
        %807 = vmatpush.msra.mxu0 %v701
        %808 = vmatmul.f32.gmra.mxu0 %v717
        %v809 = vpop.f32.mrf.mxu0
        %v810 = vadd.f32 %v790, %v809
        %811 = vmatmul.f32.gmra.mxu0 %v720
        %v812 = vpop.f32.mrf.mxu0
        %v813 = vadd.f32 %v790, %v812
        %814 = vmatmul.f32.gmra.mxu0 %v723
        %v815 = vpop.f32.mrf.mxu0
        %v816 = vadd.f32 %v790, %v815
        %817 = vmatmul.f32.gmra.mxu0 %v726
        %v818 = vpop.f32.mrf.mxu0
        %v819 = vadd.f32 %v790, %v818
        %820 = vdwg.mxu0
        %vm821 = vcmask 130048
        %v823 = vsel %vm821, %v746, 0
        %v826 = vsel %vm821, %v749, 0
        %v829 = vsel %vm821, %v752, 0
        %v832 = vsel %vm821, %v755, 0
        %v835 = vsel %vm821, %v778, 0
        %v838 = vsel %vm821, %v781, 0
        %v841 = vsel %vm821, %v784, 0
        %v844 = vsel %vm821, %v787, 0
        %846 = vmatpush.xpose.msra.mxu0 0.0
        %847 = vmatpush.xpose.msra.mxu0 0.0
        %848 = vmatpush.xpose.msra.mxu0 0.0
        %849 = vmatpush.xpose.msra.mxu0 0.0
        %850 = vmatpush.xpose.msra.mxu0 0.0
        %851 = vmatpush.xpose.msra.mxu0 0.0
        %852 = vmatpush.xpose.msra.mxu0 0.0
        %853 = vmatpush.xpose.msra.mxu0 0.0
        %854 = vmatpush.xpose.msra.mxu0 0.0
        %855 = vmatpush.xpose.msra.mxu0 0.0
        %856 = vmatpush.xpose.msra.mxu0 0.0
        %857 = vmatpush.xpose.msra.mxu0 0.0
        %858 = vmatpush.xpose.msra.mxu0 %v844
        %859 = vmatpush.xpose.msra.mxu0 %v841
        %860 = vmatpush.xpose.msra.mxu0 %v838
        %861 = vmatpush.xpose.msra.mxu0 %v835
        %862 = vmatmul.f32.gmra.mxu0 %v823
        %v863 = vpop.f32.mrf.mxu0
        %v864 = vadd.f32 0.0, %v863
        %865 = vmatmul.f32.gmra.mxu0 %v826
        %v866 = vpop.f32.mrf.mxu0
        %v867 = vadd.f32 0.0, %v866
        %868 = vmatmul.f32.gmra.mxu0 %v829
        %v869 = vpop.f32.mrf.mxu0
        %v870 = vadd.f32 0.0, %v869
        %871 = vmatmul.f32.gmra.mxu0 %v832
        %v872 = vpop.f32.mrf.mxu0
        %v873 = vadd.f32 0.0, %v872
        %874 = vdwg.mxu0
        %v875 = vmul.f32 %v864, 0.25
        %v876 = vmul.f32 %v867, 0.25
        %v877 = vmul.f32 %v870, 0.25
        %v878 = vmul.f32 %v873, 0.25
        %v879 = vadd.f32 %v875, %v667
        %v880 = vadd.f32 %v876, %v668
        %v881 = vadd.f32 %v877, %v669
        %v882 = vadd.f32 %v878, %v670
        %v883 = vsel %vm715, %v879, -inf
        %884 = vmax.xlane.f32.xlu0 %v883
        %v885 = vpop.xlane.xlu0 %884
        %v886 = vsel %vm715, %v880, -inf
        %887 = vmax.xlane.f32.xlu0 %v886
        %v888 = vpop.xlane.xlu0 %887
        %v889 = vsel %vm715, %v881, -inf
        %890 = vmax.xlane.f32.xlu0 %v889
        %v891 = vpop.xlane.xlu0 %890
        %v892 = vsel %vm715, %v882, -inf
        %893 = vmax.xlane.f32.xlu0 %v892
        %v894 = vpop.xlane.xlu0 %893
        %v895 = vsub.f32 %v879, %v885
        %v896 = vsub.f32 %v880, %v888
        %v897 = vsub.f32 %v881, %v891
        %v898 = vsub.f32 %v882, %v894
        %v899 = vmul.f32 %v895, 1.442695
        %v900 = vpow.pop %v899
        %v901 = vmul.f32 %v896, 1.442695
        %v902 = vpow.pop %v901
        %v903 = vmul.f32 %v897, 1.442695
        %v904 = vpow.pop %v903
        %v905 = vmul.f32 %v898, 1.442695
        %v906 = vpow.pop %v905
        %v907 = vsel %vm715, %v900, 0.0
        %908 = vadd.xlane.f32.xlu0 %v907
        %v909 = vpop.xlane.xlu0 %908
        %v910 = vsel %vm715, %v902, 0.0
        %911 = vadd.xlane.f32.xlu0 %v910
        %v912 = vpop.xlane.xlu0 %911
        %v913 = vsel %vm715, %v904, 0.0
        %914 = vadd.xlane.f32.xlu0 %v913
        %v915 = vpop.xlane.xlu0 %914
        %v916 = vsel %vm715, %v906, 0.0
        %917 = vadd.xlane.f32.xlu0 %v916
        %v918 = vpop.xlane.xlu0 %917
        %v919 = vrcp.pop %v909
        %v920 = vrcp.pop %v912
        %v921 = vrcp.pop %v915
        %v922 = vrcp.pop %v918
        %v923 = vmul.f32 %v900, %v919
        %v924 = vmul.f32 %v902, %v920
        %v925 = vmul.f32 %v904, %v921
        %v926 = vmul.f32 %v906, %v922
        %v928 = vsel %vm715, %v923, 0
        %v931 = vsel %vm715, %v924, 0
        %v934 = vsel %vm715, %v925, 0
        %v937 = vsel %vm715, %v926, 0
        %939 = vmatpush.msra.mxu0 0.0
        %940 = vmatpush.msra.mxu0 0.0
        %941 = vmatpush.msra.mxu0 0.0
        %942 = vmatpush.msra.mxu0 0.0
        %943 = vmatpush.msra.mxu0 0.0
        %944 = vmatpush.msra.mxu0 0.0
        %945 = vmatpush.msra.mxu0 0.0
        %946 = vmatpush.msra.mxu0 0.0
        %947 = vmatpush.msra.mxu0 0.0
        %948 = vmatpush.msra.mxu0 0.0
        %949 = vmatpush.msra.mxu0 0.0
        %950 = vmatpush.msra.mxu0 0.0
        %951 = vmatpush.msra.mxu0 %v819
        %952 = vmatpush.msra.mxu0 %v816
        %953 = vmatpush.msra.mxu0 %v813
        %954 = vmatpush.msra.mxu0 %v810
        %955 = vmatmul.f32.gmra.mxu0 %v928
        %v956 = vpop.f32.mrf.mxu0
        %v957 = vadd.f32 0.0, %v956
        %958 = vmatmul.f32.gmra.mxu0 %v931
        %v959 = vpop.f32.mrf.mxu0
        %v960 = vadd.f32 0.0, %v959
        %961 = vmatmul.f32.gmra.mxu0 %v934
        %v962 = vpop.f32.mrf.mxu0
        %v963 = vadd.f32 0.0, %v962
        %964 = vmatmul.f32.gmra.mxu0 %v937
        %v965 = vpop.f32.mrf.mxu0
        %v966 = vadd.f32 0.0, %v965
        %967 = vdwg.mxu0
        %s968 = scalar_lea.vmem %s5, 32
        %v969 = vld [vmem:[%s968] sm:$0xff]
        %v970 = vld [vmem:[%s968 + $0x8] sm:$0xff]
        %v971 = vld [vmem:[%s968 + $0x10] sm:$0xff]
        %v972 = vld [vmem:[%s968 + $0x18] sm:$0xff]
        %s973 = scalar_lea.vmem %s5, 96
        %v974 = vld [vmem:[%s973] sm:$0xff]
        %v975 = vld [vmem:[%s973 + $0x8] sm:$0xff]
        %v976 = vld [vmem:[%s973 + $0x10] sm:$0xff]
        %v977 = vld [vmem:[%s973 + $0x18] sm:$0xff]
        %s978 = scalar_lea.vmem %s5, 160
        %v979 = vld [vmem:[%s978] sm:$0xff]
        %v980 = vld [vmem:[%s978 + $0x8] sm:$0xff]
        %v981 = vld [vmem:[%s978 + $0x10] sm:$0xff]
        %v982 = vld [vmem:[%s978 + $0x18] sm:$0xff]
        %s983 = scalar_lea.vmem %s6, 1
        %v984 = vld [vmem:[%s983] sm:$0x1]
        %s985 = scalar_lea.vmem %s6, 3
        %v986 = vld [vmem:[%s985] sm:$0x1]
        %s987 = scalar_lea.vmem %s6, 5
        %v988 = vld [vmem:[%s987] sm:$0x1]
        %s989 = scalar_lea.vmem %s7, 16
        %v990 = vld [vmem:[%s989] sm:$0xff]
        %v991 = vld [vmem:[%s989 + $0x8] sm:$0xff]
        %v993 = vperm.slane %v984, 0
        %995 = vmatpush.msra.mxu0 0.0
        %996 = vmatpush.msra.mxu0 0.0
        %997 = vmatpush.msra.mxu0 0.0
        %998 = vmatpush.msra.mxu0 0.0
        %999 = vmatpush.msra.mxu0 0.0
        %1000 = vmatpush.msra.mxu0 0.0
        %1001 = vmatpush.msra.mxu0 0.0
        %1002 = vmatpush.msra.mxu0 0.0
        %1003 = vmatpush.msra.mxu0 0.0
        %1004 = vmatpush.msra.mxu0 0.0
        %1005 = vmatpush.msra.mxu0 0.0
        %1006 = vmatpush.msra.mxu0 0.0
        %1007 = vmatpush.msra.mxu0 %v972
        %1008 = vmatpush.msra.mxu0 %v971
        %1009 = vmatpush.msra.mxu0 %v970
        %1010 = vmatpush.msra.mxu0 %v969
        %1011 = vmatmul.f32.gmra.mxu0 %v717
        %v1012 = vpop.f32.mrf.mxu0
        %v1013 = vadd.f32 %v993, %v1012
        %1014 = vmatmul.f32.gmra.mxu0 %v720
        %v1015 = vpop.f32.mrf.mxu0
        %v1016 = vadd.f32 %v993, %v1015
        %1017 = vmatmul.f32.gmra.mxu0 %v723
        %v1018 = vpop.f32.mrf.mxu0
        %v1019 = vadd.f32 %v993, %v1018
        %1020 = vmatmul.f32.gmra.mxu0 %v726
        %v1021 = vpop.f32.mrf.mxu0
        %v1022 = vadd.f32 %v993, %v1021
        %1023 = vdwg.mxu0
        %v1025 = vperm.slane %v986, 0
        %1027 = vmatpush.msra.mxu0 0.0
        %1028 = vmatpush.msra.mxu0 0.0
        %1029 = vmatpush.msra.mxu0 0.0
        %1030 = vmatpush.msra.mxu0 0.0
        %1031 = vmatpush.msra.mxu0 0.0
        %1032 = vmatpush.msra.mxu0 0.0
        %1033 = vmatpush.msra.mxu0 0.0
        %1034 = vmatpush.msra.mxu0 0.0
        %1035 = vmatpush.msra.mxu0 0.0
        %1036 = vmatpush.msra.mxu0 0.0
        %1037 = vmatpush.msra.mxu0 0.0
        %1038 = vmatpush.msra.mxu0 0.0
        %1039 = vmatpush.msra.mxu0 %v977
        %1040 = vmatpush.msra.mxu0 %v976
        %1041 = vmatpush.msra.mxu0 %v975
        %1042 = vmatpush.msra.mxu0 %v974
        %1043 = vmatmul.f32.gmra.mxu0 %v717
        %v1044 = vpop.f32.mrf.mxu0
        %v1045 = vadd.f32 %v1025, %v1044
        %1046 = vmatmul.f32.gmra.mxu0 %v720
        %v1047 = vpop.f32.mrf.mxu0
        %v1048 = vadd.f32 %v1025, %v1047
        %1049 = vmatmul.f32.gmra.mxu0 %v723
        %v1050 = vpop.f32.mrf.mxu0
        %v1051 = vadd.f32 %v1025, %v1050
        %1052 = vmatmul.f32.gmra.mxu0 %v726
        %v1053 = vpop.f32.mrf.mxu0
        %v1054 = vadd.f32 %v1025, %v1053
        %1055 = vdwg.mxu0
        %v1057 = vperm.slane %v988, 0
        %1059 = vmatpush.msra.mxu0 0.0
        %1060 = vmatpush.msra.mxu0 0.0
        %1061 = vmatpush.msra.mxu0 0.0
        %1062 = vmatpush.msra.mxu0 0.0
        %1063 = vmatpush.msra.mxu0 0.0
        %1064 = vmatpush.msra.mxu0 0.0
        %1065 = vmatpush.msra.mxu0 0.0
        %1066 = vmatpush.msra.mxu0 0.0
        %1067 = vmatpush.msra.mxu0 0.0
        %1068 = vmatpush.msra.mxu0 0.0
        %1069 = vmatpush.msra.mxu0 0.0
        %1070 = vmatpush.msra.mxu0 0.0
        %1071 = vmatpush.msra.mxu0 %v982
        %1072 = vmatpush.msra.mxu0 %v981
        %1073 = vmatpush.msra.mxu0 %v980
        %1074 = vmatpush.msra.mxu0 %v979
        %1075 = vmatmul.f32.gmra.mxu0 %v717
        %v1076 = vpop.f32.mrf.mxu0
        %v1077 = vadd.f32 %v1057, %v1076
        %1078 = vmatmul.f32.gmra.mxu0 %v720
        %v1079 = vpop.f32.mrf.mxu0
        %v1080 = vadd.f32 %v1057, %v1079
        %1081 = vmatmul.f32.gmra.mxu0 %v723
        %v1082 = vpop.f32.mrf.mxu0
        %v1083 = vadd.f32 %v1057, %v1082
        %1084 = vmatmul.f32.gmra.mxu0 %v726
        %v1085 = vpop.f32.mrf.mxu0
        %v1086 = vadd.f32 %v1057, %v1085
        %1087 = vdwg.mxu0
        %v1089 = vsel %vm821, %v1013, 0
        %v1092 = vsel %vm821, %v1016, 0
        %v1095 = vsel %vm821, %v1019, 0
        %v1098 = vsel %vm821, %v1022, 0
        %v1101 = vsel %vm821, %v1045, 0
        %v1104 = vsel %vm821, %v1048, 0
        %v1107 = vsel %vm821, %v1051, 0
        %v1110 = vsel %vm821, %v1054, 0
        %1112 = vmatpush.xpose.msra.mxu0 0.0
        %1113 = vmatpush.xpose.msra.mxu0 0.0
        %1114 = vmatpush.xpose.msra.mxu0 0.0
        %1115 = vmatpush.xpose.msra.mxu0 0.0
        %1116 = vmatpush.xpose.msra.mxu0 0.0
        %1117 = vmatpush.xpose.msra.mxu0 0.0
        %1118 = vmatpush.xpose.msra.mxu0 0.0
        %1119 = vmatpush.xpose.msra.mxu0 0.0
        %1120 = vmatpush.xpose.msra.mxu0 0.0
        %1121 = vmatpush.xpose.msra.mxu0 0.0
        %1122 = vmatpush.xpose.msra.mxu0 0.0
        %1123 = vmatpush.xpose.msra.mxu0 0.0
        %1124 = vmatpush.xpose.msra.mxu0 %v1110
        %1125 = vmatpush.xpose.msra.mxu0 %v1107
        %1126 = vmatpush.xpose.msra.mxu0 %v1104
        %1127 = vmatpush.xpose.msra.mxu0 %v1101
        %1128 = vmatmul.f32.gmra.mxu0 %v1089
        %v1129 = vpop.f32.mrf.mxu0
        %v1130 = vadd.f32 0.0, %v1129
        %1131 = vmatmul.f32.gmra.mxu0 %v1092
        %v1132 = vpop.f32.mrf.mxu0
        %v1133 = vadd.f32 0.0, %v1132
        %1134 = vmatmul.f32.gmra.mxu0 %v1095
        %v1135 = vpop.f32.mrf.mxu0
        %v1136 = vadd.f32 0.0, %v1135
        %1137 = vmatmul.f32.gmra.mxu0 %v1098
        %v1138 = vpop.f32.mrf.mxu0
        %v1139 = vadd.f32 0.0, %v1138
        %1140 = vdwg.mxu0
        %v1141 = vmul.f32 %v1130, 0.25
        %v1142 = vmul.f32 %v1133, 0.25
        %v1143 = vmul.f32 %v1136, 0.25
        %v1144 = vmul.f32 %v1139, 0.25
        %v1145 = vadd.f32 %v1141, %v667
        %v1146 = vadd.f32 %v1142, %v668
        %v1147 = vadd.f32 %v1143, %v669
        %v1148 = vadd.f32 %v1144, %v670
        %v1149 = vsel %vm715, %v1145, -inf
        %1150 = vmax.xlane.f32.xlu0 %v1149
        %v1151 = vpop.xlane.xlu0 %1150
        %v1152 = vsel %vm715, %v1146, -inf
        %1153 = vmax.xlane.f32.xlu0 %v1152
        %v1154 = vpop.xlane.xlu0 %1153
        %v1155 = vsel %vm715, %v1147, -inf
        %1156 = vmax.xlane.f32.xlu0 %v1155
        %v1157 = vpop.xlane.xlu0 %1156
        %v1158 = vsel %vm715, %v1148, -inf
        %1159 = vmax.xlane.f32.xlu0 %v1158
        %v1160 = vpop.xlane.xlu0 %1159
        %v1161 = vsub.f32 %v1145, %v1151
        %v1162 = vsub.f32 %v1146, %v1154
        %v1163 = vsub.f32 %v1147, %v1157
        %v1164 = vsub.f32 %v1148, %v1160
        %v1165 = vmul.f32 %v1161, 1.442695
        %v1166 = vpow.pop %v1165
        %v1167 = vmul.f32 %v1162, 1.442695
        %v1168 = vpow.pop %v1167
        %v1169 = vmul.f32 %v1163, 1.442695
        %v1170 = vpow.pop %v1169
        %v1171 = vmul.f32 %v1164, 1.442695
        %v1172 = vpow.pop %v1171
        %v1173 = vsel %vm715, %v1166, 0.0
        %1174 = vadd.xlane.f32.xlu0 %v1173
        %v1175 = vpop.xlane.xlu0 %1174
        %v1176 = vsel %vm715, %v1168, 0.0
        %1177 = vadd.xlane.f32.xlu0 %v1176
        %v1178 = vpop.xlane.xlu0 %1177
        %v1179 = vsel %vm715, %v1170, 0.0
        %1180 = vadd.xlane.f32.xlu0 %v1179
        %v1181 = vpop.xlane.xlu0 %1180
        %v1182 = vsel %vm715, %v1172, 0.0
        %1183 = vadd.xlane.f32.xlu0 %v1182
        %v1184 = vpop.xlane.xlu0 %1183
        %v1185 = vrcp.pop %v1175
        %v1186 = vrcp.pop %v1178
        %v1187 = vrcp.pop %v1181
        %v1188 = vrcp.pop %v1184
        %v1189 = vmul.f32 %v1166, %v1185
        %v1190 = vmul.f32 %v1168, %v1186
        %v1191 = vmul.f32 %v1170, %v1187
        %v1192 = vmul.f32 %v1172, %v1188
        %v1194 = vsel %vm715, %v1189, 0
        %v1197 = vsel %vm715, %v1190, 0
        %v1200 = vsel %vm715, %v1191, 0
        %v1203 = vsel %vm715, %v1192, 0
        %1205 = vmatpush.msra.mxu0 0.0
        %1206 = vmatpush.msra.mxu0 0.0
        %1207 = vmatpush.msra.mxu0 0.0
        %1208 = vmatpush.msra.mxu0 0.0
        %1209 = vmatpush.msra.mxu0 0.0
        %1210 = vmatpush.msra.mxu0 0.0
        %1211 = vmatpush.msra.mxu0 0.0
        %1212 = vmatpush.msra.mxu0 0.0
        %1213 = vmatpush.msra.mxu0 0.0
        %1214 = vmatpush.msra.mxu0 0.0
        %1215 = vmatpush.msra.mxu0 0.0
        %1216 = vmatpush.msra.mxu0 0.0
        %1217 = vmatpush.msra.mxu0 %v1086
        %1218 = vmatpush.msra.mxu0 %v1083
        %1219 = vmatpush.msra.mxu0 %v1080
        %1220 = vmatpush.msra.mxu0 %v1077
        %1221 = vmatmul.f32.gmra.mxu0 %v1194
        %v1222 = vpop.f32.mrf.mxu0
        %v1223 = vadd.f32 0.0, %v1222
        %1224 = vmatmul.f32.gmra.mxu0 %v1197
        %v1225 = vpop.f32.mrf.mxu0
        %v1226 = vadd.f32 0.0, %v1225
        %1227 = vmatmul.f32.gmra.mxu0 %v1200
        %v1228 = vpop.f32.mrf.mxu0
        %v1229 = vadd.f32 0.0, %v1228
        %1230 = vmatmul.f32.gmra.mxu0 %v1203
        %v1231 = vpop.f32.mrf.mxu0
        %v1232 = vadd.f32 0.0, %v1231
        %1233 = vdwg.mxu0
        %v1235 = vsel %vm821, %v1223, 0
        %v1238 = vsel %vm821, %v1226, 0
        %v1241 = vsel %vm821, %v1229, 0
        %v1244 = vsel %vm821, %v1232, 0
        %1246 = vmatpush.msra.mxu0 0.0
        %1247 = vmatpush.msra.mxu0 0.0
        %1248 = vmatpush.msra.mxu0 0.0
        %1249 = vmatpush.msra.mxu0 0.0
        %1250 = vmatpush.msra.mxu0 0.0
        %1251 = vmatpush.msra.mxu0 0.0
        %1252 = vmatpush.msra.mxu0 0.0
        %1253 = vmatpush.msra.mxu0 0.0
        %1254 = vmatpush.msra.mxu0 0.0
        %1255 = vmatpush.msra.mxu0 0.0
        %1256 = vmatpush.msra.mxu0 0.0
        %1257 = vmatpush.msra.mxu0 0.0
        %1258 = vmatpush.msra.mxu0 0.0
        %1259 = vmatpush.msra.mxu0 0.0
        %1260 = vmatpush.msra.mxu0 %v991
        %1261 = vmatpush.msra.mxu0 %v990
        %1262 = vmatmul.f32.gmra.mxu0 %v1235
        %v1263 = vpop.f32.mrf.mxu0
        %v1264 = vadd.f32 0.0, %v1263
        %1265 = vmatmul.f32.gmra.mxu0 %v1238
        %v1266 = vpop.f32.mrf.mxu0
        %v1267 = vadd.f32 0.0, %v1266
        %1268 = vmatmul.f32.gmra.mxu0 %v1241
        %v1269 = vpop.f32.mrf.mxu0
        %v1270 = vadd.f32 0.0, %v1269
        %1271 = vmatmul.f32.gmra.mxu0 %v1244
        %v1272 = vpop.f32.mrf.mxu0
        %v1273 = vadd.f32 0.0, %v1272
        %1274 = vdwg.mxu0
        %v1276 = vsel %vm821, %v957, 0
        %v1279 = vsel %vm821, %v960, 0
        %v1282 = vsel %vm821, %v963, 0
        %v1285 = vsel %vm821, %v966, 0
        %1287 = vmatpush.msra.mxu0 0.0
        %1288 = vmatpush.msra.mxu0 0.0
        %1289 = vmatpush.msra.mxu0 0.0
        %1290 = vmatpush.msra.mxu0 0.0
        %1291 = vmatpush.msra.mxu0 0.0
        %1292 = vmatpush.msra.mxu0 0.0
        %1293 = vmatpush.msra.mxu0 0.0
        %1294 = vmatpush.msra.mxu0 0.0
        %1295 = vmatpush.msra.mxu0 0.0
        %1296 = vmatpush.msra.mxu0 0.0
        %1297 = vmatpush.msra.mxu0 0.0
        %1298 = vmatpush.msra.mxu0 0.0
        %1299 = vmatpush.msra.mxu0 0.0
        %1300 = vmatpush.msra.mxu0 0.0
        %1301 = vmatpush.msra.mxu0 %v711
        %1302 = vmatpush.msra.mxu0 %v710
        %1303 = vmatmul.f32.gmra.mxu0 %v1276
        %v1304 = vpop.f32.mrf.mxu0
        %v1305 = vadd.f32 %v1264, %v1304
        %1306 = vmatmul.f32.gmra.mxu0 %v1279
        %v1307 = vpop.f32.mrf.mxu0
        %v1308 = vadd.f32 %v1267, %v1307
        %1309 = vmatmul.f32.gmra.mxu0 %v1282
        %v1310 = vpop.f32.mrf.mxu0
        %v1311 = vadd.f32 %v1270, %v1310
        %1312 = vmatmul.f32.gmra.mxu0 %v1285
        %v1313 = vpop.f32.mrf.mxu0
        %v1314 = vadd.f32 %v1273, %v1313
        %1315 = vdwg.mxu0
        %v1317 = vperm.slane %v680, 0
        %v1319 = vadd.f32 %v1305, %v1317
        %v1320 = vadd.f32 %v1308, %v1317
        %v1321 = vadd.f32 %v1311, %v1317
        %v1322 = vadd.f32 %v1314, %v1317
        %v1323 = vadd.f32 %v663, %v1319
        %v1324 = vadd.f32 %v664, %v1320
        %v1325 = vadd.f32 %v665, %v1321
        %v1326 = vadd.f32 %v666, %v1322
        %v1327 = vsel %vm715, %v1323, 0.0
        %1328 = vadd.xlane.f32.xlu0 %v1327
        %v1329 = vpop.xlane.xlu0 %1328
        %v1330 = vsel %vm715, %v1324, 0.0
        %1331 = vadd.xlane.f32.xlu0 %v1330
        %v1332 = vpop.xlane.xlu0 %1331
        %v1333 = vsel %vm715, %v1325, 0.0
        %1334 = vadd.xlane.f32.xlu0 %v1333
        %v1335 = vpop.xlane.xlu0 %1334
        %v1336 = vsel %vm715, %v1326, 0.0
        %1337 = vadd.xlane.f32.xlu0 %v1336
        %v1338 = vpop.xlane.xlu0 %1337
        %v1339 = vrcp.pop 32.0
        %v1340 = vmul.f32 32.0, %v1339
        %v1341 = vsub.f32 1.0, %v1340
        %v1342 = vmul.f32 %v1339, %v1341
        %v1343 = vadd.f32 %v1339, %v1342
        %vm1344 = vweird.f32 %v1339
        %v1345 = vsel %vm1344, %v1339, %v1343
        %v1346 = vmul.f32 %v1329, %v1345
        %v1347 = vmul.f32 %v1332, %v1345
        %v1348 = vmul.f32 %v1335, %v1345
        %v1349 = vmul.f32 %v1338, %v1345
        %v1350 = vsub.f32 %v1323, %v1346
        %v1351 = vsub.f32 %v1324, %v1347
        %v1352 = vsub.f32 %v1325, %v1348
        %v1353 = vsub.f32 %v1326, %v1349
        %v1354 = vmul.f32 %v1350, %v1350
        %v1355 = vmul.f32 %v1351, %v1351
        %v1356 = vmul.f32 %v1352, %v1352
        %v1357 = vmul.f32 %v1353, %v1353
        %v1358 = vsel %vm715, %v1354, 0.0
        %1359 = vadd.xlane.f32.xlu0 %v1358
        %v1360 = vpop.xlane.xlu0 %1359
        %v1361 = vsel %vm715, %v1355, 0.0
        %1362 = vadd.xlane.f32.xlu0 %v1361
        %v1363 = vpop.xlane.xlu0 %1362
        %v1364 = vsel %vm715, %v1356, 0.0
        %1365 = vadd.xlane.f32.xlu0 %v1364
        %v1366 = vpop.xlane.xlu0 %1365
        %v1367 = vsel %vm715, %v1357, 0.0
        %1368 = vadd.xlane.f32.xlu0 %v1367
        %v1369 = vpop.xlane.xlu0 %1368
        %v1370 = vmul.f32 %v1360, %v1345
        %v1371 = vmul.f32 %v1363, %v1345
        %v1372 = vmul.f32 %v1366, %v1345
        %v1373 = vmul.f32 %v1369, %v1345
        %v1374 = vadd.f32 %v1370, 1e-12
        %v1375 = vadd.f32 %v1371, 1e-12
        %v1376 = vadd.f32 %v1372, 1e-12
        %v1377 = vadd.f32 %v1373, 1e-12
        %v1378 = vrsqrt.pop %v1374
        %v1379 = vmul.f32 %v1378, %v1374
        %v1380 = vmul.f32 %v1379, %v1378
        %v1381 = vmul.f32 0.5, %v1380
        %v1382 = vsub.f32 1.5, %v1381
        %v1383 = vmul.f32 %v1378, %v1382
        %vm1384 = vweird.f32 %v1374
        %vm1385 = vweird.f32 %v1378
        %vm1386 = vmor %vm1384, %vm1385
        %v1387 = vsel %vm1386, %v1378, %v1383
        %v1388 = vrsqrt.pop %v1375
        %v1389 = vmul.f32 %v1388, %v1375
        %v1390 = vmul.f32 %v1389, %v1388
        %v1391 = vmul.f32 0.5, %v1390
        %v1392 = vsub.f32 1.5, %v1391
        %v1393 = vmul.f32 %v1388, %v1392
        %vm1394 = vweird.f32 %v1375
        %vm1395 = vweird.f32 %v1388
        %vm1396 = vmor %vm1394, %vm1395
        %v1397 = vsel %vm1396, %v1388, %v1393
        %v1398 = vrsqrt.pop %v1376
        %v1399 = vmul.f32 %v1398, %v1376
        %v1400 = vmul.f32 %v1399, %v1398
        %v1401 = vmul.f32 0.5, %v1400
        %v1402 = vsub.f32 1.5, %v1401
        %v1403 = vmul.f32 %v1398, %v1402
        %vm1404 = vweird.f32 %v1376
        %vm1405 = vweird.f32 %v1398
        %vm1406 = vmor %vm1404, %vm1405
        %v1407 = vsel %vm1406, %v1398, %v1403
        %v1408 = vrsqrt.pop %v1377
        %v1409 = vmul.f32 %v1408, %v1377
        %v1410 = vmul.f32 %v1409, %v1408
        %v1411 = vmul.f32 0.5, %v1410
        %v1412 = vsub.f32 1.5, %v1411
        %v1413 = vmul.f32 %v1408, %v1412
        %vm1414 = vweird.f32 %v1377
        %vm1415 = vweird.f32 %v1408
        %vm1416 = vmor %vm1414, %vm1415
        %v1417 = vsel %vm1416, %v1408, %v1413
        %v1418 = vmul.f32 %v1350, %v1387
        %v1419 = vmul.f32 %v1351, %v1397
        %v1420 = vmul.f32 %v1352, %v1407
        %v1421 = vmul.f32 %v1353, %v1417
        %v1423 = vperm.slane %v682, 0
        %v1425 = vmul.f32 %v1418, %v1423
        %v1426 = vmul.f32 %v1419, %v1423
        %v1427 = vmul.f32 %v1420, %v1423
        %v1428 = vmul.f32 %v1421, %v1423
        %v1430 = vperm.slane %v684, 0
        %v1432 = vadd.f32 %v1425, %v1430
        %v1433 = vadd.f32 %v1426, %v1430
        %v1434 = vadd.f32 %v1427, %v1430
        %v1435 = vadd.f32 %v1428, %v1430
        %v1436 = vld [vmem:[%s9] sm:$0xff]
        %v1437 = vld [vmem:[%s9 + $0x8] sm:$0xff]
        %v1438 = vld [vmem:[%s9 + $0x10] sm:$0xff]
        %v1439 = vld [vmem:[%s9 + $0x18] sm:$0xff]
        %v1440 = vld [vmem:[%s10] sm:$0x1]
        %v1442 = vperm.slane %v1440, 0
        %v1445 = vsel %vm715, %v1432, 0
        %v1448 = vsel %vm715, %v1433, 0
        %v1451 = vsel %vm715, %v1434, 0
        %v1454 = vsel %vm715, %v1435, 0
        %1456 = vmatpush.msra.mxu0 0.0
        %1457 = vmatpush.msra.mxu0 0.0
        %1458 = vmatpush.msra.mxu0 0.0
        %1459 = vmatpush.msra.mxu0 0.0
        %1460 = vmatpush.msra.mxu0 0.0
        %1461 = vmatpush.msra.mxu0 0.0
        %1462 = vmatpush.msra.mxu0 0.0
        %1463 = vmatpush.msra.mxu0 0.0
        %1464 = vmatpush.msra.mxu0 0.0
        %1465 = vmatpush.msra.mxu0 0.0
        %1466 = vmatpush.msra.mxu0 0.0
        %1467 = vmatpush.msra.mxu0 0.0
        %1468 = vmatpush.msra.mxu0 %v1439
        %1469 = vmatpush.msra.mxu0 %v1438
        %1470 = vmatpush.msra.mxu0 %v1437
        %1471 = vmatpush.msra.mxu0 %v1436
        %1472 = vmatmul.f32.gmra.mxu0 %v1445
        %v1473 = vpop.f32.mrf.mxu0
        %v1474 = vadd.f32 %v1442, %v1473
        %1475 = vmatmul.f32.gmra.mxu0 %v1448
        %v1476 = vpop.f32.mrf.mxu0
        %v1477 = vadd.f32 %v1442, %v1476
        %1478 = vmatmul.f32.gmra.mxu0 %v1451
        %v1479 = vpop.f32.mrf.mxu0
        %v1480 = vadd.f32 %v1442, %v1479
        %1481 = vmatmul.f32.gmra.mxu0 %v1454
        %v1482 = vpop.f32.mrf.mxu0
        %v1483 = vadd.f32 %v1442, %v1482
        %1484 = vdwg.mxu0
        %v1485 = vmul.f32 %v1474, 0.5
        %v1486 = vmul.f32 %v1477, 0.5
        %v1487 = vmul.f32 %v1480, 0.5
        %v1488 = vmul.f32 %v1483, 0.5
        %v1489 = vmul.f32 %v1474, 0.044715
        %v1490 = vmul.f32 %v1477, 0.044715
        %v1491 = vmul.f32 %v1480, 0.044715
        %v1492 = vmul.f32 %v1483, 0.044715
        %v1493 = vmul.f32 %v1489, %v1474
        %v1494 = vmul.f32 %v1490, %v1477
        %v1495 = vmul.f32 %v1491, %v1480
        %v1496 = vmul.f32 %v1492, %v1483
        %v1497 = vmul.f32 %v1493, %v1474
        %v1498 = vmul.f32 %v1494, %v1477
        %v1499 = vmul.f32 %v1495, %v1480
        %v1500 = vmul.f32 %v1496, %v1483
        %v1501 = vadd.f32 %v1474, %v1497
        %v1502 = vadd.f32 %v1477, %v1498
        %v1503 = vadd.f32 %v1480, %v1499
        %v1504 = vadd.f32 %v1483, %v1500
        %v1505 = vmul.f32 %v1501, 0.7978846
        %v1506 = vmul.f32 %v1502, 0.7978846
        %v1507 = vmul.f32 %v1503, 0.7978846
        %v1508 = vmul.f32 %v1504, 0.7978846
        %v1509 = vtanh.pop %v1505
        %v1510 = vtanh.pop %v1506
        %v1511 = vtanh.pop %v1507
        %v1512 = vtanh.pop %v1508
        %v1513 = vadd.f32 %v1509, 1.0
        %v1514 = vadd.f32 %v1510, 1.0
        %v1515 = vadd.f32 %v1511, 1.0
        %v1516 = vadd.f32 %v1512, 1.0
        %v1517 = vmul.f32 %v1485, %v1513
        %v1518 = vmul.f32 %v1486, %v1514
        %v1519 = vmul.f32 %v1487, %v1515
        %v1520 = vmul.f32 %v1488, %v1516
        %v1521 = vld [vmem:[%s11] sm:$0xff]
        %v1522 = vld [vmem:[%s11 + $0x8] sm:$0xff]
        %v1523 = vld [vmem:[%s11 + $0x10] sm:$0xff]
        %v1524 = vld [vmem:[%s11 + $0x18] sm:$0xff]
        %v1525 = vld [vmem:[%s11 + $0x20] sm:$0xff]
        %v1526 = vld [vmem:[%s11 + $0x28] sm:$0xff]
        %v1527 = vld [vmem:[%s11 + $0x30] sm:$0xff]
        %v1528 = vld [vmem:[%s11 + $0x38] sm:$0xff]
        %v1530 = vperm.slane %v686, 0
        %vm1532 = vcmask 523264
        %v1534 = vsel %vm1532, %v1517, 0
        %v1537 = vsel %vm1532, %v1518, 0
        %v1540 = vsel %vm1532, %v1519, 0
        %v1543 = vsel %vm1532, %v1520, 0
        %1545 = vmatpush.msra.mxu0 0.0
        %1546 = vmatpush.msra.mxu0 0.0
        %1547 = vmatpush.msra.mxu0 0.0
        %1548 = vmatpush.msra.mxu0 0.0
        %1549 = vmatpush.msra.mxu0 0.0
        %1550 = vmatpush.msra.mxu0 0.0
        %1551 = vmatpush.msra.mxu0 0.0
        %1552 = vmatpush.msra.mxu0 0.0
        %1553 = vmatpush.msra.mxu0 %v1528
        %1554 = vmatpush.msra.mxu0 %v1527
        %1555 = vmatpush.msra.mxu0 %v1526
        %1556 = vmatpush.msra.mxu0 %v1525
        %1557 = vmatpush.msra.mxu0 %v1524
        %1558 = vmatpush.msra.mxu0 %v1523
        %1559 = vmatpush.msra.mxu0 %v1522
        %1560 = vmatpush.msra.mxu0 %v1521
        %1561 = vmatmul.f32.gmra.mxu0 %v1534
        %v1562 = vpop.f32.mrf.mxu0
        %v1563 = vadd.f32 %v1530, %v1562
        %1564 = vmatmul.f32.gmra.mxu0 %v1537
        %v1565 = vpop.f32.mrf.mxu0
        %v1566 = vadd.f32 %v1530, %v1565
        %1567 = vmatmul.f32.gmra.mxu0 %v1540
        %v1568 = vpop.f32.mrf.mxu0
        %v1569 = vadd.f32 %v1530, %v1568
        %1570 = vmatmul.f32.gmra.mxu0 %v1543
        %v1571 = vpop.f32.mrf.mxu0
        %v1572 = vadd.f32 %v1530, %v1571
        %1573 = vdwg.mxu0
        %v1574 = vadd.f32 %v1432, %v1563
        %v1575 = vadd.f32 %v1433, %v1566
        %v1576 = vadd.f32 %v1434, %v1569
        %v1577 = vadd.f32 %v1435, %v1572
        %v1578 = vsel %vm715, %v1574, 0.0
        %1579 = vadd.xlane.f32.xlu0 %v1578
        %v1580 = vpop.xlane.xlu0 %1579
        %v1581 = vsel %vm715, %v1575, 0.0
        %1582 = vadd.xlane.f32.xlu0 %v1581
        %v1583 = vpop.xlane.xlu0 %1582
        %v1584 = vsel %vm715, %v1576, 0.0
        %1585 = vadd.xlane.f32.xlu0 %v1584
        %v1586 = vpop.xlane.xlu0 %1585
        %v1587 = vsel %vm715, %v1577, 0.0
        %1588 = vadd.xlane.f32.xlu0 %v1587
        %v1589 = vpop.xlane.xlu0 %1588
        %v1590 = vmul.f32 %v1580, %v1345
        %v1591 = vmul.f32 %v1583, %v1345
        %v1592 = vmul.f32 %v1586, %v1345
        %v1593 = vmul.f32 %v1589, %v1345
        %v1594 = vsub.f32 %v1574, %v1590
        %v1595 = vsub.f32 %v1575, %v1591
        %v1596 = vsub.f32 %v1576, %v1592
        %v1597 = vsub.f32 %v1577, %v1593
        %v1598 = vmul.f32 %v1594, %v1594
        %v1599 = vmul.f32 %v1595, %v1595
        %v1600 = vmul.f32 %v1596, %v1596
        %v1601 = vmul.f32 %v1597, %v1597
        %v1602 = vsel %vm715, %v1598, 0.0
        %1603 = vadd.xlane.f32.xlu0 %v1602
        %v1604 = vpop.xlane.xlu0 %1603
        %v1605 = vsel %vm715, %v1599, 0.0
        %1606 = vadd.xlane.f32.xlu0 %v1605
        %v1607 = vpop.xlane.xlu0 %1606
        %v1608 = vsel %vm715, %v1600, 0.0
        %1609 = vadd.xlane.f32.xlu0 %v1608
        %v1610 = vpop.xlane.xlu0 %1609
        %v1611 = vsel %vm715, %v1601, 0.0
        %1612 = vadd.xlane.f32.xlu0 %v1611
        %v1613 = vpop.xlane.xlu0 %1612
        %v1614 = vmul.f32 %v1604, %v1345
        %v1615 = vmul.f32 %v1607, %v1345
        %v1616 = vmul.f32 %v1610, %v1345
        %v1617 = vmul.f32 %v1613, %v1345
        %v1618 = vadd.f32 %v1614, 1e-12
        %v1619 = vadd.f32 %v1615, 1e-12
        %v1620 = vadd.f32 %v1616, 1e-12
        %v1621 = vadd.f32 %v1617, 1e-12
        %v1622 = vrsqrt.pop %v1618
        %v1623 = vmul.f32 %v1622, %v1618
        %v1624 = vmul.f32 %v1623, %v1622
        %v1625 = vmul.f32 0.5, %v1624
        %v1626 = vsub.f32 1.5, %v1625
        %v1627 = vmul.f32 %v1622, %v1626
        %vm1628 = vweird.f32 %v1618
        %vm1629 = vweird.f32 %v1622
        %vm1630 = vmor %vm1628, %vm1629
        %v1631 = vsel %vm1630, %v1622, %v1627
        %v1632 = vrsqrt.pop %v1619
        %v1633 = vmul.f32 %v1632, %v1619
        %v1634 = vmul.f32 %v1633, %v1632
        %v1635 = vmul.f32 0.5, %v1634
        %v1636 = vsub.f32 1.5, %v1635
        %v1637 = vmul.f32 %v1632, %v1636
        %vm1638 = vweird.f32 %v1619
        %vm1639 = vweird.f32 %v1632
        %vm1640 = vmor %vm1638, %vm1639
        %v1641 = vsel %vm1640, %v1632, %v1637
        %v1642 = vrsqrt.pop %v1620
        %v1643 = vmul.f32 %v1642, %v1620
        %v1644 = vmul.f32 %v1643, %v1642
        %v1645 = vmul.f32 0.5, %v1644
        %v1646 = vsub.f32 1.5, %v1645
        %v1647 = vmul.f32 %v1642, %v1646
        %vm1648 = vweird.f32 %v1620
        %vm1649 = vweird.f32 %v1642
        %vm1650 = vmor %vm1648, %vm1649
        %v1651 = vsel %vm1650, %v1642, %v1647
        %v1652 = vrsqrt.pop %v1621
        %v1653 = vmul.f32 %v1652, %v1621
        %v1654 = vmul.f32 %v1653, %v1652
        %v1655 = vmul.f32 0.5, %v1654
        %v1656 = vsub.f32 1.5, %v1655
        %v1657 = vmul.f32 %v1652, %v1656
        %vm1658 = vweird.f32 %v1621
        %vm1659 = vweird.f32 %v1652
        %vm1660 = vmor %vm1658, %vm1659
        %v1661 = vsel %vm1660, %v1652, %v1657
        %v1662 = vmul.f32 %v1594, %v1631
        %v1663 = vmul.f32 %v1595, %v1641
        %v1664 = vmul.f32 %v1596, %v1651
        %v1665 = vmul.f32 %v1597, %v1661
        %v1667 = vperm.slane %v688, 0
        %v1669 = vmul.f32 %v1662, %v1667
        %v1670 = vmul.f32 %v1663, %v1667
        %v1671 = vmul.f32 %v1664, %v1667
        %v1672 = vmul.f32 %v1665, %v1667
        %v1674 = vperm.slane %v690, 0
        %v1676 = vadd.f32 %v1669, %v1674
        %v1677 = vadd.f32 %v1670, %v1674
        %v1678 = vadd.f32 %v1671, %v1674
        %v1679 = vadd.f32 %v1672, %v1674
        %s1680 = scalar_lea.vmem %s8, 6
        %v1681 = vld [vmem:[%s1680] sm:$0x1]
        %s1682 = scalar_lea.vmem %s8, 7
        %v1683 = vld [vmem:[%s1682] sm:$0x1]
        %s1684 = scalar_lea.vmem %s8, 8
        %v1685 = vld [vmem:[%s1684] sm:$0x1]
        %s1686 = scalar_lea.vmem %s8, 9
        %v1687 = vld [vmem:[%s1686] sm:$0x1]
        %s1688 = scalar_lea.vmem %s8, 10
        %v1689 = vld [vmem:[%s1688] sm:$0x1]
        %s1690 = scalar_lea.vmem %s8, 11
        %v1691 = vld [vmem:[%s1690] sm:$0x1]
        %s1692 = scalar_lea.vmem %s5, 192
        %v1693 = vld [vmem:[%s1692] sm:$0xff]
        %v1694 = vld [vmem:[%s1692 + $0x8] sm:$0xff]
        %v1695 = vld [vmem:[%s1692 + $0x10] sm:$0xff]
        %v1696 = vld [vmem:[%s1692 + $0x18] sm:$0xff]
        %s1697 = scalar_lea.vmem %s5, 256
        %v1698 = vld [vmem:[%s1697] sm:$0xff]
        %v1699 = vld [vmem:[%s1697 + $0x8] sm:$0xff]
        %v1700 = vld [vmem:[%s1697 + $0x10] sm:$0xff]
        %v1701 = vld [vmem:[%s1697 + $0x18] sm:$0xff]
        %s1702 = scalar_lea.vmem %s5, 320
        %v1703 = vld [vmem:[%s1702] sm:$0xff]
        %v1704 = vld [vmem:[%s1702 + $0x8] sm:$0xff]
        %v1705 = vld [vmem:[%s1702 + $0x10] sm:$0xff]
        %v1706 = vld [vmem:[%s1702 + $0x18] sm:$0xff]
        %s1707 = scalar_lea.vmem %s6, 6
        %v1708 = vld [vmem:[%s1707] sm:$0x1]
        %s1709 = scalar_lea.vmem %s6, 8
        %v1710 = vld [vmem:[%s1709] sm:$0x1]
        %s1711 = scalar_lea.vmem %s6, 10
        %v1712 = vld [vmem:[%s1711] sm:$0x1]
        %s1713 = scalar_lea.vmem %s7, 32
        %v1714 = vld [vmem:[%s1713] sm:$0xff]
        %v1715 = vld [vmem:[%s1713 + $0x8] sm:$0xff]
        %v1717 = vperm.slane %v1708, 0
        %v1720 = vsel %vm715, %v1676, 0
        %v1723 = vsel %vm715, %v1677, 0
        %v1726 = vsel %vm715, %v1678, 0
        %v1729 = vsel %vm715, %v1679, 0
        %1731 = vmatpush.msra.mxu0 0.0
        %1732 = vmatpush.msra.mxu0 0.0
        %1733 = vmatpush.msra.mxu0 0.0
        %1734 = vmatpush.msra.mxu0 0.0
        %1735 = vmatpush.msra.mxu0 0.0
        %1736 = vmatpush.msra.mxu0 0.0
        %1737 = vmatpush.msra.mxu0 0.0
        %1738 = vmatpush.msra.mxu0 0.0
        %1739 = vmatpush.msra.mxu0 0.0
        %1740 = vmatpush.msra.mxu0 0.0
        %1741 = vmatpush.msra.mxu0 0.0
        %1742 = vmatpush.msra.mxu0 0.0
        %1743 = vmatpush.msra.mxu0 %v1696
        %1744 = vmatpush.msra.mxu0 %v1695
        %1745 = vmatpush.msra.mxu0 %v1694
        %1746 = vmatpush.msra.mxu0 %v1693
        %1747 = vmatmul.f32.gmra.mxu0 %v1720
        %v1748 = vpop.f32.mrf.mxu0
        %v1749 = vadd.f32 %v1717, %v1748
        %1750 = vmatmul.f32.gmra.mxu0 %v1723
        %v1751 = vpop.f32.mrf.mxu0
        %v1752 = vadd.f32 %v1717, %v1751
        %1753 = vmatmul.f32.gmra.mxu0 %v1726
        %v1754 = vpop.f32.mrf.mxu0
        %v1755 = vadd.f32 %v1717, %v1754
        %1756 = vmatmul.f32.gmra.mxu0 %v1729
        %v1757 = vpop.f32.mrf.mxu0
        %v1758 = vadd.f32 %v1717, %v1757
        %1759 = vdwg.mxu0
        %v1761 = vperm.slane %v1710, 0
        %1763 = vmatpush.msra.mxu0 0.0
        %1764 = vmatpush.msra.mxu0 0.0
        %1765 = vmatpush.msra.mxu0 0.0
        %1766 = vmatpush.msra.mxu0 0.0
        %1767 = vmatpush.msra.mxu0 0.0
        %1768 = vmatpush.msra.mxu0 0.0
        %1769 = vmatpush.msra.mxu0 0.0
        %1770 = vmatpush.msra.mxu0 0.0
        %1771 = vmatpush.msra.mxu0 0.0
        %1772 = vmatpush.msra.mxu0 0.0
        %1773 = vmatpush.msra.mxu0 0.0
        %1774 = vmatpush.msra.mxu0 0.0
        %1775 = vmatpush.msra.mxu0 %v1701
        %1776 = vmatpush.msra.mxu0 %v1700
        %1777 = vmatpush.msra.mxu0 %v1699
        %1778 = vmatpush.msra.mxu0 %v1698
        %1779 = vmatmul.f32.gmra.mxu0 %v1720
        %v1780 = vpop.f32.mrf.mxu0
        %v1781 = vadd.f32 %v1761, %v1780
        %1782 = vmatmul.f32.gmra.mxu0 %v1723
        %v1783 = vpop.f32.mrf.mxu0
        %v1784 = vadd.f32 %v1761, %v1783
        %1785 = vmatmul.f32.gmra.mxu0 %v1726
        %v1786 = vpop.f32.mrf.mxu0
        %v1787 = vadd.f32 %v1761, %v1786
        %1788 = vmatmul.f32.gmra.mxu0 %v1729
        %v1789 = vpop.f32.mrf.mxu0
        %v1790 = vadd.f32 %v1761, %v1789
        %1791 = vdwg.mxu0
        %v1793 = vperm.slane %v1712, 0
        %1795 = vmatpush.msra.mxu0 0.0
        %1796 = vmatpush.msra.mxu0 0.0
        %1797 = vmatpush.msra.mxu0 0.0
        %1798 = vmatpush.msra.mxu0 0.0
        %1799 = vmatpush.msra.mxu0 0.0
        %1800 = vmatpush.msra.mxu0 0.0
        %1801 = vmatpush.msra.mxu0 0.0
        %1802 = vmatpush.msra.mxu0 0.0
        %1803 = vmatpush.msra.mxu0 0.0
        %1804 = vmatpush.msra.mxu0 0.0
        %1805 = vmatpush.msra.mxu0 0.0
        %1806 = vmatpush.msra.mxu0 0.0
        %1807 = vmatpush.msra.mxu0 %v1706
        %1808 = vmatpush.msra.mxu0 %v1705
        %1809 = vmatpush.msra.mxu0 %v1704
        %1810 = vmatpush.msra.mxu0 %v1703
        %1811 = vmatmul.f32.gmra.mxu0 %v1720
        %v1812 = vpop.f32.mrf.mxu0
        %v1813 = vadd.f32 %v1793, %v1812
        %1814 = vmatmul.f32.gmra.mxu0 %v1723
        %v1815 = vpop.f32.mrf.mxu0
        %v1816 = vadd.f32 %v1793, %v1815
        %1817 = vmatmul.f32.gmra.mxu0 %v1726
        %v1818 = vpop.f32.mrf.mxu0
        %v1819 = vadd.f32 %v1793, %v1818
        %1820 = vmatmul.f32.gmra.mxu0 %v1729
        %v1821 = vpop.f32.mrf.mxu0
        %v1822 = vadd.f32 %v1793, %v1821
        %1823 = vdwg.mxu0
        %v1825 = vsel %vm821, %v1749, 0
        %v1828 = vsel %vm821, %v1752, 0
        %v1831 = vsel %vm821, %v1755, 0
        %v1834 = vsel %vm821, %v1758, 0
        %v1837 = vsel %vm821, %v1781, 0
        %v1840 = vsel %vm821, %v1784, 0
        %v1843 = vsel %vm821, %v1787, 0
        %v1846 = vsel %vm821, %v1790, 0
        %1848 = vmatpush.xpose.msra.mxu0 0.0
        %1849 = vmatpush.xpose.msra.mxu0 0.0
        %1850 = vmatpush.xpose.msra.mxu0 0.0
        %1851 = vmatpush.xpose.msra.mxu0 0.0
        %1852 = vmatpush.xpose.msra.mxu0 0.0
        %1853 = vmatpush.xpose.msra.mxu0 0.0
        %1854 = vmatpush.xpose.msra.mxu0 0.0
        %1855 = vmatpush.xpose.msra.mxu0 0.0
        %1856 = vmatpush.xpose.msra.mxu0 0.0
        %1857 = vmatpush.xpose.msra.mxu0 0.0
        %1858 = vmatpush.xpose.msra.mxu0 0.0
        %1859 = vmatpush.xpose.msra.mxu0 0.0
        %1860 = vmatpush.xpose.msra.mxu0 %v1846
        %1861 = vmatpush.xpose.msra.mxu0 %v1843
        %1862 = vmatpush.xpose.msra.mxu0 %v1840
        %1863 = vmatpush.xpose.msra.mxu0 %v1837
        %1864 = vmatmul.f32.gmra.mxu0 %v1825
        %v1865 = vpop.f32.mrf.mxu0
        %v1866 = vadd.f32 0.0, %v1865
        %1867 = vmatmul.f32.gmra.mxu0 %v1828
        %v1868 = vpop.f32.mrf.mxu0
        %v1869 = vadd.f32 0.0, %v1868
        %1870 = vmatmul.f32.gmra.mxu0 %v1831
        %v1871 = vpop.f32.mrf.mxu0
        %v1872 = vadd.f32 0.0, %v1871
        %1873 = vmatmul.f32.gmra.mxu0 %v1834
        %v1874 = vpop.f32.mrf.mxu0
        %v1875 = vadd.f32 0.0, %v1874
        %1876 = vdwg.mxu0
        %v1877 = vmul.f32 %v1866, 0.25
        %v1878 = vmul.f32 %v1869, 0.25
        %v1879 = vmul.f32 %v1872, 0.25
        %v1880 = vmul.f32 %v1875, 0.25
        %v1881 = vadd.f32 %v1877, %v667
        %v1882 = vadd.f32 %v1878, %v668
        %v1883 = vadd.f32 %v1879, %v669
        %v1884 = vadd.f32 %v1880, %v670
        %v1885 = vsel %vm715, %v1881, -inf
        %1886 = vmax.xlane.f32.xlu0 %v1885
        %v1887 = vpop.xlane.xlu0 %1886
        %v1888 = vsel %vm715, %v1882, -inf
        %1889 = vmax.xlane.f32.xlu0 %v1888
        %v1890 = vpop.xlane.xlu0 %1889
        %v1891 = vsel %vm715, %v1883, -inf
        %1892 = vmax.xlane.f32.xlu0 %v1891
        %v1893 = vpop.xlane.xlu0 %1892
        %v1894 = vsel %vm715, %v1884, -inf
        %1895 = vmax.xlane.f32.xlu0 %v1894
        %v1896 = vpop.xlane.xlu0 %1895
        %v1897 = vsub.f32 %v1881, %v1887
        %v1898 = vsub.f32 %v1882, %v1890
        %v1899 = vsub.f32 %v1883, %v1893
        %v1900 = vsub.f32 %v1884, %v1896
        %v1901 = vmul.f32 %v1897, 1.442695
        %v1902 = vpow.pop %v1901
        %v1903 = vmul.f32 %v1898, 1.442695
        %v1904 = vpow.pop %v1903
        %v1905 = vmul.f32 %v1899, 1.442695
        %v1906 = vpow.pop %v1905
        %v1907 = vmul.f32 %v1900, 1.442695
        %v1908 = vpow.pop %v1907
        %v1909 = vsel %vm715, %v1902, 0.0
        %1910 = vadd.xlane.f32.xlu0 %v1909
        %v1911 = vpop.xlane.xlu0 %1910
        %v1912 = vsel %vm715, %v1904, 0.0
        %1913 = vadd.xlane.f32.xlu0 %v1912
        %v1914 = vpop.xlane.xlu0 %1913
        %v1915 = vsel %vm715, %v1906, 0.0
        %1916 = vadd.xlane.f32.xlu0 %v1915
        %v1917 = vpop.xlane.xlu0 %1916
        %v1918 = vsel %vm715, %v1908, 0.0
        %1919 = vadd.xlane.f32.xlu0 %v1918
        %v1920 = vpop.xlane.xlu0 %1919
        %v1921 = vrcp.pop %v1911
        %v1922 = vrcp.pop %v1914
        %v1923 = vrcp.pop %v1917
        %v1924 = vrcp.pop %v1920
        %v1925 = vmul.f32 %v1902, %v1921
        %v1926 = vmul.f32 %v1904, %v1922
        %v1927 = vmul.f32 %v1906, %v1923
        %v1928 = vmul.f32 %v1908, %v1924
        %v1930 = vsel %vm715, %v1925, 0
        %v1933 = vsel %vm715, %v1926, 0
        %v1936 = vsel %vm715, %v1927, 0
        %v1939 = vsel %vm715, %v1928, 0
        %1941 = vmatpush.msra.mxu0 0.0
        %1942 = vmatpush.msra.mxu0 0.0
        %1943 = vmatpush.msra.mxu0 0.0
        %1944 = vmatpush.msra.mxu0 0.0
        %1945 = vmatpush.msra.mxu0 0.0
        %1946 = vmatpush.msra.mxu0 0.0
        %1947 = vmatpush.msra.mxu0 0.0
        %1948 = vmatpush.msra.mxu0 0.0
        %1949 = vmatpush.msra.mxu0 0.0
        %1950 = vmatpush.msra.mxu0 0.0
        %1951 = vmatpush.msra.mxu0 0.0
        %1952 = vmatpush.msra.mxu0 0.0
        %1953 = vmatpush.msra.mxu0 %v1822
        %1954 = vmatpush.msra.mxu0 %v1819
        %1955 = vmatpush.msra.mxu0 %v1816
        %1956 = vmatpush.msra.mxu0 %v1813
        %1957 = vmatmul.f32.gmra.mxu0 %v1930
        %v1958 = vpop.f32.mrf.mxu0
        %v1959 = vadd.f32 0.0, %v1958
        %1960 = vmatmul.f32.gmra.mxu0 %v1933
        %v1961 = vpop.f32.mrf.mxu0
        %v1962 = vadd.f32 0.0, %v1961
        %1963 = vmatmul.f32.gmra.mxu0 %v1936
        %v1964 = vpop.f32.mrf.mxu0
        %v1965 = vadd.f32 0.0, %v1964
        %1966 = vmatmul.f32.gmra.mxu0 %v1939
        %v1967 = vpop.f32.mrf.mxu0
        %v1968 = vadd.f32 0.0, %v1967
        %1969 = vdwg.mxu0
        %s1970 = scalar_lea.vmem %s5, 224
        %v1971 = vld [vmem:[%s1970] sm:$0xff]
        %v1972 = vld [vmem:[%s1970 + $0x8] sm:$0xff]
        %v1973 = vld [vmem:[%s1970 + $0x10] sm:$0xff]
        %v1974 = vld [vmem:[%s1970 + $0x18] sm:$0xff]
        %s1975 = scalar_lea.vmem %s5, 288
        %v1976 = vld [vmem:[%s1975] sm:$0xff]
        %v1977 = vld [vmem:[%s1975 + $0x8] sm:$0xff]
        %v1978 = vld [vmem:[%s1975 + $0x10] sm:$0xff]
        %v1979 = vld [vmem:[%s1975 + $0x18] sm:$0xff]
        %s1980 = scalar_lea.vmem %s5, 352
        %v1981 = vld [vmem:[%s1980] sm:$0xff]
        %v1982 = vld [vmem:[%s1980 + $0x8] sm:$0xff]
        %v1983 = vld [vmem:[%s1980 + $0x10] sm:$0xff]
        %v1984 = vld [vmem:[%s1980 + $0x18] sm:$0xff]
        %s1985 = scalar_lea.vmem %s6, 7
        %v1986 = vld [vmem:[%s1985] sm:$0x1]
        %s1987 = scalar_lea.vmem %s6, 9
        %v1988 = vld [vmem:[%s1987] sm:$0x1]
        %s1989 = scalar_lea.vmem %s6, 11
        %v1990 = vld [vmem:[%s1989] sm:$0x1]
        %s1991 = scalar_lea.vmem %s7, 48
        %v1992 = vld [vmem:[%s1991] sm:$0xff]
        %v1993 = vld [vmem:[%s1991 + $0x8] sm:$0xff]
        %v1995 = vperm.slane %v1986, 0
        %1997 = vmatpush.msra.mxu0 0.0
        %1998 = vmatpush.msra.mxu0 0.0
        %1999 = vmatpush.msra.mxu0 0.0
        %2000 = vmatpush.msra.mxu0 0.0
        %2001 = vmatpush.msra.mxu0 0.0
        %2002 = vmatpush.msra.mxu0 0.0
        %2003 = vmatpush.msra.mxu0 0.0
        %2004 = vmatpush.msra.mxu0 0.0
        %2005 = vmatpush.msra.mxu0 0.0
        %2006 = vmatpush.msra.mxu0 0.0
        %2007 = vmatpush.msra.mxu0 0.0
        %2008 = vmatpush.msra.mxu0 0.0
        %2009 = vmatpush.msra.mxu0 %v1974
        %2010 = vmatpush.msra.mxu0 %v1973
        %2011 = vmatpush.msra.mxu0 %v1972
        %2012 = vmatpush.msra.mxu0 %v1971
        %2013 = vmatmul.f32.gmra.mxu0 %v1720
        %v2014 = vpop.f32.mrf.mxu0
        %v2015 = vadd.f32 %v1995, %v2014
        %2016 = vmatmul.f32.gmra.mxu0 %v1723
        %v2017 = vpop.f32.mrf.mxu0
        %v2018 = vadd.f32 %v1995, %v2017
        %2019 = vmatmul.f32.gmra.mxu0 %v1726
        %v2020 = vpop.f32.mrf.mxu0
        %v2021 = vadd.f32 %v1995, %v2020
        %2022 = vmatmul.f32.gmra.mxu0 %v1729
        %v2023 = vpop.f32.mrf.mxu0
        %v2024 = vadd.f32 %v1995, %v2023
        %2025 = vdwg.mxu0
        %v2027 = vperm.slane %v1988, 0
        %2029 = vmatpush.msra.mxu0 0.0
        %2030 = vmatpush.msra.mxu0 0.0
        %2031 = vmatpush.msra.mxu0 0.0
        %2032 = vmatpush.msra.mxu0 0.0
        %2033 = vmatpush.msra.mxu0 0.0
        %2034 = vmatpush.msra.mxu0 0.0
        %2035 = vmatpush.msra.mxu0 0.0
        %2036 = vmatpush.msra.mxu0 0.0
        %2037 = vmatpush.msra.mxu0 0.0
        %2038 = vmatpush.msra.mxu0 0.0
        %2039 = vmatpush.msra.mxu0 0.0
        %2040 = vmatpush.msra.mxu0 0.0
        %2041 = vmatpush.msra.mxu0 %v1979
        %2042 = vmatpush.msra.mxu0 %v1978
        %2043 = vmatpush.msra.mxu0 %v1977
        %2044 = vmatpush.msra.mxu0 %v1976
        %2045 = vmatmul.f32.gmra.mxu0 %v1720
        %v2046 = vpop.f32.mrf.mxu0
        %v2047 = vadd.f32 %v2027, %v2046
        %2048 = vmatmul.f32.gmra.mxu0 %v1723
        %v2049 = vpop.f32.mrf.mxu0
        %v2050 = vadd.f32 %v2027, %v2049
        %2051 = vmatmul.f32.gmra.mxu0 %v1726
        %v2052 = vpop.f32.mrf.mxu0
        %v2053 = vadd.f32 %v2027, %v2052
        %2054 = vmatmul.f32.gmra.mxu0 %v1729
        %v2055 = vpop.f32.mrf.mxu0
        %v2056 = vadd.f32 %v2027, %v2055
        %2057 = vdwg.mxu0
        %v2059 = vperm.slane %v1990, 0
        %2061 = vmatpush.msra.mxu0 0.0
        %2062 = vmatpush.msra.mxu0 0.0
        %2063 = vmatpush.msra.mxu0 0.0
        %2064 = vmatpush.msra.mxu0 0.0
        %2065 = vmatpush.msra.mxu0 0.0
        %2066 = vmatpush.msra.mxu0 0.0
        %2067 = vmatpush.msra.mxu0 0.0
        %2068 = vmatpush.msra.mxu0 0.0
        %2069 = vmatpush.msra.mxu0 0.0
        %2070 = vmatpush.msra.mxu0 0.0
        %2071 = vmatpush.msra.mxu0 0.0
        %2072 = vmatpush.msra.mxu0 0.0
        %2073 = vmatpush.msra.mxu0 %v1984
        %2074 = vmatpush.msra.mxu0 %v1983
        %2075 = vmatpush.msra.mxu0 %v1982
        %2076 = vmatpush.msra.mxu0 %v1981
        %2077 = vmatmul.f32.gmra.mxu0 %v1720
        %v2078 = vpop.f32.mrf.mxu0
        %v2079 = vadd.f32 %v2059, %v2078
        %2080 = vmatmul.f32.gmra.mxu0 %v1723
        %v2081 = vpop.f32.mrf.mxu0
        %v2082 = vadd.f32 %v2059, %v2081
        %2083 = vmatmul.f32.gmra.mxu0 %v1726
        %v2084 = vpop.f32.mrf.mxu0
        %v2085 = vadd.f32 %v2059, %v2084
        %2086 = vmatmul.f32.gmra.mxu0 %v1729
        %v2087 = vpop.f32.mrf.mxu0
        %v2088 = vadd.f32 %v2059, %v2087
        %2089 = vdwg.mxu0
        %v2091 = vsel %vm821, %v2015, 0
        %v2094 = vsel %vm821, %v2018, 0
        %v2097 = vsel %vm821, %v2021, 0
        %v2100 = vsel %vm821, %v2024, 0
        %v2103 = vsel %vm821, %v2047, 0
        %v2106 = vsel %vm821, %v2050, 0
        %v2109 = vsel %vm821, %v2053, 0
        %v2112 = vsel %vm821, %v2056, 0
        %2114 = vmatpush.xpose.msra.mxu0 0.0
        %2115 = vmatpush.xpose.msra.mxu0 0.0
        %2116 = vmatpush.xpose.msra.mxu0 0.0
        %2117 = vmatpush.xpose.msra.mxu0 0.0
        %2118 = vmatpush.xpose.msra.mxu0 0.0
        %2119 = vmatpush.xpose.msra.mxu0 0.0
        %2120 = vmatpush.xpose.msra.mxu0 0.0
        %2121 = vmatpush.xpose.msra.mxu0 0.0
        %2122 = vmatpush.xpose.msra.mxu0 0.0
        %2123 = vmatpush.xpose.msra.mxu0 0.0
        %2124 = vmatpush.xpose.msra.mxu0 0.0
        %2125 = vmatpush.xpose.msra.mxu0 0.0
        %2126 = vmatpush.xpose.msra.mxu0 %v2112
        %2127 = vmatpush.xpose.msra.mxu0 %v2109
        %2128 = vmatpush.xpose.msra.mxu0 %v2106
        %2129 = vmatpush.xpose.msra.mxu0 %v2103
        %2130 = vmatmul.f32.gmra.mxu0 %v2091
        %v2131 = vpop.f32.mrf.mxu0
        %v2132 = vadd.f32 0.0, %v2131
        %2133 = vmatmul.f32.gmra.mxu0 %v2094
        %v2134 = vpop.f32.mrf.mxu0
        %v2135 = vadd.f32 0.0, %v2134
        %2136 = vmatmul.f32.gmra.mxu0 %v2097
        %v2137 = vpop.f32.mrf.mxu0
        %v2138 = vadd.f32 0.0, %v2137
        %2139 = vmatmul.f32.gmra.mxu0 %v2100
        %v2140 = vpop.f32.mrf.mxu0
        %v2141 = vadd.f32 0.0, %v2140
        %2142 = vdwg.mxu0
        %v2143 = vmul.f32 %v2132, 0.25
        %v2144 = vmul.f32 %v2135, 0.25
        %v2145 = vmul.f32 %v2138, 0.25
        %v2146 = vmul.f32 %v2141, 0.25
        %v2147 = vadd.f32 %v2143, %v667
        %v2148 = vadd.f32 %v2144, %v668
        %v2149 = vadd.f32 %v2145, %v669
        %v2150 = vadd.f32 %v2146, %v670
        %v2151 = vsel %vm715, %v2147, -inf
        %2152 = vmax.xlane.f32.xlu0 %v2151
        %v2153 = vpop.xlane.xlu0 %2152
        %v2154 = vsel %vm715, %v2148, -inf
        %2155 = vmax.xlane.f32.xlu0 %v2154
        %v2156 = vpop.xlane.xlu0 %2155
        %v2157 = vsel %vm715, %v2149, -inf
        %2158 = vmax.xlane.f32.xlu0 %v2157
        %v2159 = vpop.xlane.xlu0 %2158
        %v2160 = vsel %vm715, %v2150, -inf
        %2161 = vmax.xlane.f32.xlu0 %v2160
        %v2162 = vpop.xlane.xlu0 %2161
        %v2163 = vsub.f32 %v2147, %v2153
        %v2164 = vsub.f32 %v2148, %v2156
        %v2165 = vsub.f32 %v2149, %v2159
        %v2166 = vsub.f32 %v2150, %v2162
        %v2167 = vmul.f32 %v2163, 1.442695
        %v2168 = vpow.pop %v2167
        %v2169 = vmul.f32 %v2164, 1.442695
        %v2170 = vpow.pop %v2169
        %v2171 = vmul.f32 %v2165, 1.442695
        %v2172 = vpow.pop %v2171
        %v2173 = vmul.f32 %v2166, 1.442695
        %v2174 = vpow.pop %v2173
        %v2175 = vsel %vm715, %v2168, 0.0
        %2176 = vadd.xlane.f32.xlu0 %v2175
        %v2177 = vpop.xlane.xlu0 %2176
        %v2178 = vsel %vm715, %v2170, 0.0
        %2179 = vadd.xlane.f32.xlu0 %v2178
        %v2180 = vpop.xlane.xlu0 %2179
        %v2181 = vsel %vm715, %v2172, 0.0
        %2182 = vadd.xlane.f32.xlu0 %v2181
        %v2183 = vpop.xlane.xlu0 %2182
        %v2184 = vsel %vm715, %v2174, 0.0
        %2185 = vadd.xlane.f32.xlu0 %v2184
        %v2186 = vpop.xlane.xlu0 %2185
        %v2187 = vrcp.pop %v2177
        %v2188 = vrcp.pop %v2180
        %v2189 = vrcp.pop %v2183
        %v2190 = vrcp.pop %v2186
        %v2191 = vmul.f32 %v2168, %v2187
        %v2192 = vmul.f32 %v2170, %v2188
        %v2193 = vmul.f32 %v2172, %v2189
        %v2194 = vmul.f32 %v2174, %v2190
        %v2196 = vsel %vm715, %v2191, 0
        %v2199 = vsel %vm715, %v2192, 0
        %v2202 = vsel %vm715, %v2193, 0
        %v2205 = vsel %vm715, %v2194, 0
        %2207 = vmatpush.msra.mxu0 0.0
        %2208 = vmatpush.msra.mxu0 0.0
        %2209 = vmatpush.msra.mxu0 0.0
        %2210 = vmatpush.msra.mxu0 0.0
        %2211 = vmatpush.msra.mxu0 0.0
        %2212 = vmatpush.msra.mxu0 0.0
        %2213 = vmatpush.msra.mxu0 0.0
        %2214 = vmatpush.msra.mxu0 0.0
        %2215 = vmatpush.msra.mxu0 0.0
        %2216 = vmatpush.msra.mxu0 0.0
        %2217 = vmatpush.msra.mxu0 0.0
        %2218 = vmatpush.msra.mxu0 0.0
        %2219 = vmatpush.msra.mxu0 %v2088
        %2220 = vmatpush.msra.mxu0 %v2085
        %2221 = vmatpush.msra.mxu0 %v2082
        %2222 = vmatpush.msra.mxu0 %v2079
        %2223 = vmatmul.f32.gmra.mxu0 %v2196
        %v2224 = vpop.f32.mrf.mxu0
        %v2225 = vadd.f32 0.0, %v2224
        %2226 = vmatmul.f32.gmra.mxu0 %v2199
        %v2227 = vpop.f32.mrf.mxu0
        %v2228 = vadd.f32 0.0, %v2227
        %2229 = vmatmul.f32.gmra.mxu0 %v2202
        %v2230 = vpop.f32.mrf.mxu0
        %v2231 = vadd.f32 0.0, %v2230
        %2232 = vmatmul.f32.gmra.mxu0 %v2205
        %v2233 = vpop.f32.mrf.mxu0
        %v2234 = vadd.f32 0.0, %v2233
        %2235 = vdwg.mxu0
        %v2237 = vsel %vm821, %v2225, 0
        %v2240 = vsel %vm821, %v2228, 0
        %v2243 = vsel %vm821, %v2231, 0
        %v2246 = vsel %vm821, %v2234, 0
        %2248 = vmatpush.msra.mxu0 0.0
        %2249 = vmatpush.msra.mxu0 0.0
        %2250 = vmatpush.msra.mxu0 0.0
        %2251 = vmatpush.msra.mxu0 0.0
        %2252 = vmatpush.msra.mxu0 0.0
        %2253 = vmatpush.msra.mxu0 0.0
        %2254 = vmatpush.msra.mxu0 0.0
        %2255 = vmatpush.msra.mxu0 0.0
        %2256 = vmatpush.msra.mxu0 0.0
        %2257 = vmatpush.msra.mxu0 0.0
        %2258 = vmatpush.msra.mxu0 0.0
        %2259 = vmatpush.msra.mxu0 0.0
        %2260 = vmatpush.msra.mxu0 0.0
        %2261 = vmatpush.msra.mxu0 0.0
        %2262 = vmatpush.msra.mxu0 %v1993
        %2263 = vmatpush.msra.mxu0 %v1992
        %2264 = vmatmul.f32.gmra.mxu0 %v2237
        %v2265 = vpop.f32.mrf.mxu0
        %v2266 = vadd.f32 0.0, %v2265
        %2267 = vmatmul.f32.gmra.mxu0 %v2240
        %v2268 = vpop.f32.mrf.mxu0
        %v2269 = vadd.f32 0.0, %v2268
        %2270 = vmatmul.f32.gmra.mxu0 %v2243
        %v2271 = vpop.f32.mrf.mxu0
        %v2272 = vadd.f32 0.0, %v2271
        %2273 = vmatmul.f32.gmra.mxu0 %v2246
        %v2274 = vpop.f32.mrf.mxu0
        %v2275 = vadd.f32 0.0, %v2274
        %2276 = vdwg.mxu0
        %v2278 = vsel %vm821, %v1959, 0
        %v2281 = vsel %vm821, %v1962, 0
        %v2284 = vsel %vm821, %v1965, 0
        %v2287 = vsel %vm821, %v1968, 0
        %2289 = vmatpush.msra.mxu0 0.0
        %2290 = vmatpush.msra.mxu0 0.0
        %2291 = vmatpush.msra.mxu0 0.0
        %2292 = vmatpush.msra.mxu0 0.0
        %2293 = vmatpush.msra.mxu0 0.0
        %2294 = vmatpush.msra.mxu0 0.0
        %2295 = vmatpush.msra.mxu0 0.0
        %2296 = vmatpush.msra.mxu0 0.0
        %2297 = vmatpush.msra.mxu0 0.0
        %2298 = vmatpush.msra.mxu0 0.0
        %2299 = vmatpush.msra.mxu0 0.0
        %2300 = vmatpush.msra.mxu0 0.0
        %2301 = vmatpush.msra.mxu0 0.0
        %2302 = vmatpush.msra.mxu0 0.0
        %2303 = vmatpush.msra.mxu0 %v1715
        %2304 = vmatpush.msra.mxu0 %v1714
        %2305 = vmatmul.f32.gmra.mxu0 %v2278
        %v2306 = vpop.f32.mrf.mxu0
        %v2307 = vadd.f32 %v2266, %v2306
        %2308 = vmatmul.f32.gmra.mxu0 %v2281
        %v2309 = vpop.f32.mrf.mxu0
        %v2310 = vadd.f32 %v2269, %v2309
        %2311 = vmatmul.f32.gmra.mxu0 %v2284
        %v2312 = vpop.f32.mrf.mxu0
        %v2313 = vadd.f32 %v2272, %v2312
        %2314 = vmatmul.f32.gmra.mxu0 %v2287
        %v2315 = vpop.f32.mrf.mxu0
        %v2316 = vadd.f32 %v2275, %v2315
        %2317 = vdwg.mxu0
        %v2319 = vperm.slane %v1681, 0
        %v2321 = vadd.f32 %v2307, %v2319
        %v2322 = vadd.f32 %v2310, %v2319
        %v2323 = vadd.f32 %v2313, %v2319
        %v2324 = vadd.f32 %v2316, %v2319
        %v2325 = vadd.f32 %v1676, %v2321
        %v2326 = vadd.f32 %v1677, %v2322
        %v2327 = vadd.f32 %v1678, %v2323
        %v2328 = vadd.f32 %v1679, %v2324
        %v2329 = vsel %vm715, %v2325, 0.0
        %2330 = vadd.xlane.f32.xlu0 %v2329
        %v2331 = vpop.xlane.xlu0 %2330
        %v2332 = vsel %vm715, %v2326, 0.0
        %2333 = vadd.xlane.f32.xlu0 %v2332
        %v2334 = vpop.xlane.xlu0 %2333
        %v2335 = vsel %vm715, %v2327, 0.0
        %2336 = vadd.xlane.f32.xlu0 %v2335
        %v2337 = vpop.xlane.xlu0 %2336
        %v2338 = vsel %vm715, %v2328, 0.0
        %2339 = vadd.xlane.f32.xlu0 %v2338
        %v2340 = vpop.xlane.xlu0 %2339
        %v2341 = vmul.f32 %v2331, %v1345
        %v2342 = vmul.f32 %v2334, %v1345
        %v2343 = vmul.f32 %v2337, %v1345
        %v2344 = vmul.f32 %v2340, %v1345
        %v2345 = vsub.f32 %v2325, %v2341
        %v2346 = vsub.f32 %v2326, %v2342
        %v2347 = vsub.f32 %v2327, %v2343
        %v2348 = vsub.f32 %v2328, %v2344
        %v2349 = vmul.f32 %v2345, %v2345
        %v2350 = vmul.f32 %v2346, %v2346
        %v2351 = vmul.f32 %v2347, %v2347
        %v2352 = vmul.f32 %v2348, %v2348
        %v2353 = vsel %vm715, %v2349, 0.0
        %2354 = vadd.xlane.f32.xlu0 %v2353
        %v2355 = vpop.xlane.xlu0 %2354
        %v2356 = vsel %vm715, %v2350, 0.0
        %2357 = vadd.xlane.f32.xlu0 %v2356
        %v2358 = vpop.xlane.xlu0 %2357
        %v2359 = vsel %vm715, %v2351, 0.0
        %2360 = vadd.xlane.f32.xlu0 %v2359
        %v2361 = vpop.xlane.xlu0 %2360
        %v2362 = vsel %vm715, %v2352, 0.0
        %2363 = vadd.xlane.f32.xlu0 %v2362
        %v2364 = vpop.xlane.xlu0 %2363
        %v2365 = vmul.f32 %v2355, %v1345
        %v2366 = vmul.f32 %v2358, %v1345
        %v2367 = vmul.f32 %v2361, %v1345
        %v2368 = vmul.f32 %v2364, %v1345
        %v2369 = vadd.f32 %v2365, 1e-12
        %v2370 = vadd.f32 %v2366, 1e-12
        %v2371 = vadd.f32 %v2367, 1e-12
        %v2372 = vadd.f32 %v2368, 1e-12
        %v2373 = vrsqrt.pop %v2369
        %v2374 = vmul.f32 %v2373, %v2369
        %v2375 = vmul.f32 %v2374, %v2373
        %v2376 = vmul.f32 0.5, %v2375
        %v2377 = vsub.f32 1.5, %v2376
        %v2378 = vmul.f32 %v2373, %v2377
        %vm2379 = vweird.f32 %v2369
        %vm2380 = vweird.f32 %v2373
        %vm2381 = vmor %vm2379, %vm2380
        %v2382 = vsel %vm2381, %v2373, %v2378
        %v2383 = vrsqrt.pop %v2370
        %v2384 = vmul.f32 %v2383, %v2370
        %v2385 = vmul.f32 %v2384, %v2383
        %v2386 = vmul.f32 0.5, %v2385
        %v2387 = vsub.f32 1.5, %v2386
        %v2388 = vmul.f32 %v2383, %v2387
        %vm2389 = vweird.f32 %v2370
        %vm2390 = vweird.f32 %v2383
        %vm2391 = vmor %vm2389, %vm2390
        %v2392 = vsel %vm2391, %v2383, %v2388
        %v2393 = vrsqrt.pop %v2371
        %v2394 = vmul.f32 %v2393, %v2371
        %v2395 = vmul.f32 %v2394, %v2393
        %v2396 = vmul.f32 0.5, %v2395
        %v2397 = vsub.f32 1.5, %v2396
        %v2398 = vmul.f32 %v2393, %v2397
        %vm2399 = vweird.f32 %v2371
        %vm2400 = vweird.f32 %v2393
        %vm2401 = vmor %vm2399, %vm2400
        %v2402 = vsel %vm2401, %v2393, %v2398
        %v2403 = vrsqrt.pop %v2372
        %v2404 = vmul.f32 %v2403, %v2372
        %v2405 = vmul.f32 %v2404, %v2403
        %v2406 = vmul.f32 0.5, %v2405
        %v2407 = vsub.f32 1.5, %v2406
        %v2408 = vmul.f32 %v2403, %v2407
        %vm2409 = vweird.f32 %v2372
        %vm2410 = vweird.f32 %v2403
        %vm2411 = vmor %vm2409, %vm2410
        %v2412 = vsel %vm2411, %v2403, %v2408
        %v2413 = vmul.f32 %v2345, %v2382
        %v2414 = vmul.f32 %v2346, %v2392
        %v2415 = vmul.f32 %v2347, %v2402
        %v2416 = vmul.f32 %v2348, %v2412
        %v2418 = vperm.slane %v1683, 0
        %v2420 = vmul.f32 %v2413, %v2418
        %v2421 = vmul.f32 %v2414, %v2418
        %v2422 = vmul.f32 %v2415, %v2418
        %v2423 = vmul.f32 %v2416, %v2418
        %v2425 = vperm.slane %v1685, 0
        %v2427 = vadd.f32 %v2420, %v2425
        %v2428 = vadd.f32 %v2421, %v2425
        %v2429 = vadd.f32 %v2422, %v2425
        %v2430 = vadd.f32 %v2423, %v2425
        %s2431 = scalar_lea.vmem %s9, 32
        %v2432 = vld [vmem:[%s2431] sm:$0xff]
        %v2433 = vld [vmem:[%s2431 + $0x8] sm:$0xff]
        %v2434 = vld [vmem:[%s2431 + $0x10] sm:$0xff]
        %v2435 = vld [vmem:[%s2431 + $0x18] sm:$0xff]
        %s2436 = scalar_lea.vmem %s10, 1
        %v2437 = vld [vmem:[%s2436] sm:$0x1]
        %v2439 = vperm.slane %v2437, 0
        %v2442 = vsel %vm715, %v2427, 0
        %v2445 = vsel %vm715, %v2428, 0
        %v2448 = vsel %vm715, %v2429, 0
        %v2451 = vsel %vm715, %v2430, 0
        %2453 = vmatpush.msra.mxu0 0.0
        %2454 = vmatpush.msra.mxu0 0.0
        %2455 = vmatpush.msra.mxu0 0.0
        %2456 = vmatpush.msra.mxu0 0.0
        %2457 = vmatpush.msra.mxu0 0.0
        %2458 = vmatpush.msra.mxu0 0.0
        %2459 = vmatpush.msra.mxu0 0.0
        %2460 = vmatpush.msra.mxu0 0.0
        %2461 = vmatpush.msra.mxu0 0.0
        %2462 = vmatpush.msra.mxu0 0.0
        %2463 = vmatpush.msra.mxu0 0.0
        %2464 = vmatpush.msra.mxu0 0.0
        %2465 = vmatpush.msra.mxu0 %v2435
        %2466 = vmatpush.msra.mxu0 %v2434
        %2467 = vmatpush.msra.mxu0 %v2433
        %2468 = vmatpush.msra.mxu0 %v2432
        %2469 = vmatmul.f32.gmra.mxu0 %v2442
        %v2470 = vpop.f32.mrf.mxu0
        %v2471 = vadd.f32 %v2439, %v2470
        %2472 = vmatmul.f32.gmra.mxu0 %v2445
        %v2473 = vpop.f32.mrf.mxu0
        %v2474 = vadd.f32 %v2439, %v2473
        %2475 = vmatmul.f32.gmra.mxu0 %v2448
        %v2476 = vpop.f32.mrf.mxu0
        %v2477 = vadd.f32 %v2439, %v2476
        %2478 = vmatmul.f32.gmra.mxu0 %v2451
        %v2479 = vpop.f32.mrf.mxu0
        %v2480 = vadd.f32 %v2439, %v2479
        %2481 = vdwg.mxu0
        %v2482 = vmul.f32 %v2471, 0.5
        %v2483 = vmul.f32 %v2474, 0.5
        %v2484 = vmul.f32 %v2477, 0.5
        %v2485 = vmul.f32 %v2480, 0.5
        %v2486 = vmul.f32 %v2471, 0.044715
        %v2487 = vmul.f32 %v2474, 0.044715
        %v2488 = vmul.f32 %v2477, 0.044715
        %v2489 = vmul.f32 %v2480, 0.044715
        %v2490 = vmul.f32 %v2486, %v2471
        %v2491 = vmul.f32 %v2487, %v2474
        %v2492 = vmul.f32 %v2488, %v2477
        %v2493 = vmul.f32 %v2489, %v2480
        %v2494 = vmul.f32 %v2490, %v2471
        %v2495 = vmul.f32 %v2491, %v2474
        %v2496 = vmul.f32 %v2492, %v2477
        %v2497 = vmul.f32 %v2493, %v2480
        %v2498 = vadd.f32 %v2471, %v2494
        %v2499 = vadd.f32 %v2474, %v2495
        %v2500 = vadd.f32 %v2477, %v2496
        %v2501 = vadd.f32 %v2480, %v2497
        %v2502 = vmul.f32 %v2498, 0.7978846
        %v2503 = vmul.f32 %v2499, 0.7978846
        %v2504 = vmul.f32 %v2500, 0.7978846
        %v2505 = vmul.f32 %v2501, 0.7978846
        %v2506 = vtanh.pop %v2502
        %v2507 = vtanh.pop %v2503
        %v2508 = vtanh.pop %v2504
        %v2509 = vtanh.pop %v2505
        %v2510 = vadd.f32 %v2506, 1.0
        %v2511 = vadd.f32 %v2507, 1.0
        %v2512 = vadd.f32 %v2508, 1.0
        %v2513 = vadd.f32 %v2509, 1.0
        %v2514 = vmul.f32 %v2482, %v2510
        %v2515 = vmul.f32 %v2483, %v2511
        %v2516 = vmul.f32 %v2484, %v2512
        %v2517 = vmul.f32 %v2485, %v2513
        %s2518 = scalar_lea.vmem %s11, 64
        %v2519 = vld [vmem:[%s2518] sm:$0xff]
        %v2520 = vld [vmem:[%s2518 + $0x8] sm:$0xff]
        %v2521 = vld [vmem:[%s2518 + $0x10] sm:$0xff]
        %v2522 = vld [vmem:[%s2518 + $0x18] sm:$0xff]
        %v2523 = vld [vmem:[%s2518 + $0x20] sm:$0xff]
        %v2524 = vld [vmem:[%s2518 + $0x28] sm:$0xff]
        %v2525 = vld [vmem:[%s2518 + $0x30] sm:$0xff]
        %v2526 = vld [vmem:[%s2518 + $0x38] sm:$0xff]
        %v2528 = vperm.slane %v1687, 0
        %v2531 = vsel %vm1532, %v2514, 0
        %v2534 = vsel %vm1532, %v2515, 0
        %v2537 = vsel %vm1532, %v2516, 0
        %v2540 = vsel %vm1532, %v2517, 0
        %2542 = vmatpush.msra.mxu0 0.0
        %2543 = vmatpush.msra.mxu0 0.0
        %2544 = vmatpush.msra.mxu0 0.0
        %2545 = vmatpush.msra.mxu0 0.0
        %2546 = vmatpush.msra.mxu0 0.0
        %2547 = vmatpush.msra.mxu0 0.0
        %2548 = vmatpush.msra.mxu0 0.0
        %2549 = vmatpush.msra.mxu0 0.0
        %2550 = vmatpush.msra.mxu0 %v2526
        %2551 = vmatpush.msra.mxu0 %v2525
        %2552 = vmatpush.msra.mxu0 %v2524
        %2553 = vmatpush.msra.mxu0 %v2523
        %2554 = vmatpush.msra.mxu0 %v2522
        %2555 = vmatpush.msra.mxu0 %v2521
        %2556 = vmatpush.msra.mxu0 %v2520
        %2557 = vmatpush.msra.mxu0 %v2519
        %2558 = vmatmul.f32.gmra.mxu0 %v2531
        %v2559 = vpop.f32.mrf.mxu0
        %v2560 = vadd.f32 %v2528, %v2559
        %2561 = vmatmul.f32.gmra.mxu0 %v2534
        %v2562 = vpop.f32.mrf.mxu0
        %v2563 = vadd.f32 %v2528, %v2562
        %2564 = vmatmul.f32.gmra.mxu0 %v2537
        %v2565 = vpop.f32.mrf.mxu0
        %v2566 = vadd.f32 %v2528, %v2565
        %2567 = vmatmul.f32.gmra.mxu0 %v2540
        %v2568 = vpop.f32.mrf.mxu0
        %v2569 = vadd.f32 %v2528, %v2568
        %2570 = vdwg.mxu0
        %v2571 = vadd.f32 %v2427, %v2560
        %v2572 = vadd.f32 %v2428, %v2563
        %v2573 = vadd.f32 %v2429, %v2566
        %v2574 = vadd.f32 %v2430, %v2569
        %v2575 = vsel %vm715, %v2571, 0.0
        %2576 = vadd.xlane.f32.xlu0 %v2575
        %v2577 = vpop.xlane.xlu0 %2576
        %v2578 = vsel %vm715, %v2572, 0.0
        %2579 = vadd.xlane.f32.xlu0 %v2578
        %v2580 = vpop.xlane.xlu0 %2579
        %v2581 = vsel %vm715, %v2573, 0.0
        %2582 = vadd.xlane.f32.xlu0 %v2581
        %v2583 = vpop.xlane.xlu0 %2582
        %v2584 = vsel %vm715, %v2574, 0.0
        %2585 = vadd.xlane.f32.xlu0 %v2584
        %v2586 = vpop.xlane.xlu0 %2585
        %v2587 = vmul.f32 %v2577, %v1345
        %v2588 = vmul.f32 %v2580, %v1345
        %v2589 = vmul.f32 %v2583, %v1345
        %v2590 = vmul.f32 %v2586, %v1345
        %v2591 = vsub.f32 %v2571, %v2587
        %v2592 = vsub.f32 %v2572, %v2588
        %v2593 = vsub.f32 %v2573, %v2589
        %v2594 = vsub.f32 %v2574, %v2590
        %v2595 = vmul.f32 %v2591, %v2591
        %v2596 = vmul.f32 %v2592, %v2592
        %v2597 = vmul.f32 %v2593, %v2593
        %v2598 = vmul.f32 %v2594, %v2594
        %v2599 = vsel %vm715, %v2595, 0.0
        %2600 = vadd.xlane.f32.xlu0 %v2599
        %v2601 = vpop.xlane.xlu0 %2600
        %v2602 = vsel %vm715, %v2596, 0.0
        %2603 = vadd.xlane.f32.xlu0 %v2602
        %v2604 = vpop.xlane.xlu0 %2603
        %v2605 = vsel %vm715, %v2597, 0.0
        %2606 = vadd.xlane.f32.xlu0 %v2605
        %v2607 = vpop.xlane.xlu0 %2606
        %v2608 = vsel %vm715, %v2598, 0.0
        %2609 = vadd.xlane.f32.xlu0 %v2608
        %v2610 = vpop.xlane.xlu0 %2609
        %v2611 = vmul.f32 %v2601, %v1345
        %v2612 = vmul.f32 %v2604, %v1345
        %v2613 = vmul.f32 %v2607, %v1345
        %v2614 = vmul.f32 %v2610, %v1345
        %v2615 = vadd.f32 %v2611, 1e-12
        %v2616 = vadd.f32 %v2612, 1e-12
        %v2617 = vadd.f32 %v2613, 1e-12
        %v2618 = vadd.f32 %v2614, 1e-12
        %v2619 = vrsqrt.pop %v2615
        %v2620 = vmul.f32 %v2619, %v2615
        %v2621 = vmul.f32 %v2620, %v2619
        %v2622 = vmul.f32 0.5, %v2621
        %v2623 = vsub.f32 1.5, %v2622
        %v2624 = vmul.f32 %v2619, %v2623
        %vm2625 = vweird.f32 %v2615
        %vm2626 = vweird.f32 %v2619
        %vm2627 = vmor %vm2625, %vm2626
        %v2628 = vsel %vm2627, %v2619, %v2624
        %v2629 = vrsqrt.pop %v2616
        %v2630 = vmul.f32 %v2629, %v2616
        %v2631 = vmul.f32 %v2630, %v2629
        %v2632 = vmul.f32 0.5, %v2631
        %v2633 = vsub.f32 1.5, %v2632
        %v2634 = vmul.f32 %v2629, %v2633
        %vm2635 = vweird.f32 %v2616
        %vm2636 = vweird.f32 %v2629
        %vm2637 = vmor %vm2635, %vm2636
        %v2638 = vsel %vm2637, %v2629, %v2634
        %v2639 = vrsqrt.pop %v2617
        %v2640 = vmul.f32 %v2639, %v2617
        %v2641 = vmul.f32 %v2640, %v2639
        %v2642 = vmul.f32 0.5, %v2641
        %v2643 = vsub.f32 1.5, %v2642
        %v2644 = vmul.f32 %v2639, %v2643
        %vm2645 = vweird.f32 %v2617
        %vm2646 = vweird.f32 %v2639
        %vm2647 = vmor %vm2645, %vm2646
        %v2648 = vsel %vm2647, %v2639, %v2644
        %v2649 = vrsqrt.pop %v2618
        %v2650 = vmul.f32 %v2649, %v2618
        %v2651 = vmul.f32 %v2650, %v2649
        %v2652 = vmul.f32 0.5, %v2651
        %v2653 = vsub.f32 1.5, %v2652
        %v2654 = vmul.f32 %v2649, %v2653
        %vm2655 = vweird.f32 %v2618
        %vm2656 = vweird.f32 %v2649
        %vm2657 = vmor %vm2655, %vm2656
        %v2658 = vsel %vm2657, %v2649, %v2654
        %v2659 = vmul.f32 %v2591, %v2628
        %v2660 = vmul.f32 %v2592, %v2638
        %v2661 = vmul.f32 %v2593, %v2648
        %v2662 = vmul.f32 %v2594, %v2658
        %v2664 = vperm.slane %v1689, 0
        %v2666 = vmul.f32 %v2659, %v2664
        %v2667 = vmul.f32 %v2660, %v2664
        %v2668 = vmul.f32 %v2661, %v2664
        %v2669 = vmul.f32 %v2662, %v2664
        %v2671 = vperm.slane %v1691, 0
        %v2673 = vadd.f32 %v2666, %v2671
        %v2674 = vadd.f32 %v2667, %v2671
        %v2675 = vadd.f32 %v2668, %v2671
        %v2676 = vadd.f32 %v2669, %v2671
        %v2677 = vld [vmem:[%s12] sm:$0xff]
        %v2678 = vld [vmem:[%s12 + $0x8] sm:$0xff]
        %v2679 = vld [vmem:[%s12 + $0x10] sm:$0xff]
        %v2680 = vld [vmem:[%s12 + $0x18] sm:$0xff]
        %v2681 = vld [vmem:[%s13] sm:$0x1]
        %v2682 = vld [vmem:[%s14] sm:$0xff]
        %v2683 = vld [vmem:[%s14 + $0x8] sm:$0xff]
        %v2685 = vperm.slane %v2681, 0
        %v2688 = vsel %vm715, %v2673, 0
        %v2691 = vsel %vm715, %v2674, 0
        %v2694 = vsel %vm715, %v2675, 0
        %v2697 = vsel %vm715, %v2676, 0
        %2699 = vmatpush.msra.mxu0 0.0
        %2700 = vmatpush.msra.mxu0 0.0
        %2701 = vmatpush.msra.mxu0 0.0
        %2702 = vmatpush.msra.mxu0 0.0
        %2703 = vmatpush.msra.mxu0 0.0
        %2704 = vmatpush.msra.mxu0 0.0
        %2705 = vmatpush.msra.mxu0 0.0
        %2706 = vmatpush.msra.mxu0 0.0
        %2707 = vmatpush.msra.mxu0 0.0
        %2708 = vmatpush.msra.mxu0 0.0
        %2709 = vmatpush.msra.mxu0 0.0
        %2710 = vmatpush.msra.mxu0 0.0
        %2711 = vmatpush.msra.mxu0 %v2680
        %2712 = vmatpush.msra.mxu0 %v2679
        %2713 = vmatpush.msra.mxu0 %v2678
        %2714 = vmatpush.msra.mxu0 %v2677
        %2715 = vmatmul.f32.gmra.mxu0 %v2688
        %v2716 = vpop.f32.mrf.mxu0
        %v2717 = vadd.f32 %v2685, %v2716
        %2718 = vmatmul.f32.gmra.mxu0 %v2691
        %v2719 = vpop.f32.mrf.mxu0
        %v2720 = vadd.f32 %v2685, %v2719
        %2721 = vmatmul.f32.gmra.mxu0 %v2694
        %v2722 = vpop.f32.mrf.mxu0
        %v2723 = vadd.f32 %v2685, %v2722
        %2724 = vmatmul.f32.gmra.mxu0 %v2697
        %v2725 = vpop.f32.mrf.mxu0
        %v2726 = vadd.f32 %v2685, %v2725
        %2727 = vdwg.mxu0
        %v2728 = vtanh.pop %v2717
        %v2729 = vtanh.pop %v2720
        %v2730 = vtanh.pop %v2723
        %v2731 = vtanh.pop %v2726
        %v2733 = vsel %vm821, %v2728, 0
        %v2736 = vsel %vm821, %v2729, 0
        %v2739 = vsel %vm821, %v2730, 0
        %v2742 = vsel %vm821, %v2731, 0
        %2744 = vmatpush.msra.mxu0 0.0
        %2745 = vmatpush.msra.mxu0 0.0
        %2746 = vmatpush.msra.mxu0 0.0
        %2747 = vmatpush.msra.mxu0 0.0
        %2748 = vmatpush.msra.mxu0 0.0
        %2749 = vmatpush.msra.mxu0 0.0
        %2750 = vmatpush.msra.mxu0 0.0
        %2751 = vmatpush.msra.mxu0 0.0
        %2752 = vmatpush.msra.mxu0 0.0
        %2753 = vmatpush.msra.mxu0 0.0
        %2754 = vmatpush.msra.mxu0 0.0
        %2755 = vmatpush.msra.mxu0 0.0
        %2756 = vmatpush.msra.mxu0 0.0
        %2757 = vmatpush.msra.mxu0 0.0
        %2758 = vmatpush.msra.mxu0 %v2683
        %2759 = vmatpush.msra.mxu0 %v2682
        %2760 = vmatmul.f32.gmra.mxu0 %v2733
        %v2761 = vpop.f32.mrf.mxu0
        %v2762 = vadd.f32 %v671, %v2761
        %2763 = vmatmul.f32.gmra.mxu0 %v2736
        %v2764 = vpop.f32.mrf.mxu0
        %v2765 = vadd.f32 %v672, %v2764
        %2766 = vmatmul.f32.gmra.mxu0 %v2739
        %v2767 = vpop.f32.mrf.mxu0
        %v2768 = vadd.f32 %v673, %v2767
        %2769 = vmatmul.f32.gmra.mxu0 %v2742
        %v2770 = vpop.f32.mrf.mxu0
        %v2771 = vadd.f32 %v674, %v2770
        %2772 = vdwg.mxu0
        %vm2773 = vcmask 7168
        %v2774 = vsel %vm2773, %v2762, -inf
        %v2775 = vsel %vm2773, %v2765, -inf
        %v2776 = vsel %vm2773, %v2768, -inf
        %v2777 = vsel %vm2773, %v2771, -inf
        %v2778 = vmax.f32 %v2774, %v2775
        %v2779 = vmax.f32 %v2776, %v2777
        %v2780 = vmax.f32 %v2778, %v2779
        %v2781 = vrot.slane %v2780, 4
        %v2782 = vmax.f32 %v2780, %v2781
        %v2783 = vrot.slane %v2782, 2
        %v2784 = vmax.f32 %v2782, %v2783
        %v2785 = vrot.slane %v2784, 1
        %v2786 = vmax.f32 %v2784, %v2785
        %v2787 = vsub.f32 %v2762, %v2786
        %v2788 = vsub.f32 %v2765, %v2786
        %v2789 = vsub.f32 %v2768, %v2786
        %v2790 = vsub.f32 %v2771, %v2786
        %v2791 = vmul.f32 %v2787, 1.442695
        %v2792 = vpow.pop %v2791
        %v2793 = vmul.f32 %v2788, 1.442695
        %v2794 = vpow.pop %v2793
        %v2795 = vmul.f32 %v2789, 1.442695
        %v2796 = vpow.pop %v2795
        %v2797 = vmul.f32 %v2790, 1.442695
        %v2798 = vpow.pop %v2797
        %v2800 = vsel %vm715, %v675, 0
        %2802 = vmatpush.msra.mxu0 0.0
        %2803 = vmatpush.msra.mxu0 0.0
        %2804 = vmatpush.msra.mxu0 0.0
        %2805 = vmatpush.msra.mxu0 0.0
        %2806 = vmatpush.msra.mxu0 0.0
        %2807 = vmatpush.msra.mxu0 0.0
        %2808 = vmatpush.msra.mxu0 0.0
        %2809 = vmatpush.msra.mxu0 0.0
        %2810 = vmatpush.msra.mxu0 0.0
        %2811 = vmatpush.msra.mxu0 0.0
        %2812 = vmatpush.msra.mxu0 0.0
        %2813 = vmatpush.msra.mxu0 0.0
        %2814 = vmatpush.msra.mxu0 %v2798
        %2815 = vmatpush.msra.mxu0 %v2796
        %2816 = vmatpush.msra.mxu0 %v2794
        %2817 = vmatpush.msra.mxu0 %v2792
        %2818 = vmatmul.f32.gmra.mxu0 %v2800
        %v2819 = vpop.f32.mrf.mxu0
        %v2820 = vadd.f32 0.0, %v2819
        %2821 = vdwg.mxu0
        %2823 = vset.pattern.permute.xlu0 0
        %2824 = vperm.xlu0 %2823, %v2792
        %v2825 = vpop.permute.xlu0 %2824
        %2828 = vset.pattern.permute.xlu0 0
        %2829 = vperm.xlu0 %2828, %v2794
        %v2830 = vpop.permute.xlu0 %2829
        %2833 = vset.pattern.permute.xlu0 0
        %2834 = vperm.xlu0 %2833, %v2796
        %v2835 = vpop.permute.xlu0 %2834
        %2838 = vset.pattern.permute.xlu0 0
        %2839 = vperm.xlu0 %2838, %v2798
        %v2840 = vpop.permute.xlu0 %2839
        %v2842 = vmul.f32 %v2825, %v2673
        %v2843 = vmul.f32 %v2830, %v2674
        %v2844 = vmul.f32 %v2835, %v2675
        %v2845 = vmul.f32 %v2840, %v2676
        %2846 = vmatpush.msra.mxu0 0.0
        %2847 = vmatpush.msra.mxu0 0.0
        %2848 = vmatpush.msra.mxu0 0.0
        %2849 = vmatpush.msra.mxu0 0.0
        %2850 = vmatpush.msra.mxu0 0.0
        %2851 = vmatpush.msra.mxu0 0.0
        %2852 = vmatpush.msra.mxu0 0.0
        %2853 = vmatpush.msra.mxu0 0.0
        %2854 = vmatpush.msra.mxu0 0.0
        %2855 = vmatpush.msra.mxu0 0.0
        %2856 = vmatpush.msra.mxu0 0.0
        %2857 = vmatpush.msra.mxu0 0.0
        %2858 = vmatpush.msra.mxu0 %v2845
        %2859 = vmatpush.msra.mxu0 %v2844
        %2860 = vmatpush.msra.mxu0 %v2843
        %2861 = vmatpush.msra.mxu0 %v2842
        %2862 = vmatmul.f32.gmra.mxu0 %v2800
        %v2863 = vpop.f32.mrf.mxu0
        %v2864 = vadd.f32 0.0, %v2863
        %2865 = vdwg.mxu0
        %v2866 = vrcp.pop %v2820
        %2868 = vset.pattern.permute.xlu0 0
        %2869 = vperm.xlu0 %2868, %v2866
        %v2870 = vpop.permute.xlu0 %2869
        %v2872 = vmul.f32 %v2864, %v2870
        %vm2873 = vcmask 31744
        %v2875 = vsel %vm2873, %v676, 0
        %v2878 = vsel %vm2873, %v677, 0
        %v2881 = vsel %vm2873, %v678, 0
        %v2884 = vsel %vm2873, %v679, 0
        %vm2886 = vcmask 1043456
        %v2888 = vsel %vm2886, %v2820, 0
        %2890 = vmatpush.msra.mxu0 0.0
        %2891 = vmatpush.msra.mxu0 0.0
        %2892 = vmatpush.msra.mxu0 0.0
        %2893 = vmatpush.msra.mxu0 0.0
        %2894 = vmatpush.msra.mxu0 0.0
        %2895 = vmatpush.msra.mxu0 0.0
        %2896 = vmatpush.msra.mxu0 0.0
        %2897 = vmatpush.msra.mxu0 0.0
        %2898 = vmatpush.msra.mxu0 0.0
        %2899 = vmatpush.msra.mxu0 0.0
        %2900 = vmatpush.msra.mxu0 0.0
        %2901 = vmatpush.msra.mxu0 0.0
        %2902 = vmatpush.msra.mxu0 0.0
        %2903 = vmatpush.msra.mxu0 0.0
        %2904 = vmatpush.msra.mxu0 0.0
        %2905 = vmatpush.msra.mxu0 %v2888
        %2906 = vmatmul.f32.gmra.mxu0 %v2875
        %v2907 = vpop.f32.mrf.mxu0
        %v2908 = vadd.f32 0.0, %v2907
        %2909 = vmatmul.f32.gmra.mxu0 %v2878
        %v2910 = vpop.f32.mrf.mxu0
        %v2911 = vadd.f32 0.0, %v2910
        %2912 = vmatmul.f32.gmra.mxu0 %v2881
        %v2913 = vpop.f32.mrf.mxu0
        %v2914 = vadd.f32 0.0, %v2913
        %2915 = vmatmul.f32.gmra.mxu0 %v2884
        %v2916 = vpop.f32.mrf.mxu0
        %v2917 = vadd.f32 0.0, %v2916
        %2918 = vdwg.mxu0
        %v2919 = vrcp.pop %v2908
        %v2920 = vrcp.pop %v2911
        %v2921 = vrcp.pop %v2914
        %v2922 = vrcp.pop %v2917
        %v2923 = vmul.f32 %v2792, %v2919
        %v2924 = vmul.f32 %v2794, %v2920
        %v2925 = vmul.f32 %v2796, %v2921
        %v2926 = vmul.f32 %v2798, %v2922
        %s2927 = scalar_lea.vmem %s12, 32
        %v2928 = vld [vmem:[%s2927] sm:$0xff]
        %v2929 = vld [vmem:[%s2927 + $0x8] sm:$0xff]
        %v2930 = vld [vmem:[%s2927 + $0x10] sm:$0xff]
        %v2931 = vld [vmem:[%s2927 + $0x18] sm:$0xff]
        %s2932 = scalar_lea.vmem %s13, 1
        %v2933 = vld [vmem:[%s2932] sm:$0x1]
        %s2934 = scalar_lea.vmem %s14, 16
        %v2935 = vld [vmem:[%s2934] sm:$0xff]
        %v2936 = vld [vmem:[%s2934 + $0x8] sm:$0xff]
        %v2938 = vperm.slane %v2933, 0
        %v2941 = vsel %vm715, %v2872, 0
        %2943 = vmatpush.msra.mxu0 0.0
        %2944 = vmatpush.msra.mxu0 0.0
        %2945 = vmatpush.msra.mxu0 0.0
        %2946 = vmatpush.msra.mxu0 0.0
        %2947 = vmatpush.msra.mxu0 0.0
        %2948 = vmatpush.msra.mxu0 0.0
        %2949 = vmatpush.msra.mxu0 0.0
        %2950 = vmatpush.msra.mxu0 0.0
        %2951 = vmatpush.msra.mxu0 0.0
        %2952 = vmatpush.msra.mxu0 0.0
        %2953 = vmatpush.msra.mxu0 0.0
        %2954 = vmatpush.msra.mxu0 0.0
        %2955 = vmatpush.msra.mxu0 %v2931
        %2956 = vmatpush.msra.mxu0 %v2930
        %2957 = vmatpush.msra.mxu0 %v2929
        %2958 = vmatpush.msra.mxu0 %v2928
        %2959 = vmatmul.f32.gmra.mxu0 %v2941
        %v2960 = vpop.f32.mrf.mxu0
        %v2961 = vadd.f32 %v2938, %v2960
        %2962 = vdwg.mxu0
        %v2963 = vtanh.pop %v2961
        %v2965 = vsel %vm821, %v2963, 0
        %2967 = vmatpush.msra.mxu0 0.0
        %2968 = vmatpush.msra.mxu0 0.0
        %2969 = vmatpush.msra.mxu0 0.0
        %2970 = vmatpush.msra.mxu0 0.0
        %2971 = vmatpush.msra.mxu0 0.0
        %2972 = vmatpush.msra.mxu0 0.0
        %2973 = vmatpush.msra.mxu0 0.0
        %2974 = vmatpush.msra.mxu0 0.0
        %2975 = vmatpush.msra.mxu0 0.0
        %2976 = vmatpush.msra.mxu0 0.0
        %2977 = vmatpush.msra.mxu0 0.0
        %2978 = vmatpush.msra.mxu0 0.0
        %2979 = vmatpush.msra.mxu0 0.0
        %2980 = vmatpush.msra.mxu0 0.0
        %2981 = vmatpush.msra.mxu0 %v2936
        %2982 = vmatpush.msra.mxu0 %v2935
        %2983 = vmatmul.f32.gmra.mxu0 %v2965
        %v2984 = vpop.f32.mrf.mxu0
        %v2985 = vadd.f32 0.0, %v2984
        %2986 = vdwg.mxu0
        %vm2987 = vcmask 3072
        %v2988 = vsel %vm2987, %v2985, -inf
        %v2989 = vrot.slane %v2988, 4
        %v2990 = vmax.f32 %v2988, %v2989
        %v2991 = vrot.slane %v2990, 2
        %v2992 = vmax.f32 %v2990, %v2991
        %v2993 = vrot.slane %v2992, 1
        %v2994 = vmax.f32 %v2992, %v2993
        %v2995 = vsub.f32 %v2985, %v2994
        %v2996 = vmul.f32 %v2995, 1.442695
        %v2997 = vpow.pop %v2996
        %v2998 = vsel %vm2987, %v2997, 0.0
        %v2999 = vrot.slane %v2998, 4
        %v3000 = vadd.f32 %v2998, %v2999
        %v3001 = vrot.slane %v3000, 2
        %v3002 = vadd.f32 %v3000, %v3001
        %v3003 = vrot.slane %v3002, 1
        %v3004 = vadd.f32 %v3002, %v3003
        %v3005 = vrcp.pop %v3004
        %v3006 = vmul.f32 %v2997, %v3005
        %3008 = vset.pattern.permute.xlu0 0
        %3009 = vperm.xlu0 %3008, %v3006
        %v3010 = vpop.permute.xlu0 %3009
        %v3012 = vmul.f32 %v3010, %v2872
        %vm3013 = vcmask 257024
        %v3014 = vsel %vm3013, %v3012, 0.0
        %v3015 = vrot.slane %v3014, 4
        %v3016 = vadd.f32 %v3014, %v3015
        %v3017 = vrot.slane %v3016, 2
        %v3018 = vadd.f32 %v3016, %v3017
        %v3019 = vrot.slane %v3018, 1
        %v3020 = vadd.f32 %v3018, %v3019
        %v3021 = vld [vmem:[%s15] sm:$0xff]
        %v3022 = vld [vmem:[%s15 + $0x8] sm:$0xff]
        %v3023 = vld [vmem:[%s15 + $0x10] sm:$0xff]
        %v3024 = vld [vmem:[%s15 + $0x18] sm:$0xff]
        %v3025 = vld [vmem:[%s16] sm:$0x1]
        %v3027 = vsel %vm715, %v3020, 0
        %3029 = vmatpush.msra.mxu0 0.0
        %3030 = vmatpush.msra.mxu0 0.0
        %3031 = vmatpush.msra.mxu0 0.0
        %3032 = vmatpush.msra.mxu0 0.0
        %3033 = vmatpush.msra.mxu0 0.0
        %3034 = vmatpush.msra.mxu0 0.0
        %3035 = vmatpush.msra.mxu0 0.0
        %3036 = vmatpush.msra.mxu0 0.0
        %3037 = vmatpush.msra.mxu0 0.0
        %3038 = vmatpush.msra.mxu0 0.0
        %3039 = vmatpush.msra.mxu0 0.0
        %3040 = vmatpush.msra.mxu0 0.0
        %3041 = vmatpush.msra.mxu0 %v3024
        %3042 = vmatpush.msra.mxu0 %v3023
        %3043 = vmatpush.msra.mxu0 %v3022
        %3044 = vmatpush.msra.mxu0 %v3021
        %3045 = vmatmul.f32.gmra.mxu0 %v3027
        %v3046 = vpop.f32.mrf.mxu0
        %v3047 = vadd.f32 %v3025, %v3046
        %3048 = vdwg.mxu0
        %vm3049 = vcmask 16384
        %3050 = vst.msk [vmem:[%s625] sm:$0x1] %vm3049, %v3047
        %3051 = vst.msk [vmem:[%s658] sm:$0xff] %vm2773, %v2923
        %3052 = vst.msk [vmem:[%s658 + $0x8] sm:$0xff] %vm2773, %v2924
        %3053 = vst.msk [vmem:[%s658 + $0x10] sm:$0xff] %vm2773, %v2925
        %3054 = vst.msk [vmem:[%s658 + $0x18] sm:$0xff] %vm2773, %v2926
        %3055 = vst.msk [vmem:[%s662] sm:$0xf] %vm2987, %v3006
        %s3056 = sand.u32 %s414, 1
        %s3057 = scalar_lea.sflag [#allocation3], %s3056
        %s3058 = sand.u32 %s414, 1
        %s3059 = scalar_lea.vmem [#allocation2], %s3058
        %p3060 = scmp.lt.s32.totalorder %s34, 1
        %s3061 = scalar_select %p3060, %s34, 1
        %s3062 = smul.addr %s3061, 4
        %s3063 = smul.addr %s3062, 8
        %s3064 = scalar_lea.vmem %s18, %s3063
        %p3065 = scmp.lt.s32.totalorder %s34, 1
        %s3066 = scalar_select %p3065, %s34, 1
        %s3067 = smul.addr %s3066, 4
        %s3068 = scalar_lea.vmem %s19, %s3067
        // Predicated region
        $region89: #{tpu_custom_call.1} parent=87 // pred_check
          %p3069 = pneg %p424
        $region90: #{tpu_custom_call.1} parent=87 // pred_check_branch
          %3071 = sbr.rel (%p3069) target = $region92
        $region91: #{tpu_custom_call.1} parent=87 // pred_region
          %3073 = vsyncadd %s3057, 0
          %s3074 = scalar_lea.hbm %s17, %s34
          %s3076 = sshll.u32 %s3059, 4
          %s3077 = int_to_ptr.vmem [resolvable:$true] %s3076
          %s3078 = sshll.u32 %s3074, 4
          %s3079 = int_to_ptr.hbm [resolvable:$true] %s3078
          %3081 = dma.vmem_to_hbm [thread:$0]  %s3077, 16, %s3079, %s3057
        $region92: #{tpu_custom_call.1} parent=87 // pred_fallthru
          _
        // Predicated region
        $region93: #{tpu_custom_call.1} parent=87 // pred_check
          %p3082 = pneg %p450
        $region94: #{tpu_custom_call.1} parent=87 // pred_check_branch
          %3084 = sbr.rel (%p3082) target = $region96
        $region95: #{tpu_custom_call.1} parent=87 // pred_region
          _
        $region96: #{tpu_custom_call.1} parent=87 // pred_fallthru
          _
        // Predicated region
        $region97: #{tpu_custom_call.1} parent=87 // pred_check
          %p3085 = pneg %p476
        $region98: #{tpu_custom_call.1} parent=87 // pred_check_branch
          %3087 = sbr.rel (%p3085) target = $region100
        $region99: #{tpu_custom_call.1} parent=87 // pred_region
          _
        $region100: #{tpu_custom_call.1} parent=87 // pred_fallthru
          _
      $region88: #{tpu_custom_call.1} parent=5 // pred_fallthru
        _
      %p3088 = scmp.le.s32.totalorder 2, %s29
      // Predicated region
      $region101: #{tpu_custom_call.1} parent=5 // pred_check
        %p3089 = pneg %p3088
      $region102: #{tpu_custom_call.1} parent=5 // pred_check_branch
        %3091 = sbr.rel (%p3089) target = $region104
      $region103: #{tpu_custom_call.1} parent=5 // pred_region
        %s3092 = ssub.s32 %s29, 2
        // Predicated region
        $region105: #{tpu_custom_call.1} parent=103 // pred_check
          %p3093 = pneg %p430
        $region106: #{tpu_custom_call.1} parent=103 // pred_check_branch
          %3095 = sbr.rel (%p3093) target = $region108
        $region107: #{tpu_custom_call.1} parent=103 // pred_region
          %s3096 = sand.u32 %s415, 1
          %s3097 = scalar_lea.sflag [#allocation3], %s3096
          %s3098 = sand.u32 %s415, 1
          %s3099 = scalar_lea.vmem [#allocation2], %s3098
          %3101 = dma.done %s3097, 16
        $region108: #{tpu_custom_call.1} parent=103 // pred_fallthru
          _
        // Predicated region
        $region109: #{tpu_custom_call.1} parent=103 // pred_check
          %p3102 = pneg %p456
        $region110: #{tpu_custom_call.1} parent=103 // pred_check_branch
          %3104 = sbr.rel (%p3102) target = $region112
        $region111: #{tpu_custom_call.1} parent=103 // pred_region
          %p3105 = scmp.lt.s32.totalorder %s35, 1
          %s3106 = scalar_select %p3105, %s35, 1
          %s3107 = smul.addr %s3106, 4
          %s3108 = smul.addr %s3107, 8
          %s3109 = scalar_lea.vmem %s18, %s3108
        $region112: #{tpu_custom_call.1} parent=103 // pred_fallthru
          _
        // Predicated region
        $region113: #{tpu_custom_call.1} parent=103 // pred_check
          %p3110 = pneg %p482
        $region114: #{tpu_custom_call.1} parent=103 // pred_check_branch
          %3112 = sbr.rel (%p3110) target = $region116
        $region115: #{tpu_custom_call.1} parent=103 // pred_region
          %p3113 = scmp.lt.s32.totalorder %s35, 1
          %s3114 = scalar_select %p3113, %s35, 1
          %s3115 = smul.addr %s3114, 4
          %s3116 = scalar_lea.vmem %s19, %s3115
        $region116: #{tpu_custom_call.1} parent=103 // pred_fallthru
          _
      $region104: #{tpu_custom_call.1} parent=5 // pred_fallthru
        _
    $region6: #{tpu_custom_call.1} parent=1 // loop_footer
      %s33 = sadd.s32 1, %s29
    $region7: #{tpu_custom_call.1} parent=1 // loop_footer_branch
      %28 = sbr.rel target = $region3
    $region8: #{tpu_custom_call.1} parent=1 // loop_exit
      _
    %3117 = vsyncpa [#allocation3], 1
    %s3118 = scalar_lea.sflag [#allocation3], 1
    %3119 = vsyncpa %s3118, 1

</llo_original>
